<compile_context>
chip_gen: v6e
topology: v6e:2x2x1
jax: 0.10.0
libtpu: 0.0.40
codegen_flags: <defaults>
</compile_context>

<pallas_src>
import functools

import jax
import jax.numpy as jnp
from jax import lax
from jax.experimental import pallas as pl
from jax.experimental.pallas import tpu as pltpu


# ----------------------------------------------------------------------------
# Single fused kernel: fc1 -> gat1 -> gat2 -> gat3 -> classifier -> softmax
#                      -> CrossEntropy loss.
#
# GATConv (dense-adjacency formulation, eval mode):
#   h_k          = x @ W_k
#   a_src[j]     = <h_j^k, att_src^k>,  a_dst[i] = <h_i^k, att_dst^k>   (MXU)
#   e[i, j]      = LeakyReLU(a_dst[i] + a_src[j], 0.2)   where adj[i,j]=1
#   alpha        = softmax_j(e)   (masked, per graph branch)
#   out_i^k      = sum_j alpha[i,j] * h_j^k  (+ per-head bias slice)
#   module act   = LeakyReLU(0.01) after gat1 / gat2 (dropout = identity)
# ----------------------------------------------------------------------------
def _fused_forward_kernel(
        x1_ref, x2_ref, adj1_ref, adj2_ref, y_ref,
        fc1_w_ref, fc1_b_ref,
        g1_w_ref, g1_as_ref, g1_ad_ref, g1_b_ref,
        g2_w_ref, g2_as_ref, g2_ad_ref, g2_b_ref,
        g3_w_ref, g3_as_ref, g3_ad_ref, g3_b_ref,
        cls_w_ref, cls_b_ref,
        prob_ref, loss_ref,
        *, heads, n_nodes):
    f32 = jnp.float32
    n = n_nodes

    # Per-branch edge masks / additive -inf bias, hoisted once and reused by
    # every GAT layer and every head.
    masks = (adj1_ref[...] > 0.0, adj2_ref[...] > 0.0)
    negs = tuple(jnp.where(m, 0.0, -1e30) for m in masks)

    def attend(h_k, a_src_vec, a_dst_vec):
        """Masked GAT attention for one head, both graph branches."""
        # Attention scores for both branches in one MXU pass: [2N, F] @ [F, 1].
        a_src = jnp.dot(h_k, a_src_vec, preferred_element_type=f32)   # [2N, 1]
        a_dst = jnp.dot(h_k, a_dst_vec, preferred_element_type=f32)   # [2N, 1]
        outs = []
        for b in range(2):                                            # graph branch
            sl = slice(b * n, (b + 1) * n)                            # static sublane slice
            e = a_dst[sl, :] + jnp.transpose(a_src[sl, :])            # [N, N]
            e = jnp.where(e > 0, e, 0.2 * e)                          # GAT LeakyReLU(0.2)
            e = e + negs[b]                                           # mask non-edges
            m = jnp.max(e, axis=-1, keepdims=True)
            p = jnp.where(masks[b], jnp.exp(e - m), 0.0)
            alpha = p / jnp.sum(p, axis=-1, keepdims=True)            # masked softmax
            outs.append(jnp.dot(alpha, h_k[sl, :],
                                preferred_element_type=f32))          # [N, F]
        return jnp.concatenate(outs, axis=0)                          # [2N, F]

    # --- fc1 (shared weights, both branches in one stacked matmul) ----------
    x = jnp.concatenate([x1_ref[...], x2_ref[...]], axis=0)           # [2N, H]
    x = jnp.dot(x, fc1_w_ref[...], preferred_element_type=f32) + fc1_b_ref[...]

    # --- gat1: hidden -> hidden, `heads` heads -------------------------------
    # Heads live on a Python list axis -> no lane-axis concatenate/slice.
    act1 = []
    for k in range(heads):
        h_k = jnp.dot(x, g1_w_ref[k], preferred_element_type=f32)
        o_k = attend(h_k, g1_as_ref[k], g1_ad_ref[k]) + g1_b_ref[k]
        act1.append(jnp.where(o_k > 0, o_k, 0.01 * o_k))              # nn.LeakyReLU()

    # --- gat2: heads*hidden -> hidden, `heads` heads --------------------------
    act2 = []
    for ko in range(heads):
        h_k = jnp.dot(act1[0], g2_w_ref[ko * heads + 0], preferred_element_type=f32)
        for ki in range(1, heads):
            h_k = h_k + jnp.dot(act1[ki], g2_w_ref[ko * heads + ki],
                                preferred_element_type=f32)
        o_k = attend(h_k, g2_as_ref[ko], g2_ad_ref[ko]) + g2_b_ref[ko]
        act2.append(jnp.where(o_k > 0, o_k, 0.01 * o_k))              # nn.LeakyReLU()

    # --- gat3: heads*hidden -> hidden, 1 head (no module activation after) ----
    h3 = jnp.dot(act2[0], g3_w_ref[0], preferred_element_type=f32)
    for ki in range(1, heads):
        h3 = h3 + jnp.dot(act2[ki], g3_w_ref[ki], preferred_element_type=f32)
    out3 = attend(h3, g3_as_ref[...], g3_ad_ref[...]) + g3_b_ref[...]  # [2N, H]

    # --- head: per-branch node mean, |diff|, classifier, softmax over classes -
    m1 = jnp.mean(out3[:n, :], axis=0, keepdims=True)                 # [1, H]
    m2 = jnp.mean(out3[n:, :], axis=0, keepdims=True)                 # [1, H]
    z = jnp.abs(m1 - m2)
    logits = jnp.dot(z, cls_w_ref[...], preferred_element_type=f32) + cls_b_ref[...]
    # torch: F.softmax(classifier(...), dim=0) on a 1-D length-2 vector ->
    # softmax over the two classes; identical to axis=-1 on the [1, 2] row.
    mx = jnp.max(logits, axis=-1, keepdims=True)
    ex = jnp.exp(logits - mx)
    probs = ex / jnp.sum(ex, axis=-1, keepdims=True)                  # [1, 2]
    prob_ref[...] = probs

    # torch: nn.CrossEntropyLoss applied to the already-softmaxed output —
    # reproduced as-is (intentional double softmax, matching the reference).
    mx2 = jnp.max(probs, axis=-1, keepdims=True)
    logp = (probs - mx2) - jnp.log(jnp.sum(jnp.exp(probs - mx2),
                                           axis=-1, keepdims=True))
    cls_idx = lax.broadcasted_iota(jnp.int32, (1, 2), 1)
    y = y_ref[0]
    loss_ref[...] = -jnp.sum(jnp.where(cls_idx == y, logp, 0.0),
                             axis=-1, keepdims=True)                  # [1, 1]


# ----------------------------------------------------------------------------
# Wrappers / glue
# ----------------------------------------------------------------------------
def pack_params(params, *, hidden, heads):
    """Pre-split per-head weights / reshape biases once (outside the jit step)."""
    H = hidden
    return {
        "fc1_w": params["fc1_w"],
        "fc1_b": params["fc1_b"].reshape(1, H),
        # gat1: W [H, heads*H]  ->  [head, H_in, H_out]
        "g1_w": params["gat1_w"].reshape(H, heads, H).transpose(1, 0, 2),
        "g1_as": params["gat1_asrc"].reshape(heads, H, 1),
        "g1_ad": params["gat1_adst"].reshape(heads, H, 1),
        "g1_b": params["gat1_b"].reshape(heads, 1, H),
        # gat2: W [heads*H, heads*H] -> [ko*heads + ki, H_in, H_out]
        "g2_w": params["gat2_w"].reshape(heads, H, heads, H)
                                 .transpose(2, 0, 1, 3)
                                 .reshape(heads * heads, H, H),
        "g2_as": params["gat2_asrc"].reshape(heads, H, 1),
        "g2_ad": params["gat2_adst"].reshape(heads, H, 1),
        "g2_b": params["gat2_b"].reshape(heads, 1, H),
        # gat3 (1 head): W [heads*H, H] -> [ki, H_in, H_out]
        "g3_w": params["gat3_w"].reshape(heads, H, H),
        "g3_as": params["gat3_asrc"].reshape(H, 1),
        "g3_ad": params["gat3_adst"].reshape(H, 1),
        "g3_b": params["gat3_b"].reshape(1, H),
        "cls_w": params["cls_w"],
        "cls_b": params["cls_b"].reshape(1, 2),
    }


def forward(packed, x1, x2, adj1, adj2, y, *, heads):
    n = x1.shape[0]
    kernel = functools.partial(_fused_forward_kernel, heads=heads, n_nodes=n)
    vmem = pltpu.MemorySpace.VMEM
    smem = pltpu.MemorySpace.SMEM
    in_specs = ([pl.BlockSpec(memory_space=vmem)] * 4       # x1, x2, adj1, adj2
                + [pl.BlockSpec(memory_space=smem)]          # y (scalar label)
                + [pl.BlockSpec(memory_space=vmem)] * 16)    # weights
    probs, loss = pl.pallas_call(
        kernel,
        out_shape=(jax.ShapeDtypeStruct((1, 2), jnp.float32),
                   jax.ShapeDtypeStruct((1, 1), jnp.float32)),
        in_specs=in_specs,
        out_specs=(pl.BlockSpec(memory_space=vmem),
                   pl.BlockSpec(memory_space=vmem)),
    )(x1, x2,
      adj1.astype(jnp.float32), adj2.astype(jnp.float32),
      y.astype(jnp.int32),
      packed["fc1_w"], packed["fc1_b"],
      packed["g1_w"], packed["g1_as"], packed["g1_ad"], packed["g1_b"],
      packed["g2_w"], packed["g2_as"], packed["g2_ad"], packed["g2_b"],
      packed["g3_w"], packed["g3_as"], packed["g3_ad"], packed["g3_b"],
      packed["cls_w"], packed["cls_b"])
    return probs, loss[0, 0]


def edges_to_adj(edge_index, n):
    src, dst = edge_index[0], edge_index[1]
    adj = jnp.zeros((n, n), jnp.float32).at[dst, src].set(1.0)
    idx = jnp.arange(n)
    return adj.at[idx, idx].set(1.0)  # GATConv add_self_loops=True


def init_params(key, hidden, heads):
    ks = jax.random.split(key, 16)

    def dense(k, fi, fo):
        return (jax.random.normal(k, (fi, fo), jnp.float32)
                * (1.0 / jnp.sqrt(jnp.float32(fi))))

    def att(k, h, f):
        return jax.random.normal(k, (h, f), jnp.float32) * 0.1

    return {
        "fc1_w": dense(ks[0], hidden, hidden),
        "fc1_b": jnp.full((hidden,), 0.01, jnp.float32),
        # gat1: in = hidden, out = hidden, heads = heads
        "gat1_w": dense(ks[1], hidden, heads * hidden),
        "gat1_asrc": att(ks[2], heads, hidden),
        "gat1_adst": att(ks[3], heads, hidden),
        "gat1_b": jnp.zeros((heads * hidden,), jnp.float32),
        # gat2: in = hidden*heads, out = hidden, heads = heads
        "gat2_w": dense(ks[4], heads * hidden, heads * hidden),
        "gat2_asrc": att(ks[5], heads, hidden),
        "gat2_adst": att(ks[6], heads, hidden),
        "gat2_b": jnp.zeros((heads * hidden,), jnp.float32),
        # gat3: in = hidden*heads, out = hidden, heads = 1
        "gat3_w": dense(ks[7], heads * hidden, hidden),
        "gat3_asrc": att(ks[8], 1, hidden),
        "gat3_adst": att(ks[9], 1, hidden),
        "gat3_b": jnp.zeros((hidden,), jnp.float32),
        # classifier: hidden -> 2
        "cls_w": dense(ks[10], hidden, 2),
        "cls_b": jnp.zeros((2,), jnp.float32),
    }


if __name__ == "__main__":
    HIDDEN = 32   # config.hidden_size (== in_channels == out_channels)
    HEADS = 2     # config.gat_num_heads
    N = 8         # nodes per graph

    key = jax.random.PRNGKey(0)
    k_par, k_x1, k_x2 = jax.random.split(key, 3)

    params = init_params(k_par, HIDDEN, HEADS)
    packed = pack_params(params, hidden=HIDDEN, heads=HEADS)   # once, outside jit

    # Synthetic "pooled BERT" node embeddings.
    x1 = jax.random.normal(k_x1, (N, HIDDEN), jnp.float32)
    x2 = jax.random.normal(k_x2, (N, HIDDEN), jnp.float32)

    # Deterministic edge lists (src row 0, dst row 1) -> dense adjacency.
    edge1 = jnp.array(
        [[0, 1, 2, 3, 4, 5, 6, 7, 0, 2, 4, 6],
         [1, 2, 3, 4, 5, 6, 7, 0, 4, 6, 0, 2]], dtype=jnp.int32)
    edge2 = jnp.array(
        [[0, 2, 4, 6, 1, 3, 5, 7, 0, 1, 2, 3],
         [2, 4, 6, 0, 3, 5, 7, 1, 7, 6, 5, 4]], dtype=jnp.int32)
    adj1 = edges_to_adj(edge1, N)
    adj2 = edges_to_adj(edge2, N)

    y = jnp.array([1], dtype=jnp.int32)

    fwd = jax.jit(functools.partial(forward, heads=HEADS))
    output, loss = fwd(packed, x1, x2, adj1, adj2, y)
    jax.block_until_ready((output, loss))

    assert output.shape == (1, 2)
    assert bool(jnp.isfinite(loss))
    assert bool(jnp.all(jnp.isfinite(output)))
    print("KERNEL_OK")
</pallas_src>

<mosaic_0001>
module attributes {stable_mosaic.version = 11 : i64} {
  func.func @_fused_forward_kernel(%arg0: memref<8x32xf32, #tpu.memory_space<vmem>>, %arg1: memref<8x32xf32, #tpu.memory_space<vmem>>, %arg2: memref<8x8xf32, #tpu.memory_space<vmem>>, %arg3: memref<8x8xf32, #tpu.memory_space<vmem>>, %arg4: memref<1xi32, #tpu.memory_space<smem>>, %arg5: memref<32x32xf32, #tpu.memory_space<vmem>>, %arg6: memref<1x32xf32, #tpu.memory_space<vmem>>, %arg7: memref<2x32x32xf32, #tpu.memory_space<vmem>>, %arg8: memref<2x32x1xf32, #tpu.memory_space<vmem>>, %arg9: memref<2x32x1xf32, #tpu.memory_space<vmem>>, %arg10: memref<2x1x32xf32, #tpu.memory_space<vmem>>, %arg11: memref<4x32x32xf32, #tpu.memory_space<vmem>>, %arg12: memref<2x32x1xf32, #tpu.memory_space<vmem>>, %arg13: memref<2x32x1xf32, #tpu.memory_space<vmem>>, %arg14: memref<2x1x32xf32, #tpu.memory_space<vmem>>, %arg15: memref<2x32x32xf32, #tpu.memory_space<vmem>>, %arg16: memref<32x1xf32, #tpu.memory_space<vmem>>, %arg17: memref<32x1xf32, #tpu.memory_space<vmem>>, %arg18: memref<1x32xf32, #tpu.memory_space<vmem>>, %arg19: memref<32x2xf32, #tpu.memory_space<vmem>>, %arg20: memref<1x2xf32, #tpu.memory_space<vmem>>, %arg21: memref<1x2xf32, #tpu.memory_space<vmem>>, %arg22: memref<1x1xf32, #tpu.memory_space<vmem>>) attributes {dimension_semantics = [], scalar_prefetch = 0 : i64, scratch_operands = 0 : i64, tpu.core_type = #tpu.core_type<tc>} {
    %c0 = arith.constant 0 : index
    %c0_0 = arith.constant 0 : index
    %0 = vector.load %arg2[%c0, %c0_0] : memref<8x8xf32, #tpu.memory_space<vmem>>, vector<8x8xf32>
    %cst = arith.constant 0.000000e+00 : f32
    %1 = vector.broadcast %cst : f32 to vector<8x8xf32>
    %2 = arith.cmpf ogt, %0, %1 : vector<8x8xf32>
    %c0_1 = arith.constant 0 : index
    %c0_2 = arith.constant 0 : index
    %3 = vector.load %arg3[%c0_1, %c0_2] : memref<8x8xf32, #tpu.memory_space<vmem>>, vector<8x8xf32>
    %cst_3 = arith.constant 0.000000e+00 : f32
    %4 = vector.broadcast %cst_3 : f32 to vector<8x8xf32>
    %5 = arith.cmpf ogt, %3, %4 : vector<8x8xf32>
    %cst_4 = arith.constant 0.000000e+00 : f32
    %cst_5 = arith.constant -1.000000e+30 : f32
    %6 = vector.broadcast %cst_4 : f32 to vector<8x8xf32>
    %7 = vector.broadcast %cst_5 : f32 to vector<8x8xf32>
    %8 = arith.select %2, %6, %7 : vector<8x8xi1>, vector<8x8xf32>
    %cst_6 = arith.constant 0.000000e+00 : f32
    %cst_7 = arith.constant -1.000000e+30 : f32
    %9 = vector.broadcast %cst_6 : f32 to vector<8x8xf32>
    %10 = vector.broadcast %cst_7 : f32 to vector<8x8xf32>
    %11 = arith.select %5, %9, %10 : vector<8x8xi1>, vector<8x8xf32>
    %c0_8 = arith.constant 0 : index
    %c0_9 = arith.constant 0 : index
    %12 = vector.load %arg0[%c0_8, %c0_9] : memref<8x32xf32, #tpu.memory_space<vmem>>, vector<8x32xf32>
    %c0_10 = arith.constant 0 : index
    %c0_11 = arith.constant 0 : index
    %13 = vector.load %arg1[%c0_10, %c0_11] : memref<8x32xf32, #tpu.memory_space<vmem>>, vector<8x32xf32>
    %14 = tpu.concatenate %12, %13 in 0 : vector<8x32xf32>, vector<8x32xf32> -> vector<16x32xf32>
    %c0_12 = arith.constant 0 : index
    %c0_13 = arith.constant 0 : index
    %15 = vector.load %arg5[%c0_12, %c0_13] : memref<32x32xf32, #tpu.memory_space<vmem>>, vector<32x32xf32>
    %cst_14 = arith.constant dense<0.000000e+00> : vector<16x32xf32>
    %16 = tpu.matmul %14, %15, %cst_14 {dimension_numbers = #tpu.dot_dimension_numbers<[1], [0], [0], [1], [0, 0, 1, 1], [], []>} : vector<16x32xf32>, vector<32x32xf32>, vector<16x32xf32> -> vector<16x32xf32>
    %c0_15 = arith.constant 0 : index
    %c0_16 = arith.constant 0 : index
    %17 = vector.load %arg6[%c0_15, %c0_16] : memref<1x32xf32, #tpu.memory_space<vmem>>, vector<1x32xf32>
    %18 = vector.broadcast %17 : vector<1x32xf32> to vector<16x32xf32>
    %19 = arith.addf %16, %18 : vector<16x32xf32>
    %c0_17 = arith.constant 0 : index
    %c0_18 = arith.constant 0 : index
    %c0_19 = arith.constant 0 : index
    %20 = vector.load %arg7[%c0_17, %c0_18, %c0_19] : memref<2x32x32xf32, #tpu.memory_space<vmem>>, vector<1x32x32xf32>
    %21 = vector.shape_cast %20 : vector<1x32x32xf32> to vector<32x32xf32>
    %cst_20 = arith.constant dense<0.000000e+00> : vector<16x32xf32>
    %22 = tpu.matmul %19, %21, %cst_20 {dimension_numbers = #tpu.dot_dimension_numbers<[1], [0], [0], [1], [0, 0, 1, 1], [], []>} : vector<16x32xf32>, vector<32x32xf32>, vector<16x32xf32> -> vector<16x32xf32>
    %c0_21 = arith.constant 0 : index
    %c0_22 = arith.constant 0 : index
    %c0_23 = arith.constant 0 : index
    %23 = vector.load %arg8[%c0_21, %c0_22, %c0_23] : memref<2x32x1xf32, #tpu.memory_space<vmem>>, vector<1x32x1xf32>
    %24 = vector.shape_cast %23 : vector<1x32x1xf32> to vector<32x1xf32>
    %c0_24 = arith.constant 0 : index
    %c0_25 = arith.constant 0 : index
    %c0_26 = arith.constant 0 : index
    %25 = vector.load %arg9[%c0_24, %c0_25, %c0_26] : memref<2x32x1xf32, #tpu.memory_space<vmem>>, vector<1x32x1xf32>
    %26 = vector.shape_cast %25 : vector<1x32x1xf32> to vector<32x1xf32>
    %cst_27 = arith.constant dense<0.000000e+00> : vector<16x1xf32>
    %27 = tpu.matmul %22, %24, %cst_27 {dimension_numbers = #tpu.dot_dimension_numbers<[1], [0], [0], [1], [0, 0, 1, 1], [], []>} : vector<16x32xf32>, vector<32x1xf32>, vector<16x1xf32> -> vector<16x1xf32>
    %cst_28 = arith.constant dense<0.000000e+00> : vector<16x1xf32>
    %28 = tpu.matmul %22, %26, %cst_28 {dimension_numbers = #tpu.dot_dimension_numbers<[1], [0], [0], [1], [0, 0, 1, 1], [], []>} : vector<16x32xf32>, vector<32x1xf32>, vector<16x1xf32> -> vector<16x1xf32>
    %29 = vector.extract_strided_slice %28 {offsets = [0, 0], sizes = [8, 1], strides = [1, 1]} : vector<16x1xf32> to vector<8x1xf32>
    %30 = vector.extract_strided_slice %27 {offsets = [0, 0], sizes = [8, 1], strides = [1, 1]} : vector<16x1xf32> to vector<8x1xf32>
    %31 = tpu.transpose %30, [1, 0] : vector<8x1xf32> -> vector<1x8xf32>
    %32 = vector.broadcast %29 : vector<8x1xf32> to vector<8x8xf32>
    %33 = vector.broadcast %31 : vector<1x8xf32> to vector<8x8xf32>
    %34 = arith.addf %32, %33 : vector<8x8xf32>
    %cst_29 = arith.constant 0.000000e+00 : f32
    %35 = vector.broadcast %cst_29 : f32 to vector<8x8xf32>
    %36 = arith.cmpf ogt, %34, %35 : vector<8x8xf32>
    %cst_30 = arith.constant 2.000000e-01 : f32
    %37 = vector.broadcast %cst_30 : f32 to vector<8x8xf32>
    %38 = arith.mulf %37, %34 : vector<8x8xf32>
    %39 = arith.select %36, %34, %38 : vector<8x8xi1>, vector<8x8xf32>
    %40 = arith.addf %39, %8 : vector<8x8xf32>
    %cst_31 = arith.constant dense<0xFF800000> : vector<8xf32>
    %41 = vector.multi_reduction <maximumf>, %40, %cst_31 [1] : vector<8x8xf32> to vector<8xf32>
    %42 = vector.shape_cast %41 : vector<8xf32> to vector<8x1xf32>
    %43 = vector.broadcast %42 : vector<8x1xf32> to vector<8x8xf32>
    %44 = arith.subf %40, %43 : vector<8x8xf32>
    %45 = math.exp %44 : vector<8x8xf32>
    %cst_32 = arith.constant 0.000000e+00 : f32
    %46 = vector.broadcast %cst_32 : f32 to vector<8x8xf32>
    %47 = arith.select %2, %45, %46 : vector<8x8xi1>, vector<8x8xf32>
    %cst_33 = arith.constant dense<0.000000e+00> : vector<8xf32>
    %48 = vector.multi_reduction <add>, %47, %cst_33 [1] : vector<8x8xf32> to vector<8xf32>
    %49 = vector.shape_cast %48 : vector<8xf32> to vector<8x1xf32>
    %50 = vector.broadcast %49 : vector<8x1xf32> to vector<8x8xf32>
    %51 = arith.divf %47, %50 : vector<8x8xf32>
    %52 = vector.extract_strided_slice %22 {offsets = [0, 0], sizes = [8, 32], strides = [1, 1]} : vector<16x32xf32> to vector<8x32xf32>
    %cst_34 = arith.constant dense<0.000000e+00> : vector<8x32xf32>
    %53 = tpu.matmul %51, %52, %cst_34 {dimension_numbers = #tpu.dot_dimension_numbers<[1], [0], [0], [1], [0, 0, 1, 1], [], []>} : vector<8x8xf32>, vector<8x32xf32>, vector<8x32xf32> -> vector<8x32xf32>
    %54 = vector.extract_strided_slice %28 {offsets = [8, 0], sizes = [8, 1], strides = [1, 1]} : vector<16x1xf32> to vector<8x1xf32>
    %55 = vector.extract_strided_slice %27 {offsets = [8, 0], sizes = [8, 1], strides = [1, 1]} : vector<16x1xf32> to vector<8x1xf32>
    %56 = tpu.transpose %55, [1, 0] : vector<8x1xf32> -> vector<1x8xf32>
    %57 = vector.broadcast %54 : vector<8x1xf32> to vector<8x8xf32>
    %58 = vector.broadcast %56 : vector<1x8xf32> to vector<8x8xf32>
    %59 = arith.addf %57, %58 : vector<8x8xf32>
    %cst_35 = arith.constant 0.000000e+00 : f32
    %60 = vector.broadcast %cst_35 : f32 to vector<8x8xf32>
    %61 = arith.cmpf ogt, %59, %60 : vector<8x8xf32>
    %cst_36 = arith.constant 2.000000e-01 : f32
    %62 = vector.broadcast %cst_36 : f32 to vector<8x8xf32>
    %63 = arith.mulf %62, %59 : vector<8x8xf32>
    %64 = arith.select %61, %59, %63 : vector<8x8xi1>, vector<8x8xf32>
    %65 = arith.addf %64, %11 : vector<8x8xf32>
    %cst_37 = arith.constant dense<0xFF800000> : vector<8xf32>
    %66 = vector.multi_reduction <maximumf>, %65, %cst_37 [1] : vector<8x8xf32> to vector<8xf32>
    %67 = vector.shape_cast %66 : vector<8xf32> to vector<8x1xf32>
    %68 = vector.broadcast %67 : vector<8x1xf32> to vector<8x8xf32>
    %69 = arith.subf %65, %68 : vector<8x8xf32>
    %70 = math.exp %69 : vector<8x8xf32>
    %cst_38 = arith.constant 0.000000e+00 : f32
    %71 = vector.broadcast %cst_38 : f32 to vector<8x8xf32>
    %72 = arith.select %5, %70, %71 : vector<8x8xi1>, vector<8x8xf32>
    %cst_39 = arith.constant dense<0.000000e+00> : vector<8xf32>
    %73 = vector.multi_reduction <add>, %72, %cst_39 [1] : vector<8x8xf32> to vector<8xf32>
    %74 = vector.shape_cast %73 : vector<8xf32> to vector<8x1xf32>
    %75 = vector.broadcast %74 : vector<8x1xf32> to vector<8x8xf32>
    %76 = arith.divf %72, %75 : vector<8x8xf32>
    %77 = vector.extract_strided_slice %22 {offsets = [8, 0], sizes = [8, 32], strides = [1, 1]} : vector<16x32xf32> to vector<8x32xf32>
    %cst_40 = arith.constant dense<0.000000e+00> : vector<8x32xf32>
    %78 = tpu.matmul %76, %77, %cst_40 {dimension_numbers = #tpu.dot_dimension_numbers<[1], [0], [0], [1], [0, 0, 1, 1], [], []>} : vector<8x8xf32>, vector<8x32xf32>, vector<8x32xf32> -> vector<8x32xf32>
    %79 = tpu.concatenate %53, %78 in 0 : vector<8x32xf32>, vector<8x32xf32> -> vector<16x32xf32>
    %c0_41 = arith.constant 0 : index
    %c0_42 = arith.constant 0 : index
    %c0_43 = arith.constant 0 : index
    %80 = vector.load %arg10[%c0_41, %c0_42, %c0_43] : memref<2x1x32xf32, #tpu.memory_space<vmem>>, vector<1x1x32xf32>
    %81 = vector.shape_cast %80 : vector<1x1x32xf32> to vector<1x32xf32>
    %82 = vector.broadcast %81 : vector<1x32xf32> to vector<16x32xf32>
    %83 = arith.addf %79, %82 : vector<16x32xf32>
    %cst_44 = arith.constant 0.000000e+00 : f32
    %84 = vector.broadcast %cst_44 : f32 to vector<16x32xf32>
    %85 = arith.cmpf ogt, %83, %84 : vector<16x32xf32>
    %cst_45 = arith.constant 0.00999999977 : f32
    %86 = vector.broadcast %cst_45 : f32 to vector<16x32xf32>
    %87 = arith.mulf %86, %83 : vector<16x32xf32>
    %88 = arith.select %85, %83, %87 : vector<16x32xi1>, vector<16x32xf32>
    %c1 = arith.constant 1 : index
    %c0_46 = arith.constant 0 : index
    %c0_47 = arith.constant 0 : index
    %89 = vector.load %arg7[%c1, %c0_46, %c0_47] : memref<2x32x32xf32, #tpu.memory_space<vmem>>, vector<1x32x32xf32>
    %90 = vector.shape_cast %89 : vector<1x32x32xf32> to vector<32x32xf32>
    %cst_48 = arith.constant dense<0.000000e+00> : vector<16x32xf32>
    %91 = tpu.matmul %19, %90, %cst_48 {dimension_numbers = #tpu.dot_dimension_numbers<[1], [0], [0], [1], [0, 0, 1, 1], [], []>} : vector<16x32xf32>, vector<32x32xf32>, vector<16x32xf32> -> vector<16x32xf32>
    %c1_49 = arith.constant 1 : index
    %c0_50 = arith.constant 0 : index
    %c0_51 = arith.constant 0 : index
    %92 = vector.load %arg8[%c1_49, %c0_50, %c0_51] : memref<2x32x1xf32, #tpu.memory_space<vmem>>, vector<1x32x1xf32>
    %93 = vector.shape_cast %92 : vector<1x32x1xf32> to vector<32x1xf32>
    %c1_52 = arith.constant 1 : index
    %c0_53 = arith.constant 0 : index
    %c0_54 = arith.constant 0 : index
    %94 = vector.load %arg9[%c1_52, %c0_53, %c0_54] : memref<2x32x1xf32, #tpu.memory_space<vmem>>, vector<1x32x1xf32>
    %95 = vector.shape_cast %94 : vector<1x32x1xf32> to vector<32x1xf32>
    %cst_55 = arith.constant dense<0.000000e+00> : vector<16x1xf32>
    %96 = tpu.matmul %91, %93, %cst_55 {dimension_numbers = #tpu.dot_dimension_numbers<[1], [0], [0], [1], [0, 0, 1, 1], [], []>} : vector<16x32xf32>, vector<32x1xf32>, vector<16x1xf32> -> vector<16x1xf32>
    %cst_56 = arith.constant dense<0.000000e+00> : vector<16x1xf32>
    %97 = tpu.matmul %91, %95, %cst_56 {dimension_numbers = #tpu.dot_dimension_numbers<[1], [0], [0], [1], [0, 0, 1, 1], [], []>} : vector<16x32xf32>, vector<32x1xf32>, vector<16x1xf32> -> vector<16x1xf32>
    %98 = vector.extract_strided_slice %97 {offsets = [0, 0], sizes = [8, 1], strides = [1, 1]} : vector<16x1xf32> to vector<8x1xf32>
    %99 = vector.extract_strided_slice %96 {offsets = [0, 0], sizes = [8, 1], strides = [1, 1]} : vector<16x1xf32> to vector<8x1xf32>
    %100 = tpu.transpose %99, [1, 0] : vector<8x1xf32> -> vector<1x8xf32>
    %101 = vector.broadcast %98 : vector<8x1xf32> to vector<8x8xf32>
    %102 = vector.broadcast %100 : vector<1x8xf32> to vector<8x8xf32>
    %103 = arith.addf %101, %102 : vector<8x8xf32>
    %cst_57 = arith.constant 0.000000e+00 : f32
    %104 = vector.broadcast %cst_57 : f32 to vector<8x8xf32>
    %105 = arith.cmpf ogt, %103, %104 : vector<8x8xf32>
    %cst_58 = arith.constant 2.000000e-01 : f32
    %106 = vector.broadcast %cst_58 : f32 to vector<8x8xf32>
    %107 = arith.mulf %106, %103 : vector<8x8xf32>
    %108 = arith.select %105, %103, %107 : vector<8x8xi1>, vector<8x8xf32>
    %109 = arith.addf %108, %8 : vector<8x8xf32>
    %cst_59 = arith.constant dense<0xFF800000> : vector<8xf32>
    %110 = vector.multi_reduction <maximumf>, %109, %cst_59 [1] : vector<8x8xf32> to vector<8xf32>
    %111 = vector.shape_cast %110 : vector<8xf32> to vector<8x1xf32>
    %112 = vector.broadcast %111 : vector<8x1xf32> to vector<8x8xf32>
    %113 = arith.subf %109, %112 : vector<8x8xf32>
    %114 = math.exp %113 : vector<8x8xf32>
    %cst_60 = arith.constant 0.000000e+00 : f32
    %115 = vector.broadcast %cst_60 : f32 to vector<8x8xf32>
    %116 = arith.select %2, %114, %115 : vector<8x8xi1>, vector<8x8xf32>
    %cst_61 = arith.constant dense<0.000000e+00> : vector<8xf32>
    %117 = vector.multi_reduction <add>, %116, %cst_61 [1] : vector<8x8xf32> to vector<8xf32>
    %118 = vector.shape_cast %117 : vector<8xf32> to vector<8x1xf32>
    %119 = vector.broadcast %118 : vector<8x1xf32> to vector<8x8xf32>
    %120 = arith.divf %116, %119 : vector<8x8xf32>
    %121 = vector.extract_strided_slice %91 {offsets = [0, 0], sizes = [8, 32], strides = [1, 1]} : vector<16x32xf32> to vector<8x32xf32>
    %cst_62 = arith.constant dense<0.000000e+00> : vector<8x32xf32>
    %122 = tpu.matmul %120, %121, %cst_62 {dimension_numbers = #tpu.dot_dimension_numbers<[1], [0], [0], [1], [0, 0, 1, 1], [], []>} : vector<8x8xf32>, vector<8x32xf32>, vector<8x32xf32> -> vector<8x32xf32>
    %123 = vector.extract_strided_slice %97 {offsets = [8, 0], sizes = [8, 1], strides = [1, 1]} : vector<16x1xf32> to vector<8x1xf32>
    %124 = vector.extract_strided_slice %96 {offsets = [8, 0], sizes = [8, 1], strides = [1, 1]} : vector<16x1xf32> to vector<8x1xf32>
    %125 = tpu.transpose %124, [1, 0] : vector<8x1xf32> -> vector<1x8xf32>
    %126 = vector.broadcast %123 : vector<8x1xf32> to vector<8x8xf32>
    %127 = vector.broadcast %125 : vector<1x8xf32> to vector<8x8xf32>
    %128 = arith.addf %126, %127 : vector<8x8xf32>
    %cst_63 = arith.constant 0.000000e+00 : f32
    %129 = vector.broadcast %cst_63 : f32 to vector<8x8xf32>
    %130 = arith.cmpf ogt, %128, %129 : vector<8x8xf32>
    %cst_64 = arith.constant 2.000000e-01 : f32
    %131 = vector.broadcast %cst_64 : f32 to vector<8x8xf32>
    %132 = arith.mulf %131, %128 : vector<8x8xf32>
    %133 = arith.select %130, %128, %132 : vector<8x8xi1>, vector<8x8xf32>
    %134 = arith.addf %133, %11 : vector<8x8xf32>
    %cst_65 = arith.constant dense<0xFF800000> : vector<8xf32>
    %135 = vector.multi_reduction <maximumf>, %134, %cst_65 [1] : vector<8x8xf32> to vector<8xf32>
    %136 = vector.shape_cast %135 : vector<8xf32> to vector<8x1xf32>
    %137 = vector.broadcast %136 : vector<8x1xf32> to vector<8x8xf32>
    %138 = arith.subf %134, %137 : vector<8x8xf32>
    %139 = math.exp %138 : vector<8x8xf32>
    %cst_66 = arith.constant 0.000000e+00 : f32
    %140 = vector.broadcast %cst_66 : f32 to vector<8x8xf32>
    %141 = arith.select %5, %139, %140 : vector<8x8xi1>, vector<8x8xf32>
    %cst_67 = arith.constant dense<0.000000e+00> : vector<8xf32>
    %142 = vector.multi_reduction <add>, %141, %cst_67 [1] : vector<8x8xf32> to vector<8xf32>
    %143 = vector.shape_cast %142 : vector<8xf32> to vector<8x1xf32>
    %144 = vector.broadcast %143 : vector<8x1xf32> to vector<8x8xf32>
    %145 = arith.divf %141, %144 : vector<8x8xf32>
    %146 = vector.extract_strided_slice %91 {offsets = [8, 0], sizes = [8, 32], strides = [1, 1]} : vector<16x32xf32> to vector<8x32xf32>
    %cst_68 = arith.constant dense<0.000000e+00> : vector<8x32xf32>
    %147 = tpu.matmul %145, %146, %cst_68 {dimension_numbers = #tpu.dot_dimension_numbers<[1], [0], [0], [1], [0, 0, 1, 1], [], []>} : vector<8x8xf32>, vector<8x32xf32>, vector<8x32xf32> -> vector<8x32xf32>
    %148 = tpu.concatenate %122, %147 in 0 : vector<8x32xf32>, vector<8x32xf32> -> vector<16x32xf32>
    %c1_69 = arith.constant 1 : index
    %c0_70 = arith.constant 0 : index
    %c0_71 = arith.constant 0 : index
    %149 = vector.load %arg10[%c1_69, %c0_70, %c0_71] : memref<2x1x32xf32, #tpu.memory_space<vmem>>, vector<1x1x32xf32>
    %150 = vector.shape_cast %149 : vector<1x1x32xf32> to vector<1x32xf32>
    %151 = vector.broadcast %150 : vector<1x32xf32> to vector<16x32xf32>
    %152 = arith.addf %148, %151 : vector<16x32xf32>
    %cst_72 = arith.constant 0.000000e+00 : f32
    %153 = vector.broadcast %cst_72 : f32 to vector<16x32xf32>
    %154 = arith.cmpf ogt, %152, %153 : vector<16x32xf32>
    %cst_73 = arith.constant 0.00999999977 : f32
    %155 = vector.broadcast %cst_73 : f32 to vector<16x32xf32>
    %156 = arith.mulf %155, %152 : vector<16x32xf32>
    %157 = arith.select %154, %152, %156 : vector<16x32xi1>, vector<16x32xf32>
    %c0_74 = arith.constant 0 : index
    %c0_75 = arith.constant 0 : index
    %c0_76 = arith.constant 0 : index
    %158 = vector.load %arg11[%c0_74, %c0_75, %c0_76] : memref<4x32x32xf32, #tpu.memory_space<vmem>>, vector<1x32x32xf32>
    %159 = vector.shape_cast %158 : vector<1x32x32xf32> to vector<32x32xf32>
    %cst_77 = arith.constant dense<0.000000e+00> : vector<16x32xf32>
    %160 = tpu.matmul %88, %159, %cst_77 {dimension_numbers = #tpu.dot_dimension_numbers<[1], [0], [0], [1], [0, 0, 1, 1], [], []>} : vector<16x32xf32>, vector<32x32xf32>, vector<16x32xf32> -> vector<16x32xf32>
    %c1_78 = arith.constant 1 : index
    %c0_79 = arith.constant 0 : index
    %c0_80 = arith.constant 0 : index
    %161 = vector.load %arg11[%c1_78, %c0_79, %c0_80] : memref<4x32x32xf32, #tpu.memory_space<vmem>>, vector<1x32x32xf32>
    %162 = vector.shape_cast %161 : vector<1x32x32xf32> to vector<32x32xf32>
    %cst_81 = arith.constant dense<0.000000e+00> : vector<16x32xf32>
    %163 = tpu.matmul %157, %162, %cst_81 {dimension_numbers = #tpu.dot_dimension_numbers<[1], [0], [0], [1], [0, 0, 1, 1], [], []>} : vector<16x32xf32>, vector<32x32xf32>, vector<16x32xf32> -> vector<16x32xf32>
    %164 = arith.addf %160, %163 : vector<16x32xf32>
    %c0_82 = arith.constant 0 : index
    %c0_83 = arith.constant 0 : index
    %c0_84 = arith.constant 0 : index
    %165 = vector.load %arg12[%c0_82, %c0_83, %c0_84] : memref<2x32x1xf32, #tpu.memory_space<vmem>>, vector<1x32x1xf32>
    %166 = vector.shape_cast %165 : vector<1x32x1xf32> to vector<32x1xf32>
    %c0_85 = arith.constant 0 : index
    %c0_86 = arith.constant 0 : index
    %c0_87 = arith.constant 0 : index
    %167 = vector.load %arg13[%c0_85, %c0_86, %c0_87] : memref<2x32x1xf32, #tpu.memory_space<vmem>>, vector<1x32x1xf32>
    %168 = vector.shape_cast %167 : vector<1x32x1xf32> to vector<32x1xf32>
    %cst_88 = arith.constant dense<0.000000e+00> : vector<16x1xf32>
    %169 = tpu.matmul %164, %166, %cst_88 {dimension_numbers = #tpu.dot_dimension_numbers<[1], [0], [0], [1], [0, 0, 1, 1], [], []>} : vector<16x32xf32>, vector<32x1xf32>, vector<16x1xf32> -> vector<16x1xf32>
    %cst_89 = arith.constant dense<0.000000e+00> : vector<16x1xf32>
    %170 = tpu.matmul %164, %168, %cst_89 {dimension_numbers = #tpu.dot_dimension_numbers<[1], [0], [0], [1], [0, 0, 1, 1], [], []>} : vector<16x32xf32>, vector<32x1xf32>, vector<16x1xf32> -> vector<16x1xf32>
    %171 = vector.extract_strided_slice %170 {offsets = [0, 0], sizes = [8, 1], strides = [1, 1]} : vector<16x1xf32> to vector<8x1xf32>
    %172 = vector.extract_strided_slice %169 {offsets = [0, 0], sizes = [8, 1], strides = [1, 1]} : vector<16x1xf32> to vector<8x1xf32>
    %173 = tpu.transpose %172, [1, 0] : vector<8x1xf32> -> vector<1x8xf32>
    %174 = vector.broadcast %171 : vector<8x1xf32> to vector<8x8xf32>
    %175 = vector.broadcast %173 : vector<1x8xf32> to vector<8x8xf32>
    %176 = arith.addf %174, %175 : vector<8x8xf32>
    %cst_90 = arith.constant 0.000000e+00 : f32
    %177 = vector.broadcast %cst_90 : f32 to vector<8x8xf32>
    %178 = arith.cmpf ogt, %176, %177 : vector<8x8xf32>
    %cst_91 = arith.constant 2.000000e-01 : f32
    %179 = vector.broadcast %cst_91 : f32 to vector<8x8xf32>
    %180 = arith.mulf %179, %176 : vector<8x8xf32>
    %181 = arith.select %178, %176, %180 : vector<8x8xi1>, vector<8x8xf32>
    %182 = arith.addf %181, %8 : vector<8x8xf32>
    %cst_92 = arith.constant dense<0xFF800000> : vector<8xf32>
    %183 = vector.multi_reduction <maximumf>, %182, %cst_92 [1] : vector<8x8xf32> to vector<8xf32>
    %184 = vector.shape_cast %183 : vector<8xf32> to vector<8x1xf32>
    %185 = vector.broadcast %184 : vector<8x1xf32> to vector<8x8xf32>
    %186 = arith.subf %182, %185 : vector<8x8xf32>
    %187 = math.exp %186 : vector<8x8xf32>
    %cst_93 = arith.constant 0.000000e+00 : f32
    %188 = vector.broadcast %cst_93 : f32 to vector<8x8xf32>
    %189 = arith.select %2, %187, %188 : vector<8x8xi1>, vector<8x8xf32>
    %cst_94 = arith.constant dense<0.000000e+00> : vector<8xf32>
    %190 = vector.multi_reduction <add>, %189, %cst_94 [1] : vector<8x8xf32> to vector<8xf32>
    %191 = vector.shape_cast %190 : vector<8xf32> to vector<8x1xf32>
    %192 = vector.broadcast %191 : vector<8x1xf32> to vector<8x8xf32>
    %193 = arith.divf %189, %192 : vector<8x8xf32>
    %194 = vector.extract_strided_slice %164 {offsets = [0, 0], sizes = [8, 32], strides = [1, 1]} : vector<16x32xf32> to vector<8x32xf32>
    %cst_95 = arith.constant dense<0.000000e+00> : vector<8x32xf32>
    %195 = tpu.matmul %193, %194, %cst_95 {dimension_numbers = #tpu.dot_dimension_numbers<[1], [0], [0], [1], [0, 0, 1, 1], [], []>} : vector<8x8xf32>, vector<8x32xf32>, vector<8x32xf32> -> vector<8x32xf32>
    %196 = vector.extract_strided_slice %170 {offsets = [8, 0], sizes = [8, 1], strides = [1, 1]} : vector<16x1xf32> to vector<8x1xf32>
    %197 = vector.extract_strided_slice %169 {offsets = [8, 0], sizes = [8, 1], strides = [1, 1]} : vector<16x1xf32> to vector<8x1xf32>
    %198 = tpu.transpose %197, [1, 0] : vector<8x1xf32> -> vector<1x8xf32>
    %199 = vector.broadcast %196 : vector<8x1xf32> to vector<8x8xf32>
    %200 = vector.broadcast %198 : vector<1x8xf32> to vector<8x8xf32>
    %201 = arith.addf %199, %200 : vector<8x8xf32>
    %cst_96 = arith.constant 0.000000e+00 : f32
    %202 = vector.broadcast %cst_96 : f32 to vector<8x8xf32>
    %203 = arith.cmpf ogt, %201, %202 : vector<8x8xf32>
    %cst_97 = arith.constant 2.000000e-01 : f32
    %204 = vector.broadcast %cst_97 : f32 to vector<8x8xf32>
    %205 = arith.mulf %204, %201 : vector<8x8xf32>
    %206 = arith.select %203, %201, %205 : vector<8x8xi1>, vector<8x8xf32>
    %207 = arith.addf %206, %11 : vector<8x8xf32>
    %cst_98 = arith.constant dense<0xFF800000> : vector<8xf32>
    %208 = vector.multi_reduction <maximumf>, %207, %cst_98 [1] : vector<8x8xf32> to vector<8xf32>
    %209 = vector.shape_cast %208 : vector<8xf32> to vector<8x1xf32>
    %210 = vector.broadcast %209 : vector<8x1xf32> to vector<8x8xf32>
    %211 = arith.subf %207, %210 : vector<8x8xf32>
    %212 = math.exp %211 : vector<8x8xf32>
    %cst_99 = arith.constant 0.000000e+00 : f32
    %213 = vector.broadcast %cst_99 : f32 to vector<8x8xf32>
    %214 = arith.select %5, %212, %213 : vector<8x8xi1>, vector<8x8xf32>
    %cst_100 = arith.constant dense<0.000000e+00> : vector<8xf32>
    %215 = vector.multi_reduction <add>, %214, %cst_100 [1] : vector<8x8xf32> to vector<8xf32>
    %216 = vector.shape_cast %215 : vector<8xf32> to vector<8x1xf32>
    %217 = vector.broadcast %216 : vector<8x1xf32> to vector<8x8xf32>
    %218 = arith.divf %214, %217 : vector<8x8xf32>
    %219 = vector.extract_strided_slice %164 {offsets = [8, 0], sizes = [8, 32], strides = [1, 1]} : vector<16x32xf32> to vector<8x32xf32>
    %cst_101 = arith.constant dense<0.000000e+00> : vector<8x32xf32>
    %220 = tpu.matmul %218, %219, %cst_101 {dimension_numbers = #tpu.dot_dimension_numbers<[1], [0], [0], [1], [0, 0, 1, 1], [], []>} : vector<8x8xf32>, vector<8x32xf32>, vector<8x32xf32> -> vector<8x32xf32>
    %221 = tpu.concatenate %195, %220 in 0 : vector<8x32xf32>, vector<8x32xf32> -> vector<16x32xf32>
    %c0_102 = arith.constant 0 : index
    %c0_103 = arith.constant 0 : index
    %c0_104 = arith.constant 0 : index
    %222 = vector.load %arg14[%c0_102, %c0_103, %c0_104] : memref<2x1x32xf32, #tpu.memory_space<vmem>>, vector<1x1x32xf32>
    %223 = vector.shape_cast %222 : vector<1x1x32xf32> to vector<1x32xf32>
    %224 = vector.broadcast %223 : vector<1x32xf32> to vector<16x32xf32>
    %225 = arith.addf %221, %224 : vector<16x32xf32>
    %cst_105 = arith.constant 0.000000e+00 : f32
    %226 = vector.broadcast %cst_105 : f32 to vector<16x32xf32>
    %227 = arith.cmpf ogt, %225, %226 : vector<16x32xf32>
    %cst_106 = arith.constant 0.00999999977 : f32
    %228 = vector.broadcast %cst_106 : f32 to vector<16x32xf32>
    %229 = arith.mulf %228, %225 : vector<16x32xf32>
    %230 = arith.select %227, %225, %229 : vector<16x32xi1>, vector<16x32xf32>
    %c2 = arith.constant 2 : index
    %c0_107 = arith.constant 0 : index
    %c0_108 = arith.constant 0 : index
    %231 = vector.load %arg11[%c2, %c0_107, %c0_108] : memref<4x32x32xf32, #tpu.memory_space<vmem>>, vector<1x32x32xf32>
    %232 = vector.shape_cast %231 : vector<1x32x32xf32> to vector<32x32xf32>
    %cst_109 = arith.constant dense<0.000000e+00> : vector<16x32xf32>
    %233 = tpu.matmul %88, %232, %cst_109 {dimension_numbers = #tpu.dot_dimension_numbers<[1], [0], [0], [1], [0, 0, 1, 1], [], []>} : vector<16x32xf32>, vector<32x32xf32>, vector<16x32xf32> -> vector<16x32xf32>
    %c3 = arith.constant 3 : index
    %c0_110 = arith.constant 0 : index
    %c0_111 = arith.constant 0 : index
    %234 = vector.load %arg11[%c3, %c0_110, %c0_111] : memref<4x32x32xf32, #tpu.memory_space<vmem>>, vector<1x32x32xf32>
    %235 = vector.shape_cast %234 : vector<1x32x32xf32> to vector<32x32xf32>
    %cst_112 = arith.constant dense<0.000000e+00> : vector<16x32xf32>
    %236 = tpu.matmul %157, %235, %cst_112 {dimension_numbers = #tpu.dot_dimension_numbers<[1], [0], [0], [1], [0, 0, 1, 1], [], []>} : vector<16x32xf32>, vector<32x32xf32>, vector<16x32xf32> -> vector<16x32xf32>
    %237 = arith.addf %233, %236 : vector<16x32xf32>
    %c1_113 = arith.constant 1 : index
    %c0_114 = arith.constant 0 : index
    %c0_115 = arith.constant 0 : index
    %238 = vector.load %arg12[%c1_113, %c0_114, %c0_115] : memref<2x32x1xf32, #tpu.memory_space<vmem>>, vector<1x32x1xf32>
    %239 = vector.shape_cast %238 : vector<1x32x1xf32> to vector<32x1xf32>
    %c1_116 = arith.constant 1 : index
    %c0_117 = arith.constant 0 : index
    %c0_118 = arith.constant 0 : index
    %240 = vector.load %arg13[%c1_116, %c0_117, %c0_118] : memref<2x32x1xf32, #tpu.memory_space<vmem>>, vector<1x32x1xf32>
    %241 = vector.shape_cast %240 : vector<1x32x1xf32> to vector<32x1xf32>
    %cst_119 = arith.constant dense<0.000000e+00> : vector<16x1xf32>
    %242 = tpu.matmul %237, %239, %cst_119 {dimension_numbers = #tpu.dot_dimension_numbers<[1], [0], [0], [1], [0, 0, 1, 1], [], []>} : vector<16x32xf32>, vector<32x1xf32>, vector<16x1xf32> -> vector<16x1xf32>
    %cst_120 = arith.constant dense<0.000000e+00> : vector<16x1xf32>
    %243 = tpu.matmul %237, %241, %cst_120 {dimension_numbers = #tpu.dot_dimension_numbers<[1], [0], [0], [1], [0, 0, 1, 1], [], []>} : vector<16x32xf32>, vector<32x1xf32>, vector<16x1xf32> -> vector<16x1xf32>
    %244 = vector.extract_strided_slice %243 {offsets = [0, 0], sizes = [8, 1], strides = [1, 1]} : vector<16x1xf32> to vector<8x1xf32>
    %245 = vector.extract_strided_slice %242 {offsets = [0, 0], sizes = [8, 1], strides = [1, 1]} : vector<16x1xf32> to vector<8x1xf32>
    %246 = tpu.transpose %245, [1, 0] : vector<8x1xf32> -> vector<1x8xf32>
    %247 = vector.broadcast %244 : vector<8x1xf32> to vector<8x8xf32>
    %248 = vector.broadcast %246 : vector<1x8xf32> to vector<8x8xf32>
    %249 = arith.addf %247, %248 : vector<8x8xf32>
    %cst_121 = arith.constant 0.000000e+00 : f32
    %250 = vector.broadcast %cst_121 : f32 to vector<8x8xf32>
    %251 = arith.cmpf ogt, %249, %250 : vector<8x8xf32>
    %cst_122 = arith.constant 2.000000e-01 : f32
    %252 = vector.broadcast %cst_122 : f32 to vector<8x8xf32>
    %253 = arith.mulf %252, %249 : vector<8x8xf32>
    %254 = arith.select %251, %249, %253 : vector<8x8xi1>, vector<8x8xf32>
    %255 = arith.addf %254, %8 : vector<8x8xf32>
    %cst_123 = arith.constant dense<0xFF800000> : vector<8xf32>
    %256 = vector.multi_reduction <maximumf>, %255, %cst_123 [1] : vector<8x8xf32> to vector<8xf32>
    %257 = vector.shape_cast %256 : vector<8xf32> to vector<8x1xf32>
    %258 = vector.broadcast %257 : vector<8x1xf32> to vector<8x8xf32>
    %259 = arith.subf %255, %258 : vector<8x8xf32>
    %260 = math.exp %259 : vector<8x8xf32>
    %cst_124 = arith.constant 0.000000e+00 : f32
    %261 = vector.broadcast %cst_124 : f32 to vector<8x8xf32>
    %262 = arith.select %2, %260, %261 : vector<8x8xi1>, vector<8x8xf32>
    %cst_125 = arith.constant dense<0.000000e+00> : vector<8xf32>
    %263 = vector.multi_reduction <add>, %262, %cst_125 [1] : vector<8x8xf32> to vector<8xf32>
    %264 = vector.shape_cast %263 : vector<8xf32> to vector<8x1xf32>
    %265 = vector.broadcast %264 : vector<8x1xf32> to vector<8x8xf32>
    %266 = arith.divf %262, %265 : vector<8x8xf32>
    %267 = vector.extract_strided_slice %237 {offsets = [0, 0], sizes = [8, 32], strides = [1, 1]} : vector<16x32xf32> to vector<8x32xf32>
    %cst_126 = arith.constant dense<0.000000e+00> : vector<8x32xf32>
    %268 = tpu.matmul %266, %267, %cst_126 {dimension_numbers = #tpu.dot_dimension_numbers<[1], [0], [0], [1], [0, 0, 1, 1], [], []>} : vector<8x8xf32>, vector<8x32xf32>, vector<8x32xf32> -> vector<8x32xf32>
    %269 = vector.extract_strided_slice %243 {offsets = [8, 0], sizes = [8, 1], strides = [1, 1]} : vector<16x1xf32> to vector<8x1xf32>
    %270 = vector.extract_strided_slice %242 {offsets = [8, 0], sizes = [8, 1], strides = [1, 1]} : vector<16x1xf32> to vector<8x1xf32>
    %271 = tpu.transpose %270, [1, 0] : vector<8x1xf32> -> vector<1x8xf32>
    %272 = vector.broadcast %269 : vector<8x1xf32> to vector<8x8xf32>
    %273 = vector.broadcast %271 : vector<1x8xf32> to vector<8x8xf32>
    %274 = arith.addf %272, %273 : vector<8x8xf32>
    %cst_127 = arith.constant 0.000000e+00 : f32
    %275 = vector.broadcast %cst_127 : f32 to vector<8x8xf32>
    %276 = arith.cmpf ogt, %274, %275 : vector<8x8xf32>
    %cst_128 = arith.constant 2.000000e-01 : f32
    %277 = vector.broadcast %cst_128 : f32 to vector<8x8xf32>
    %278 = arith.mulf %277, %274 : vector<8x8xf32>
    %279 = arith.select %276, %274, %278 : vector<8x8xi1>, vector<8x8xf32>
    %280 = arith.addf %279, %11 : vector<8x8xf32>
    %cst_129 = arith.constant dense<0xFF800000> : vector<8xf32>
    %281 = vector.multi_reduction <maximumf>, %280, %cst_129 [1] : vector<8x8xf32> to vector<8xf32>
    %282 = vector.shape_cast %281 : vector<8xf32> to vector<8x1xf32>
    %283 = vector.broadcast %282 : vector<8x1xf32> to vector<8x8xf32>
    %284 = arith.subf %280, %283 : vector<8x8xf32>
    %285 = math.exp %284 : vector<8x8xf32>
    %cst_130 = arith.constant 0.000000e+00 : f32
    %286 = vector.broadcast %cst_130 : f32 to vector<8x8xf32>
    %287 = arith.select %5, %285, %286 : vector<8x8xi1>, vector<8x8xf32>
    %cst_131 = arith.constant dense<0.000000e+00> : vector<8xf32>
    %288 = vector.multi_reduction <add>, %287, %cst_131 [1] : vector<8x8xf32> to vector<8xf32>
    %289 = vector.shape_cast %288 : vector<8xf32> to vector<8x1xf32>
    %290 = vector.broadcast %289 : vector<8x1xf32> to vector<8x8xf32>
    %291 = arith.divf %287, %290 : vector<8x8xf32>
    %292 = vector.extract_strided_slice %237 {offsets = [8, 0], sizes = [8, 32], strides = [1, 1]} : vector<16x32xf32> to vector<8x32xf32>
    %cst_132 = arith.constant dense<0.000000e+00> : vector<8x32xf32>
    %293 = tpu.matmul %291, %292, %cst_132 {dimension_numbers = #tpu.dot_dimension_numbers<[1], [0], [0], [1], [0, 0, 1, 1], [], []>} : vector<8x8xf32>, vector<8x32xf32>, vector<8x32xf32> -> vector<8x32xf32>
    %294 = tpu.concatenate %268, %293 in 0 : vector<8x32xf32>, vector<8x32xf32> -> vector<16x32xf32>
    %c1_133 = arith.constant 1 : index
    %c0_134 = arith.constant 0 : index
    %c0_135 = arith.constant 0 : index
    %295 = vector.load %arg14[%c1_133, %c0_134, %c0_135] : memref<2x1x32xf32, #tpu.memory_space<vmem>>, vector<1x1x32xf32>
    %296 = vector.shape_cast %295 : vector<1x1x32xf32> to vector<1x32xf32>
    %297 = vector.broadcast %296 : vector<1x32xf32> to vector<16x32xf32>
    %298 = arith.addf %294, %297 : vector<16x32xf32>
    %cst_136 = arith.constant 0.000000e+00 : f32
    %299 = vector.broadcast %cst_136 : f32 to vector<16x32xf32>
    %300 = arith.cmpf ogt, %298, %299 : vector<16x32xf32>
    %cst_137 = arith.constant 0.00999999977 : f32
    %301 = vector.broadcast %cst_137 : f32 to vector<16x32xf32>
    %302 = arith.mulf %301, %298 : vector<16x32xf32>
    %303 = arith.select %300, %298, %302 : vector<16x32xi1>, vector<16x32xf32>
    %c0_138 = arith.constant 0 : index
    %c0_139 = arith.constant 0 : index
    %c0_140 = arith.constant 0 : index
    %304 = vector.load %arg15[%c0_138, %c0_139, %c0_140] : memref<2x32x32xf32, #tpu.memory_space<vmem>>, vector<1x32x32xf32>
    %305 = vector.shape_cast %304 : vector<1x32x32xf32> to vector<32x32xf32>
    %cst_141 = arith.constant dense<0.000000e+00> : vector<16x32xf32>
    %306 = tpu.matmul %230, %305, %cst_141 {dimension_numbers = #tpu.dot_dimension_numbers<[1], [0], [0], [1], [0, 0, 1, 1], [], []>} : vector<16x32xf32>, vector<32x32xf32>, vector<16x32xf32> -> vector<16x32xf32>
    %c1_142 = arith.constant 1 : index
    %c0_143 = arith.constant 0 : index
    %c0_144 = arith.constant 0 : index
    %307 = vector.load %arg15[%c1_142, %c0_143, %c0_144] : memref<2x32x32xf32, #tpu.memory_space<vmem>>, vector<1x32x32xf32>
    %308 = vector.shape_cast %307 : vector<1x32x32xf32> to vector<32x32xf32>
    %cst_145 = arith.constant dense<0.000000e+00> : vector<16x32xf32>
    %309 = tpu.matmul %303, %308, %cst_145 {dimension_numbers = #tpu.dot_dimension_numbers<[1], [0], [0], [1], [0, 0, 1, 1], [], []>} : vector<16x32xf32>, vector<32x32xf32>, vector<16x32xf32> -> vector<16x32xf32>
    %310 = arith.addf %306, %309 : vector<16x32xf32>
    %c0_146 = arith.constant 0 : index
    %c0_147 = arith.constant 0 : index
    %311 = vector.load %arg16[%c0_146, %c0_147] : memref<32x1xf32, #tpu.memory_space<vmem>>, vector<32x1xf32>
    %c0_148 = arith.constant 0 : index
    %c0_149 = arith.constant 0 : index
    %312 = vector.load %arg17[%c0_148, %c0_149] : memref<32x1xf32, #tpu.memory_space<vmem>>, vector<32x1xf32>
    %cst_150 = arith.constant dense<0.000000e+00> : vector<16x1xf32>
    %313 = tpu.matmul %310, %311, %cst_150 {dimension_numbers = #tpu.dot_dimension_numbers<[1], [0], [0], [1], [0, 0, 1, 1], [], []>} : vector<16x32xf32>, vector<32x1xf32>, vector<16x1xf32> -> vector<16x1xf32>
    %cst_151 = arith.constant dense<0.000000e+00> : vector<16x1xf32>
    %314 = tpu.matmul %310, %312, %cst_151 {dimension_numbers = #tpu.dot_dimension_numbers<[1], [0], [0], [1], [0, 0, 1, 1], [], []>} : vector<16x32xf32>, vector<32x1xf32>, vector<16x1xf32> -> vector<16x1xf32>
    %315 = vector.extract_strided_slice %314 {offsets = [0, 0], sizes = [8, 1], strides = [1, 1]} : vector<16x1xf32> to vector<8x1xf32>
    %316 = vector.extract_strided_slice %313 {offsets = [0, 0], sizes = [8, 1], strides = [1, 1]} : vector<16x1xf32> to vector<8x1xf32>
    %317 = tpu.transpose %316, [1, 0] : vector<8x1xf32> -> vector<1x8xf32>
    %318 = vector.broadcast %315 : vector<8x1xf32> to vector<8x8xf32>
    %319 = vector.broadcast %317 : vector<1x8xf32> to vector<8x8xf32>
    %320 = arith.addf %318, %319 : vector<8x8xf32>
    %cst_152 = arith.constant 0.000000e+00 : f32
    %321 = vector.broadcast %cst_152 : f32 to vector<8x8xf32>
    %322 = arith.cmpf ogt, %320, %321 : vector<8x8xf32>
    %cst_153 = arith.constant 2.000000e-01 : f32
    %323 = vector.broadcast %cst_153 : f32 to vector<8x8xf32>
    %324 = arith.mulf %323, %320 : vector<8x8xf32>
    %325 = arith.select %322, %320, %324 : vector<8x8xi1>, vector<8x8xf32>
    %326 = arith.addf %325, %8 : vector<8x8xf32>
    %cst_154 = arith.constant dense<0xFF800000> : vector<8xf32>
    %327 = vector.multi_reduction <maximumf>, %326, %cst_154 [1] : vector<8x8xf32> to vector<8xf32>
    %328 = vector.shape_cast %327 : vector<8xf32> to vector<8x1xf32>
    %329 = vector.broadcast %328 : vector<8x1xf32> to vector<8x8xf32>
    %330 = arith.subf %326, %329 : vector<8x8xf32>
    %331 = math.exp %330 : vector<8x8xf32>
    %cst_155 = arith.constant 0.000000e+00 : f32
    %332 = vector.broadcast %cst_155 : f32 to vector<8x8xf32>
    %333 = arith.select %2, %331, %332 : vector<8x8xi1>, vector<8x8xf32>
    %cst_156 = arith.constant dense<0.000000e+00> : vector<8xf32>
    %334 = vector.multi_reduction <add>, %333, %cst_156 [1] : vector<8x8xf32> to vector<8xf32>
    %335 = vector.shape_cast %334 : vector<8xf32> to vector<8x1xf32>
    %336 = vector.broadcast %335 : vector<8x1xf32> to vector<8x8xf32>
    %337 = arith.divf %333, %336 : vector<8x8xf32>
    %338 = vector.extract_strided_slice %310 {offsets = [0, 0], sizes = [8, 32], strides = [1, 1]} : vector<16x32xf32> to vector<8x32xf32>
    %cst_157 = arith.constant dense<0.000000e+00> : vector<8x32xf32>
    %339 = tpu.matmul %337, %338, %cst_157 {dimension_numbers = #tpu.dot_dimension_numbers<[1], [0], [0], [1], [0, 0, 1, 1], [], []>} : vector<8x8xf32>, vector<8x32xf32>, vector<8x32xf32> -> vector<8x32xf32>
    %340 = vector.extract_strided_slice %314 {offsets = [8, 0], sizes = [8, 1], strides = [1, 1]} : vector<16x1xf32> to vector<8x1xf32>
    %341 = vector.extract_strided_slice %313 {offsets = [8, 0], sizes = [8, 1], strides = [1, 1]} : vector<16x1xf32> to vector<8x1xf32>
    %342 = tpu.transpose %341, [1, 0] : vector<8x1xf32> -> vector<1x8xf32>
    %343 = vector.broadcast %340 : vector<8x1xf32> to vector<8x8xf32>
    %344 = vector.broadcast %342 : vector<1x8xf32> to vector<8x8xf32>
    %345 = arith.addf %343, %344 : vector<8x8xf32>
    %cst_158 = arith.constant 0.000000e+00 : f32
    %346 = vector.broadcast %cst_158 : f32 to vector<8x8xf32>
    %347 = arith.cmpf ogt, %345, %346 : vector<8x8xf32>
    %cst_159 = arith.constant 2.000000e-01 : f32
    %348 = vector.broadcast %cst_159 : f32 to vector<8x8xf32>
    %349 = arith.mulf %348, %345 : vector<8x8xf32>
    %350 = arith.select %347, %345, %349 : vector<8x8xi1>, vector<8x8xf32>
    %351 = arith.addf %350, %11 : vector<8x8xf32>
    %cst_160 = arith.constant dense<0xFF800000> : vector<8xf32>
    %352 = vector.multi_reduction <maximumf>, %351, %cst_160 [1] : vector<8x8xf32> to vector<8xf32>
    %353 = vector.shape_cast %352 : vector<8xf32> to vector<8x1xf32>
    %354 = vector.broadcast %353 : vector<8x1xf32> to vector<8x8xf32>
    %355 = arith.subf %351, %354 : vector<8x8xf32>
    %356 = math.exp %355 : vector<8x8xf32>
    %cst_161 = arith.constant 0.000000e+00 : f32
    %357 = vector.broadcast %cst_161 : f32 to vector<8x8xf32>
    %358 = arith.select %5, %356, %357 : vector<8x8xi1>, vector<8x8xf32>
    %cst_162 = arith.constant dense<0.000000e+00> : vector<8xf32>
    %359 = vector.multi_reduction <add>, %358, %cst_162 [1] : vector<8x8xf32> to vector<8xf32>
    %360 = vector.shape_cast %359 : vector<8xf32> to vector<8x1xf32>
    %361 = vector.broadcast %360 : vector<8x1xf32> to vector<8x8xf32>
    %362 = arith.divf %358, %361 : vector<8x8xf32>
    %363 = vector.extract_strided_slice %310 {offsets = [8, 0], sizes = [8, 32], strides = [1, 1]} : vector<16x32xf32> to vector<8x32xf32>
    %cst_163 = arith.constant dense<0.000000e+00> : vector<8x32xf32>
    %364 = tpu.matmul %362, %363, %cst_163 {dimension_numbers = #tpu.dot_dimension_numbers<[1], [0], [0], [1], [0, 0, 1, 1], [], []>} : vector<8x8xf32>, vector<8x32xf32>, vector<8x32xf32> -> vector<8x32xf32>
    %365 = tpu.concatenate %339, %364 in 0 : vector<8x32xf32>, vector<8x32xf32> -> vector<16x32xf32>
    %c0_164 = arith.constant 0 : index
    %c0_165 = arith.constant 0 : index
    %366 = vector.load %arg18[%c0_164, %c0_165] : memref<1x32xf32, #tpu.memory_space<vmem>>, vector<1x32xf32>
    %367 = vector.broadcast %366 : vector<1x32xf32> to vector<16x32xf32>
    %368 = arith.addf %365, %367 : vector<16x32xf32>
    %369 = vector.extract_strided_slice %368 {offsets = [0, 0], sizes = [8, 32], strides = [1, 1]} : vector<16x32xf32> to vector<8x32xf32>
    %cst_166 = arith.constant dense<0.000000e+00> : vector<32xf32>
    %370 = vector.multi_reduction <add>, %369, %cst_166 [0] : vector<8x32xf32> to vector<32xf32>
    %371 = vector.shape_cast %370 : vector<32xf32> to vector<1x32xf32>
    %cst_167 = arith.constant 8.000000e+00 : f32
    %372 = vector.broadcast %cst_167 : f32 to vector<1x32xf32>
    %373 = arith.divf %371, %372 : vector<1x32xf32>
    %374 = vector.extract_strided_slice %368 {offsets = [8, 0], sizes = [8, 32], strides = [1, 1]} : vector<16x32xf32> to vector<8x32xf32>
    %cst_168 = arith.constant dense<0.000000e+00> : vector<32xf32>
    %375 = vector.multi_reduction <add>, %374, %cst_168 [0] : vector<8x32xf32> to vector<32xf32>
    %376 = vector.shape_cast %375 : vector<32xf32> to vector<1x32xf32>
    %cst_169 = arith.constant 8.000000e+00 : f32
    %377 = vector.broadcast %cst_169 : f32 to vector<1x32xf32>
    %378 = arith.divf %376, %377 : vector<1x32xf32>
    %379 = arith.subf %373, %378 : vector<1x32xf32>
    %380 = math.absf %379 : vector<1x32xf32>
    %c0_170 = arith.constant 0 : index
    %c0_171 = arith.constant 0 : index
    %381 = vector.load %arg19[%c0_170, %c0_171] : memref<32x2xf32, #tpu.memory_space<vmem>>, vector<32x2xf32>
    %cst_172 = arith.constant dense<0.000000e+00> : vector<1x2xf32>
    %382 = tpu.matmul %380, %381, %cst_172 {dimension_numbers = #tpu.dot_dimension_numbers<[1], [0], [0], [1], [0, 0, 1, 1], [], []>} : vector<1x32xf32>, vector<32x2xf32>, vector<1x2xf32> -> vector<1x2xf32>
    %c0_173 = arith.constant 0 : index
    %c0_174 = arith.constant 0 : index
    %383 = vector.load %arg20[%c0_173, %c0_174] : memref<1x2xf32, #tpu.memory_space<vmem>>, vector<1x2xf32>
    %384 = arith.addf %382, %383 : vector<1x2xf32>
    %cst_175 = arith.constant dense<0xFF800000> : vector<1xf32>
    %385 = vector.multi_reduction <maximumf>, %384, %cst_175 [1] : vector<1x2xf32> to vector<1xf32>
    %386 = vector.shape_cast %385 : vector<1xf32> to vector<1x1xf32>
    %387 = vector.broadcast %386 : vector<1x1xf32> to vector<1x2xf32>
    %388 = arith.subf %384, %387 : vector<1x2xf32>
    %389 = math.exp %388 : vector<1x2xf32>
    %cst_176 = arith.constant dense<0.000000e+00> : vector<1xf32>
    %390 = vector.multi_reduction <add>, %389, %cst_176 [1] : vector<1x2xf32> to vector<1xf32>
    %391 = vector.shape_cast %390 : vector<1xf32> to vector<1x1xf32>
    %392 = vector.broadcast %391 : vector<1x1xf32> to vector<1x2xf32>
    %393 = arith.divf %389, %392 : vector<1x2xf32>
    %c0_177 = arith.constant 0 : index
    %c0_178 = arith.constant 0 : index
    %394 = vector.load %arg21[%c0_177, %c0_178] : memref<1x2xf32, #tpu.memory_space<vmem>>, vector<1x2xf32>
    tpu.vector_store %arg21[%c0_177, %c0_178], %393 {strides = array<i32>} : memref<1x2xf32, #tpu.memory_space<vmem>>, vector<1x2xf32>,
    %cst_179 = arith.constant dense<0xFF800000> : vector<1xf32>
    %395 = vector.multi_reduction <maximumf>, %393, %cst_179 [1] : vector<1x2xf32> to vector<1xf32>
    %396 = vector.shape_cast %395 : vector<1xf32> to vector<1x1xf32>
    %397 = vector.broadcast %396 : vector<1x1xf32> to vector<1x2xf32>
    %398 = arith.subf %393, %397 : vector<1x2xf32>
    %399 = vector.broadcast %396 : vector<1x1xf32> to vector<1x2xf32>
    %400 = arith.subf %393, %399 : vector<1x2xf32>
    %401 = math.exp %400 : vector<1x2xf32>
    %cst_180 = arith.constant dense<0.000000e+00> : vector<1xf32>
    %402 = vector.multi_reduction <add>, %401, %cst_180 [1] : vector<1x2xf32> to vector<1xf32>
    %403 = vector.shape_cast %402 : vector<1xf32> to vector<1x1xf32>
    %404 = math.log %403 : vector<1x1xf32>
    %405 = vector.broadcast %404 : vector<1x1xf32> to vector<1x2xf32>
    %406 = arith.subf %398, %405 : vector<1x2xf32>
    %407 = tpu.iota {dimensions = array<i32: 1>} : vector<1x2xi32>
    %c0_181 = arith.constant 0 : index
    %408 = memref.load %arg4[%c0_181] : memref<1xi32, #tpu.memory_space<smem>>
    %409 = vector.broadcast %408 : i32 to vector<1x2xi32>
    %410 = arith.cmpi eq, %407, %409 : vector<1x2xi32>
    %cst_182 = arith.constant 0.000000e+00 : f32
    %411 = vector.broadcast %cst_182 : f32 to vector<1x2xf32>
    %412 = arith.select %410, %406, %411 : vector<1x2xi1>, vector<1x2xf32>
    %cst_183 = arith.constant dense<0.000000e+00> : vector<1xf32>
    %413 = vector.multi_reduction <add>, %412, %cst_183 [1] : vector<1x2xf32> to vector<1xf32>
    %414 = vector.shape_cast %413 : vector<1xf32> to vector<1x1xf32>
    %cst_184 = arith.constant 0.000000e+00 : f32
    %415 = vector.broadcast %cst_184 : f32 to vector<1x1xf32>
    %416 = arith.subf %415, %414 : vector<1x1xf32>
    %c0_185 = arith.constant 0 : index
    %c0_186 = arith.constant 0 : index
    %417 = vector.load %arg22[%c0_185, %c0_186] : memref<1x1xf32, #tpu.memory_space<vmem>>, vector<1x1xf32>
    tpu.vector_store %arg22[%c0_185, %c0_186], %416 {strides = array<i32>} : memref<1x1xf32, #tpu.memory_space<vmem>>, vector<1x1xf32>,
    return
  }
}

</mosaic_0001>

<llo_original>
// kernel: forward.1
$region0: #{forward.1}
  #allocation0 [shape = 'u32[]', space=smem, size = 0x4, offset = 0x4, fixed_abs, tag = 'smem constant byte address 0x4 - core index']
  #allocation1 [shape = 'u32[144,128]{1,0:T(1,128)}', space=vmem, size = 0x12000, scoped, tag = 'internal scratch']
  #allocation2 [shape = 's32[1]{0:T(128)S(6)}', space=smem, size = 0x200, scoped, tag = 'scoped memory for forward.1']
  %s0 = inlined_call_operand.vmem [shape: f32[8,32], index: 0, kind: input, shape index: {}]
  %s1 = inlined_call_operand.vmem [shape: f32[8,32], index: 1, kind: input, shape index: {}]
  %s2 = inlined_call_operand.vmem [shape: f32[8,8], index: 2, kind: input, shape index: {}]
  %s3 = inlined_call_operand.vmem [shape: f32[8,8], index: 3, kind: input, shape index: {}]
  %s4 = inlined_call_operand.<no memory space> [shape: s32[1], index: 4, kind: input, shape index: {}]
  %s5 = inlined_call_operand.vmem [shape: f32[32,32], index: 5, kind: input, shape index: {}]
  %s6 = inlined_call_operand.vmem [shape: f32[1,32], index: 6, kind: input, shape index: {}]
  %s7 = inlined_call_operand.vmem [shape: f32[2,32,32], index: 7, kind: input, shape index: {}]
  %s8 = inlined_call_operand.vmem [shape: f32[2,32,1], index: 8, kind: input, shape index: {}]
  %s9 = inlined_call_operand.vmem [shape: f32[2,32,1], index: 9, kind: input, shape index: {}]
  %s10 = inlined_call_operand.vmem [shape: f32[2,1,32], index: 10, kind: input, shape index: {}]
  %s11 = inlined_call_operand.vmem [shape: f32[4,32,32], index: 11, kind: input, shape index: {}]
  %s12 = inlined_call_operand.vmem [shape: f32[2,32,1], index: 12, kind: input, shape index: {}]
  %s13 = inlined_call_operand.vmem [shape: f32[2,32,1], index: 13, kind: input, shape index: {}]
  %s14 = inlined_call_operand.vmem [shape: f32[2,1,32], index: 14, kind: input, shape index: {}]
  %s15 = inlined_call_operand.vmem [shape: f32[2,32,32], index: 15, kind: input, shape index: {}]
  %s16 = inlined_call_operand.vmem [shape: f32[32,1], index: 16, kind: input, shape index: {}]
  %s17 = inlined_call_operand.vmem [shape: f32[32,1], index: 17, kind: input, shape index: {}]
  %s18 = inlined_call_operand.vmem [shape: f32[1,32], index: 18, kind: input, shape index: {}]
  %s19 = inlined_call_operand.vmem [shape: f32[32,2], index: 19, kind: input, shape index: {}]
  %s20 = inlined_call_operand.vmem [shape: f32[1,2], index: 20, kind: input, shape index: {}]
  %s21 = inlined_call_operand.hbm [shape: f32[1,2], index: 21, kind: output, shape index: {0}]
  %s22 = inlined_call_operand.hbm [shape: f32[1,1], index: 22, kind: output, shape index: {1}]
  %23 = xla_tuple %s21, %s22
  %s24 = sld [smem:[#allocation0]]
  $region102: #{forward.1} parent=0
    _
  %s26 = ssub.s32 1, %s24
  %s27 = scalar_select 0, %s26, %s24
  %28 = sst [smem:[#allocation2]] %s4
  $region1: #{forward.1} parent=0
    #allocation3 [shape = 'u8[512]{0}', space=vmem, size = 0x400, scoped, tag = 'output window, operand 0, single buffered']
    #allocation4 [shape = 's32[1]{0}', space=sflag, size = 0x4, scoped, tag = 'scoped memory for forward.1']
    #allocation5 [shape = 'u8[512]{0}', space=vmem, size = 0x400, scoped, tag = 'output window, operand 1, single buffered']
    #allocation6 [shape = 's32[1]{0}', space=sflag, size = 0x4, scoped, tag = 'scoped memory for forward.1']
    %29 = vsyncpa [#allocation4], 0
    %30 = vsyncpa [#allocation6], 0
    // Predicated region
    $region2: #{forward.1} parent=1 // pred_check
      _
    $region3: #{forward.1} parent=1 // pred_check_branch
      %32 = sbr.rel (0) target = $region5
    $region4: #{forward.1} parent=1 // pred_region
      _
    $region5: #{forward.1} parent=1 // pred_fallthru
      _
    // Predicated region
    $region6: #{forward.1} parent=1 // pred_check
      _
    $region7: #{forward.1} parent=1 // pred_check_branch
      %34 = sbr.rel (0) target = $region9
    $region8: #{forward.1} parent=1 // pred_region
      _
    $region9: #{forward.1} parent=1 // pred_fallthru
      _
    // Predicated region
    $region10: #{forward.1} parent=1 // pred_check
      _
    $region11: #{forward.1} parent=1 // pred_check_branch
      %36 = sbr.rel (0) target = $region13
    $region12: #{forward.1} parent=1 // pred_region
      _
    $region13: #{forward.1} parent=1 // pred_fallthru
      _
    // Predicated region
    $region14: #{forward.1} parent=1 // pred_check
      _
    $region15: #{forward.1} parent=1 // pred_check_branch
      %38 = sbr.rel (0) target = $region17
    $region16: #{forward.1} parent=1 // pred_region
      _
    $region17: #{forward.1} parent=1 // pred_fallthru
      _
    // Predicated region
    $region18: #{forward.1} parent=1 // pred_check
      _
    $region19: #{forward.1} parent=1 // pred_check_branch
      %40 = sbr.rel (0) target = $region21
    $region20: #{forward.1} parent=1 // pred_region
      _
    $region21: #{forward.1} parent=1 // pred_fallthru
      _
    // Predicated region
    $region22: #{forward.1} parent=1 // pred_check
      _
    $region23: #{forward.1} parent=1 // pred_check_branch
      %42 = sbr.rel (0) target = $region25
    $region24: #{forward.1} parent=1 // pred_region
      _
    $region25: #{forward.1} parent=1 // pred_fallthru
      _
    // Predicated region
    $region26: #{forward.1} parent=1 // pred_check
      _
    $region27: #{forward.1} parent=1 // pred_check_branch
      %44 = sbr.rel (0) target = $region29
    $region28: #{forward.1} parent=1 // pred_region
      _
    $region29: #{forward.1} parent=1 // pred_fallthru
      _
    // Predicated region
    $region30: #{forward.1} parent=1 // pred_check
      _
    $region31: #{forward.1} parent=1 // pred_check_branch
      %46 = sbr.rel (0) target = $region33
    $region32: #{forward.1} parent=1 // pred_region
      _
    $region33: #{forward.1} parent=1 // pred_fallthru
      _
    // Predicated region
    $region34: #{forward.1} parent=1 // pred_check
      _
    $region35: #{forward.1} parent=1 // pred_check_branch
      %48 = sbr.rel (0) target = $region37
    $region36: #{forward.1} parent=1 // pred_region
      _
    $region37: #{forward.1} parent=1 // pred_fallthru
      _
    // Predicated region
    $region38: #{forward.1} parent=1 // pred_check
      _
    $region39: #{forward.1} parent=1 // pred_check_branch
      %50 = sbr.rel (0) target = $region41
    $region40: #{forward.1} parent=1 // pred_region
      _
    $region41: #{forward.1} parent=1 // pred_fallthru
      _
    // Predicated region
    $region42: #{forward.1} parent=1 // pred_check
      _
    $region43: #{forward.1} parent=1 // pred_check_branch
      %52 = sbr.rel (0) target = $region45
    $region44: #{forward.1} parent=1 // pred_region
      _
    $region45: #{forward.1} parent=1 // pred_fallthru
      _
    // Predicated region
    $region46: #{forward.1} parent=1 // pred_check
      _
    $region47: #{forward.1} parent=1 // pred_check_branch
      %54 = sbr.rel (0) target = $region49
    $region48: #{forward.1} parent=1 // pred_region
      _
    $region49: #{forward.1} parent=1 // pred_fallthru
      _
    // Predicated region
    $region50: #{forward.1} parent=1 // pred_check
      _
    $region51: #{forward.1} parent=1 // pred_check_branch
      %56 = sbr.rel (0) target = $region53
    $region52: #{forward.1} parent=1 // pred_region
      _
    $region53: #{forward.1} parent=1 // pred_fallthru
      _
    // Predicated region
    $region54: #{forward.1} parent=1 // pred_check
      _
    $region55: #{forward.1} parent=1 // pred_check_branch
      %58 = sbr.rel (0) target = $region57
    $region56: #{forward.1} parent=1 // pred_region
      _
    $region57: #{forward.1} parent=1 // pred_fallthru
      _
    // Predicated region
    $region58: #{forward.1} parent=1 // pred_check
      _
    $region59: #{forward.1} parent=1 // pred_check_branch
      %60 = sbr.rel (0) target = $region61
    $region60: #{forward.1} parent=1 // pred_region
      _
    $region61: #{forward.1} parent=1 // pred_fallthru
      _
    // Predicated region
    $region62: #{forward.1} parent=1 // pred_check
      _
    $region63: #{forward.1} parent=1 // pred_check_branch
      %62 = sbr.rel (0) target = $region65
    $region64: #{forward.1} parent=1 // pred_region
      _
    $region65: #{forward.1} parent=1 // pred_fallthru
      _
    // Predicated region
    $region66: #{forward.1} parent=1 // pred_check
      _
    $region67: #{forward.1} parent=1 // pred_check_branch
      %64 = sbr.rel (0) target = $region69
    $region68: #{forward.1} parent=1 // pred_region
      _
    $region69: #{forward.1} parent=1 // pred_fallthru
      _
    // Predicated region
    $region70: #{forward.1} parent=1 // pred_check
      _
    $region71: #{forward.1} parent=1 // pred_check_branch
      %66 = sbr.rel (0) target = $region73
    $region72: #{forward.1} parent=1 // pred_region
      _
    $region73: #{forward.1} parent=1 // pred_fallthru
      _
    // Predicated region
    $region74: #{forward.1} parent=1 // pred_check
      _
    $region75: #{forward.1} parent=1 // pred_check_branch
      %68 = sbr.rel (0) target = $region77
    $region76: #{forward.1} parent=1 // pred_region
      _
    $region77: #{forward.1} parent=1 // pred_fallthru
      _
    // Predicated region
    $region78: #{forward.1} parent=1 // pred_check
      _
    $region79: #{forward.1} parent=1 // pred_check_branch
      %70 = sbr.rel (0) target = $region81
    $region80: #{forward.1} parent=1 // pred_region
      _
    $region81: #{forward.1} parent=1 // pred_fallthru
      _
    // Predicated region
    $region82: #{forward.1} parent=1 // pred_check
      _
    $region83: #{forward.1} parent=1 // pred_check_branch
      %72 = sbr.rel (0) target = $region85
    $region84: #{forward.1} parent=1 // pred_region
      _
    $region85: #{forward.1} parent=1 // pred_fallthru
      _
    %v73 = vld [vmem:[%s2] sm:$0xff]
    %vm74 = vcmp.gt.f32.partialorder %v73, 0.0
    %v75 = vld [vmem:[%s3] sm:$0xff]
    %vm76 = vcmp.gt.f32.partialorder %v75, 0.0
    %v77 = vsel %vm74, 0.0, -1e+30
    %v78 = vsel %vm76, 0.0, -1e+30
    %v79 = vld [vmem:[%s0] sm:$0xff]
    %v80 = vld [vmem:[%s1] sm:$0xff]
    %v81 = vld [vmem:[%s5] sm:$0xff]
    %v82 = vld [vmem:[%s5 + $0x8] sm:$0xff]
    %v83 = vld [vmem:[%s5 + $0x10] sm:$0xff]
    %v84 = vld [vmem:[%s5 + $0x18] sm:$0xff]
    %v85 = vld [vmem:[%s6] sm:$0x1]
    %v87 = vlaneseq
    %v88 = vshrl.u32 %v87, 7
    %v89 = vsub.s32 0, %v88
    %v90 = vrot.slane %v85, %v89
    %vm92 = vcmask 261120
    %v94 = vsel %vm92, %v79, 0
    %v97 = vsel %vm92, %v80, 0
    %99 = vmatprep.subr.mxu0 0.0
    %100 = vmatpush1.msra.mxu0 0.0
    %101 = vmatprep.subr.mxu0 0.0
    %102 = vmatpush1.msra.mxu0 0.0
    %103 = vmatprep.subr.mxu0 0.0
    %104 = vmatpush1.msra.mxu0 0.0
    %105 = vmatprep.subr.mxu0 0.0
    %106 = vmatpush1.msra.mxu0 0.0
    %107 = vmatprep.subr.mxu0 0.0
    %108 = vmatpush1.msra.mxu0 0.0
    %109 = vmatprep.subr.mxu0 0.0
    %110 = vmatpush1.msra.mxu0 0.0
    %111 = vmatprep.subr.mxu0 0.0
    %112 = vmatpush1.msra.mxu0 0.0
    %113 = vmatprep.subr.mxu0 0.0
    %114 = vmatpush1.msra.mxu0 0.0
    %115 = vmatprep.subr.mxu0 0.0
    %116 = vmatpush1.msra.mxu0 0.0
    %117 = vmatprep.subr.mxu0 0.0
    %118 = vmatpush1.msra.mxu0 0.0
    %119 = vmatprep.subr.mxu0 0.0
    %120 = vmatpush1.msra.mxu0 0.0
    %121 = vmatprep.subr.mxu0 0.0
    %122 = vmatpush1.msra.mxu0 0.0
    %123 = vmatprep.subr.mxu0 0.0
    %124 = vmatpush1.msra.mxu0 %v84
    %125 = vmatprep.subr.mxu0 0.0
    %126 = vmatpush1.msra.mxu0 %v83
    %127 = vmatprep.subr.mxu0 0.0
    %128 = vmatpush1.msra.mxu0 %v82
    %129 = vmatprep.subr.mxu0 0.0
    %130 = vmatpush1.msra.mxu0 %v81
    %131 = vmatprep.subr.mxu0 0.0
    %132 = vmatpush2.msra.mxu0 0.0
    %133 = vmatprep.subr.mxu0 0.0
    %134 = vmatpush2.msra.mxu0 0.0
    %135 = vmatprep.subr.mxu0 0.0
    %136 = vmatpush2.msra.mxu0 0.0
    %137 = vmatprep.subr.mxu0 0.0
    %138 = vmatpush2.msra.mxu0 0.0
    %139 = vmatprep.subr.mxu0 0.0
    %140 = vmatpush2.msra.mxu0 0.0
    %141 = vmatprep.subr.mxu0 0.0
    %142 = vmatpush2.msra.mxu0 0.0
    %143 = vmatprep.subr.mxu0 0.0
    %144 = vmatpush2.msra.mxu0 0.0
    %145 = vmatprep.subr.mxu0 0.0
    %146 = vmatpush2.msra.mxu0 0.0
    %147 = vmatprep.subr.mxu0 0.0
    %148 = vmatpush2.msra.mxu0 0.0
    %149 = vmatprep.subr.mxu0 0.0
    %150 = vmatpush2.msra.mxu0 0.0
    %151 = vmatprep.subr.mxu0 0.0
    %152 = vmatpush2.msra.mxu0 0.0
    %153 = vmatprep.subr.mxu0 0.0
    %154 = vmatpush2.msra.mxu0 0.0
    %155 = vmatprep.subr.mxu0 0.0
    %156 = vmatpush2.msra.mxu0 0.0
    %157 = vmatprep.subr.mxu0 0.0
    %158 = vmatpush2.msra.mxu0 0.0
    %159 = vmatprep.subr.mxu0 0.0
    %160 = vmatpush2.msra.mxu0 0.0
    %161 = vmatprep.subr.mxu0 0.0
    %162 = vmatpush2.msra.mxu0 0.0
    %163 = vmatprep.mubr.f32.mxu0 0.0
    %164 = vmatmul.mubr.f32.gmra.mxu0 %v94
    %v165 = vpop.f32.mrf.mxu0
    %v166 = vadd.f32 %v90, %v165
    %v167 = vpop.f32.mrf.mxu0
    %168 = vmatprep.mubr.f32.mxu0 0.0
    %169 = vmatmul.mubr.f32.gmra.mxu0 %v97
    %v170 = vpop.f32.mrf.mxu0
    %v171 = vadd.f32 %v90, %v170
    %v172 = vpop.f32.mrf.mxu0
    %173 = vdwg.mxu0
    %v174 = vld [vmem:[%s7] sm:$0xff]
    %v175 = vld [vmem:[%s7 + $0x8] sm:$0xff]
    %v176 = vld [vmem:[%s7 + $0x10] sm:$0xff]
    %v177 = vld [vmem:[%s7 + $0x18] sm:$0xff]
    %v179 = vsel %vm92, %v166, 0
    %v182 = vsel %vm92, %v171, 0
    %184 = vmatprep.subr.mxu0 0.0
    %185 = vmatpush1.msra.mxu0 0.0
    %186 = vmatprep.subr.mxu0 0.0
    %187 = vmatpush1.msra.mxu0 0.0
    %188 = vmatprep.subr.mxu0 0.0
    %189 = vmatpush1.msra.mxu0 0.0
    %190 = vmatprep.subr.mxu0 0.0
    %191 = vmatpush1.msra.mxu0 0.0
    %192 = vmatprep.subr.mxu0 0.0
    %193 = vmatpush1.msra.mxu0 0.0
    %194 = vmatprep.subr.mxu0 0.0
    %195 = vmatpush1.msra.mxu0 0.0
    %196 = vmatprep.subr.mxu0 0.0
    %197 = vmatpush1.msra.mxu0 0.0
    %198 = vmatprep.subr.mxu0 0.0
    %199 = vmatpush1.msra.mxu0 0.0
    %200 = vmatprep.subr.mxu0 0.0
    %201 = vmatpush1.msra.mxu0 0.0
    %202 = vmatprep.subr.mxu0 0.0
    %203 = vmatpush1.msra.mxu0 0.0
    %204 = vmatprep.subr.mxu0 0.0
    %205 = vmatpush1.msra.mxu0 0.0
    %206 = vmatprep.subr.mxu0 0.0
    %207 = vmatpush1.msra.mxu0 0.0
    %208 = vmatprep.subr.mxu0 0.0
    %209 = vmatpush1.msra.mxu0 %v177
    %210 = vmatprep.subr.mxu0 0.0
    %211 = vmatpush1.msra.mxu0 %v176
    %212 = vmatprep.subr.mxu0 0.0
    %213 = vmatpush1.msra.mxu0 %v175
    %214 = vmatprep.subr.mxu0 0.0
    %215 = vmatpush1.msra.mxu0 %v174
    %216 = vmatprep.subr.mxu0 0.0
    %217 = vmatpush2.msra.mxu0 0.0
    %218 = vmatprep.subr.mxu0 0.0
    %219 = vmatpush2.msra.mxu0 0.0
    %220 = vmatprep.subr.mxu0 0.0
    %221 = vmatpush2.msra.mxu0 0.0
    %222 = vmatprep.subr.mxu0 0.0
    %223 = vmatpush2.msra.mxu0 0.0
    %224 = vmatprep.subr.mxu0 0.0
    %225 = vmatpush2.msra.mxu0 0.0
    %226 = vmatprep.subr.mxu0 0.0
    %227 = vmatpush2.msra.mxu0 0.0
    %228 = vmatprep.subr.mxu0 0.0
    %229 = vmatpush2.msra.mxu0 0.0
    %230 = vmatprep.subr.mxu0 0.0
    %231 = vmatpush2.msra.mxu0 0.0
    %232 = vmatprep.subr.mxu0 0.0
    %233 = vmatpush2.msra.mxu0 0.0
    %234 = vmatprep.subr.mxu0 0.0
    %235 = vmatpush2.msra.mxu0 0.0
    %236 = vmatprep.subr.mxu0 0.0
    %237 = vmatpush2.msra.mxu0 0.0
    %238 = vmatprep.subr.mxu0 0.0
    %239 = vmatpush2.msra.mxu0 0.0
    %240 = vmatprep.subr.mxu0 0.0
    %241 = vmatpush2.msra.mxu0 0.0
    %242 = vmatprep.subr.mxu0 0.0
    %243 = vmatpush2.msra.mxu0 0.0
    %244 = vmatprep.subr.mxu0 0.0
    %245 = vmatpush2.msra.mxu0 0.0
    %246 = vmatprep.subr.mxu0 0.0
    %247 = vmatpush2.msra.mxu0 0.0
    %248 = vmatprep.mubr.f32.mxu0 0.0
    %249 = vmatmul.mubr.f32.gmra.mxu0 %v179
    %v250 = vpop.f32.mrf.mxu0
    %v251 = vadd.f32 0.0, %v250
    %v252 = vpop.f32.mrf.mxu0
    %253 = vmatprep.mubr.f32.mxu0 0.0
    %254 = vmatmul.mubr.f32.gmra.mxu0 %v182
    %v255 = vpop.f32.mrf.mxu0
    %v256 = vadd.f32 0.0, %v255
    %v257 = vpop.f32.mrf.mxu0
    %258 = vdwg.mxu0
    %v259 = vld [vmem:[%s8] sm:$0xff]
    %v260 = vld [vmem:[%s8 + $0x8] sm:$0xff]
    %v261 = vld [vmem:[%s8 + $0x10] sm:$0xff]
    %v262 = vld [vmem:[%s8 + $0x18] sm:$0xff]
    %v263 = vld [vmem:[%s9] sm:$0xff]
    %v264 = vld [vmem:[%s9 + $0x8] sm:$0xff]
    %v265 = vld [vmem:[%s9 + $0x10] sm:$0xff]
    %v266 = vld [vmem:[%s9 + $0x18] sm:$0xff]
    %v268 = vsel %vm92, %v251, 0
    %v271 = vsel %vm92, %v256, 0
    %273 = vmatprep.subr.mxu0 0.0
    %274 = vmatpush1.msra.mxu0 0.0
    %275 = vmatprep.subr.mxu0 0.0
    %276 = vmatpush1.msra.mxu0 0.0
    %277 = vmatprep.subr.mxu0 0.0
    %278 = vmatpush1.msra.mxu0 0.0
    %279 = vmatprep.subr.mxu0 0.0
    %280 = vmatpush1.msra.mxu0 0.0
    %281 = vmatprep.subr.mxu0 0.0
    %282 = vmatpush1.msra.mxu0 0.0
    %283 = vmatprep.subr.mxu0 0.0
    %284 = vmatpush1.msra.mxu0 0.0
    %285 = vmatprep.subr.mxu0 0.0
    %286 = vmatpush1.msra.mxu0 0.0
    %287 = vmatprep.subr.mxu0 0.0
    %288 = vmatpush1.msra.mxu0 0.0
    %289 = vmatprep.subr.mxu0 0.0
    %290 = vmatpush1.msra.mxu0 0.0
    %291 = vmatprep.subr.mxu0 0.0
    %292 = vmatpush1.msra.mxu0 0.0
    %293 = vmatprep.subr.mxu0 0.0
    %294 = vmatpush1.msra.mxu0 0.0
    %295 = vmatprep.subr.mxu0 0.0
    %296 = vmatpush1.msra.mxu0 0.0
    %297 = vmatprep.subr.mxu0 0.0
    %298 = vmatpush1.msra.mxu0 %v262
    %299 = vmatprep.subr.mxu0 0.0
    %300 = vmatpush1.msra.mxu0 %v261
    %301 = vmatprep.subr.mxu0 0.0
    %302 = vmatpush1.msra.mxu0 %v260
    %303 = vmatprep.subr.mxu0 0.0
    %304 = vmatpush1.msra.mxu0 %v259
    %305 = vmatprep.subr.mxu0 0.0
    %306 = vmatpush2.msra.mxu0 0.0
    %307 = vmatprep.subr.mxu0 0.0
    %308 = vmatpush2.msra.mxu0 0.0
    %309 = vmatprep.subr.mxu0 0.0
    %310 = vmatpush2.msra.mxu0 0.0
    %311 = vmatprep.subr.mxu0 0.0
    %312 = vmatpush2.msra.mxu0 0.0
    %313 = vmatprep.subr.mxu0 0.0
    %314 = vmatpush2.msra.mxu0 0.0
    %315 = vmatprep.subr.mxu0 0.0
    %316 = vmatpush2.msra.mxu0 0.0
    %317 = vmatprep.subr.mxu0 0.0
    %318 = vmatpush2.msra.mxu0 0.0
    %319 = vmatprep.subr.mxu0 0.0
    %320 = vmatpush2.msra.mxu0 0.0
    %321 = vmatprep.subr.mxu0 0.0
    %322 = vmatpush2.msra.mxu0 0.0
    %323 = vmatprep.subr.mxu0 0.0
    %324 = vmatpush2.msra.mxu0 0.0
    %325 = vmatprep.subr.mxu0 0.0
    %326 = vmatpush2.msra.mxu0 0.0
    %327 = vmatprep.subr.mxu0 0.0
    %328 = vmatpush2.msra.mxu0 0.0
    %329 = vmatprep.subr.mxu0 0.0
    %330 = vmatpush2.msra.mxu0 0.0
    %331 = vmatprep.subr.mxu0 0.0
    %332 = vmatpush2.msra.mxu0 0.0
    %333 = vmatprep.subr.mxu0 0.0
    %334 = vmatpush2.msra.mxu0 0.0
    %335 = vmatprep.subr.mxu0 0.0
    %336 = vmatpush2.msra.mxu0 0.0
    %337 = vmatprep.mubr.f32.mxu0 0.0
    %338 = vmatmul.mubr.f32.gmra.mxu0 %v268
    %v339 = vpop.f32.mrf.mxu0
    %v340 = vadd.f32 0.0, %v339
    %v341 = vpop.f32.mrf.mxu0
    %342 = vmatprep.mubr.f32.mxu0 0.0
    %343 = vmatmul.mubr.f32.gmra.mxu0 %v271
    %v344 = vpop.f32.mrf.mxu0
    %v345 = vadd.f32 0.0, %v344
    %v346 = vpop.f32.mrf.mxu0
    %347 = vdwg.mxu0
    %348 = vmatprep.subr.mxu0 0.0
    %349 = vmatpush1.msra.mxu0 0.0
    %350 = vmatprep.subr.mxu0 0.0
    %351 = vmatpush1.msra.mxu0 0.0
    %352 = vmatprep.subr.mxu0 0.0
    %353 = vmatpush1.msra.mxu0 0.0
    %354 = vmatprep.subr.mxu0 0.0
    %355 = vmatpush1.msra.mxu0 0.0
    %356 = vmatprep.subr.mxu0 0.0
    %357 = vmatpush1.msra.mxu0 0.0
    %358 = vmatprep.subr.mxu0 0.0
    %359 = vmatpush1.msra.mxu0 0.0
    %360 = vmatprep.subr.mxu0 0.0
    %361 = vmatpush1.msra.mxu0 0.0
    %362 = vmatprep.subr.mxu0 0.0
    %363 = vmatpush1.msra.mxu0 0.0
    %364 = vmatprep.subr.mxu0 0.0
    %365 = vmatpush1.msra.mxu0 0.0
    %366 = vmatprep.subr.mxu0 0.0
    %367 = vmatpush1.msra.mxu0 0.0
    %368 = vmatprep.subr.mxu0 0.0
    %369 = vmatpush1.msra.mxu0 0.0
    %370 = vmatprep.subr.mxu0 0.0
    %371 = vmatpush1.msra.mxu0 0.0
    %372 = vmatprep.subr.mxu0 0.0
    %373 = vmatpush1.msra.mxu0 %v266
    %374 = vmatprep.subr.mxu0 0.0
    %375 = vmatpush1.msra.mxu0 %v265
    %376 = vmatprep.subr.mxu0 0.0
    %377 = vmatpush1.msra.mxu0 %v264
    %378 = vmatprep.subr.mxu0 0.0
    %379 = vmatpush1.msra.mxu0 %v263
    %380 = vmatprep.subr.mxu0 0.0
    %381 = vmatpush2.msra.mxu0 0.0
    %382 = vmatprep.subr.mxu0 0.0
    %383 = vmatpush2.msra.mxu0 0.0
    %384 = vmatprep.subr.mxu0 0.0
    %385 = vmatpush2.msra.mxu0 0.0
    %386 = vmatprep.subr.mxu0 0.0
    %387 = vmatpush2.msra.mxu0 0.0
    %388 = vmatprep.subr.mxu0 0.0
    %389 = vmatpush2.msra.mxu0 0.0
    %390 = vmatprep.subr.mxu0 0.0
    %391 = vmatpush2.msra.mxu0 0.0
    %392 = vmatprep.subr.mxu0 0.0
    %393 = vmatpush2.msra.mxu0 0.0
    %394 = vmatprep.subr.mxu0 0.0
    %395 = vmatpush2.msra.mxu0 0.0
    %396 = vmatprep.subr.mxu0 0.0
    %397 = vmatpush2.msra.mxu0 0.0
    %398 = vmatprep.subr.mxu0 0.0
    %399 = vmatpush2.msra.mxu0 0.0
    %400 = vmatprep.subr.mxu0 0.0
    %401 = vmatpush2.msra.mxu0 0.0
    %402 = vmatprep.subr.mxu0 0.0
    %403 = vmatpush2.msra.mxu0 0.0
    %404 = vmatprep.subr.mxu0 0.0
    %405 = vmatpush2.msra.mxu0 0.0
    %406 = vmatprep.subr.mxu0 0.0
    %407 = vmatpush2.msra.mxu0 0.0
    %408 = vmatprep.subr.mxu0 0.0
    %409 = vmatpush2.msra.mxu0 0.0
    %410 = vmatprep.subr.mxu0 0.0
    %411 = vmatpush2.msra.mxu0 0.0
    %412 = vmatprep.mubr.f32.mxu0 0.0
    %413 = vmatmul.mubr.f32.gmra.mxu0 %v268
    %v414 = vpop.f32.mrf.mxu0
    %v415 = vadd.f32 0.0, %v414
    %v416 = vpop.f32.mrf.mxu0
    %417 = vmatprep.mubr.f32.mxu0 0.0
    %418 = vmatmul.mubr.f32.gmra.mxu0 %v271
    %v419 = vpop.f32.mrf.mxu0
    %v420 = vadd.f32 0.0, %v419
    %v421 = vpop.f32.mrf.mxu0
    %422 = vdwg.mxu0
    %423 = vxpose.xlu0.b32.start [1/16] %v340, 128
    %424 = vxpose.xlu0.b32.cont [2/16] 0.0, 128
    %425 = vxpose.xlu0.b32.cont [3/16] 0.0, 128
    %426 = vxpose.xlu0.b32.cont [4/16] 0.0, 128
    %427 = vxpose.xlu0.b32.cont [5/16] 0.0, 128
    %428 = vxpose.xlu0.b32.cont [6/16] 0.0, 128
    %429 = vxpose.xlu0.b32.cont [7/16] 0.0, 128
    %430 = vxpose.xlu0.b32.cont [8/16] 0.0, 128
    %431 = vxpose.xlu0.b32.cont [9/16] 0.0, 128
    %432 = vxpose.xlu0.b32.cont [10/16] 0.0, 128
    %433 = vxpose.xlu0.b32.cont [11/16] 0.0, 128
    %434 = vxpose.xlu0.b32.cont [12/16] 0.0, 128
    %435 = vxpose.xlu0.b32.cont [13/16] 0.0, 128
    %436 = vxpose.xlu0.b32.cont [14/16] 0.0, 128
    %437 = vxpose.xlu0.b32.cont [15/16] 0.0, 128
    %438 = vxpose.xlu0.b32.end [16/16] 0.0, 128
    %v439 = vpop.trf.xlu0
    %v440 = vpop.trf.xlu0
    %v441 = vpop.trf.xlu0
    %v442 = vpop.trf.xlu0
    %v443 = vpop.trf.xlu0
    %v444 = vpop.trf.xlu0
    %v445 = vpop.trf.xlu0
    %v446 = vpop.trf.xlu0
    %v447 = vpop.trf.xlu0
    %v448 = vpop.trf.xlu0
    %v449 = vpop.trf.xlu0
    %v450 = vpop.trf.xlu0
    %v451 = vpop.trf.xlu0
    %v452 = vpop.trf.xlu0
    %v453 = vpop.trf.xlu0
    %v454 = vpop.trf.xlu0
    %456 = vset.pattern.permute.xlu0 0
    %457 = vperm.xlu0 %456, %v415
    %v458 = vpop.permute.xlu0 %457
    %v460 = vlaneseq
    %v461 = vshrl.u32 %v460, 7
    %v462 = vsub.s32 0, %v461
    %v463 = vrot.slane %v439, %v462
    %v464 = vadd.f32 %v458, %v463
    %vm465 = vcmp.gt.f32.partialorder %v464, 0.0
    %v466 = vmul.f32 %v464, 0.2
    %v467 = vsel %vm465, %v464, %v466
    %v468 = vadd.f32 %v467, %v77
    %vm469 = vcmask 64512
    %v470 = vsel %vm469, %v468, -inf
    %471 = vmax.xlane.f32.xlu0 %v470
    %v472 = vpop.xlane.xlu0 %471
    %v473 = vsub.f32 %v468, %v472
    %v474 = vmul.f32 %v473, 1.442695
    %v475 = vpow.pop %v474
    %v476 = vsel %vm74, %v475, 0.0
    %v477 = vsel %vm469, %v476, 0.0
    %478 = vadd.xlane.f32.xlu0 %v477
    %v479 = vpop.xlane.xlu0 %478
    %v480 = vrcp.pop %v479
    %v481 = vmul.f32 %v476, %v480
    %v483 = vsel %vm469, %v481, 0
    %485 = vmatprep.subr.mxu0 0.0
    %486 = vmatpush1.msra.mxu0 0.0
    %487 = vmatprep.subr.mxu0 0.0
    %488 = vmatpush1.msra.mxu0 0.0
    %489 = vmatprep.subr.mxu0 0.0
    %490 = vmatpush1.msra.mxu0 0.0
    %491 = vmatprep.subr.mxu0 0.0
    %492 = vmatpush1.msra.mxu0 0.0
    %493 = vmatprep.subr.mxu0 0.0
    %494 = vmatpush1.msra.mxu0 0.0
    %495 = vmatprep.subr.mxu0 0.0
    %496 = vmatpush1.msra.mxu0 0.0
    %497 = vmatprep.subr.mxu0 0.0
    %498 = vmatpush1.msra.mxu0 0.0
    %499 = vmatprep.subr.mxu0 0.0
    %500 = vmatpush1.msra.mxu0 0.0
    %501 = vmatprep.subr.mxu0 0.0
    %502 = vmatpush1.msra.mxu0 0.0
    %503 = vmatprep.subr.mxu0 0.0
    %504 = vmatpush1.msra.mxu0 0.0
    %505 = vmatprep.subr.mxu0 0.0
    %506 = vmatpush1.msra.mxu0 0.0
    %507 = vmatprep.subr.mxu0 0.0
    %508 = vmatpush1.msra.mxu0 0.0
    %509 = vmatprep.subr.mxu0 0.0
    %510 = vmatpush1.msra.mxu0 0.0
    %511 = vmatprep.subr.mxu0 0.0
    %512 = vmatpush1.msra.mxu0 0.0
    %513 = vmatprep.subr.mxu0 0.0
    %514 = vmatpush1.msra.mxu0 0.0
    %515 = vmatprep.subr.mxu0 0.0
    %516 = vmatpush1.msra.mxu0 %v251
    %517 = vmatprep.subr.mxu0 0.0
    %518 = vmatpush2.msra.mxu0 0.0
    %519 = vmatprep.subr.mxu0 0.0
    %520 = vmatpush2.msra.mxu0 0.0
    %521 = vmatprep.subr.mxu0 0.0
    %522 = vmatpush2.msra.mxu0 0.0
    %523 = vmatprep.subr.mxu0 0.0
    %524 = vmatpush2.msra.mxu0 0.0
    %525 = vmatprep.subr.mxu0 0.0
    %526 = vmatpush2.msra.mxu0 0.0
    %527 = vmatprep.subr.mxu0 0.0
    %528 = vmatpush2.msra.mxu0 0.0
    %529 = vmatprep.subr.mxu0 0.0
    %530 = vmatpush2.msra.mxu0 0.0
    %531 = vmatprep.subr.mxu0 0.0
    %532 = vmatpush2.msra.mxu0 0.0
    %533 = vmatprep.subr.mxu0 0.0
    %534 = vmatpush2.msra.mxu0 0.0
    %535 = vmatprep.subr.mxu0 0.0
    %536 = vmatpush2.msra.mxu0 0.0
    %537 = vmatprep.subr.mxu0 0.0
    %538 = vmatpush2.msra.mxu0 0.0
    %539 = vmatprep.subr.mxu0 0.0
    %540 = vmatpush2.msra.mxu0 0.0
    %541 = vmatprep.subr.mxu0 0.0
    %542 = vmatpush2.msra.mxu0 0.0
    %543 = vmatprep.subr.mxu0 0.0
    %544 = vmatpush2.msra.mxu0 0.0
    %545 = vmatprep.subr.mxu0 0.0
    %546 = vmatpush2.msra.mxu0 0.0
    %547 = vmatprep.subr.mxu0 0.0
    %548 = vmatpush2.msra.mxu0 0.0
    %549 = vmatprep.mubr.f32.mxu0 0.0
    %550 = vmatmul.mubr.f32.gmra.mxu0 %v483
    %v551 = vpop.f32.mrf.mxu0
    %v552 = vadd.f32 0.0, %v551
    %v553 = vpop.f32.mrf.mxu0
    %554 = vdwg.mxu0
    %555 = vxpose.xlu0.b32.start [1/16] %v345, 128
    %556 = vxpose.xlu0.b32.cont [2/16] 0.0, 128
    %557 = vxpose.xlu0.b32.cont [3/16] 0.0, 128
    %558 = vxpose.xlu0.b32.cont [4/16] 0.0, 128
    %559 = vxpose.xlu0.b32.cont [5/16] 0.0, 128
    %560 = vxpose.xlu0.b32.cont [6/16] 0.0, 128
    %561 = vxpose.xlu0.b32.cont [7/16] 0.0, 128
    %562 = vxpose.xlu0.b32.cont [8/16] 0.0, 128
    %563 = vxpose.xlu0.b32.cont [9/16] 0.0, 128
    %564 = vxpose.xlu0.b32.cont [10/16] 0.0, 128
    %565 = vxpose.xlu0.b32.cont [11/16] 0.0, 128
    %566 = vxpose.xlu0.b32.cont [12/16] 0.0, 128
    %567 = vxpose.xlu0.b32.cont [13/16] 0.0, 128
    %568 = vxpose.xlu0.b32.cont [14/16] 0.0, 128
    %569 = vxpose.xlu0.b32.cont [15/16] 0.0, 128
    %570 = vxpose.xlu0.b32.end [16/16] 0.0, 128
    %v571 = vpop.trf.xlu0
    %v572 = vpop.trf.xlu0
    %v573 = vpop.trf.xlu0
    %v574 = vpop.trf.xlu0
    %v575 = vpop.trf.xlu0
    %v576 = vpop.trf.xlu0
    %v577 = vpop.trf.xlu0
    %v578 = vpop.trf.xlu0
    %v579 = vpop.trf.xlu0
    %v580 = vpop.trf.xlu0
    %v581 = vpop.trf.xlu0
    %v582 = vpop.trf.xlu0
    %v583 = vpop.trf.xlu0
    %v584 = vpop.trf.xlu0
    %v585 = vpop.trf.xlu0
    %v586 = vpop.trf.xlu0
    %588 = vset.pattern.permute.xlu0 0
    %589 = vperm.xlu0 %588, %v420
    %v590 = vpop.permute.xlu0 %589
    %v592 = vlaneseq
    %v593 = vshrl.u32 %v592, 7
    %v594 = vsub.s32 0, %v593
    %v595 = vrot.slane %v571, %v594
    %v596 = vadd.f32 %v590, %v595
    %vm597 = vcmp.gt.f32.partialorder %v596, 0.0
    %v598 = vmul.f32 %v596, 0.2
    %v599 = vsel %vm597, %v596, %v598
    %v600 = vadd.f32 %v599, %v78
    %v601 = vsel %vm469, %v600, -inf
    %602 = vmax.xlane.f32.xlu0 %v601
    %v603 = vpop.xlane.xlu0 %602
    %v604 = vsub.f32 %v600, %v603
    %v605 = vmul.f32 %v604, 1.442695
    %v606 = vpow.pop %v605
    %v607 = vsel %vm76, %v606, 0.0
    %v608 = vsel %vm469, %v607, 0.0
    %609 = vadd.xlane.f32.xlu0 %v608
    %v610 = vpop.xlane.xlu0 %609
    %v611 = vrcp.pop %v610
    %v612 = vmul.f32 %v607, %v611
    %v614 = vsel %vm469, %v612, 0
    %616 = vmatprep.subr.mxu0 0.0
    %617 = vmatpush1.msra.mxu0 0.0
    %618 = vmatprep.subr.mxu0 0.0
    %619 = vmatpush1.msra.mxu0 0.0
    %620 = vmatprep.subr.mxu0 0.0
    %621 = vmatpush1.msra.mxu0 0.0
    %622 = vmatprep.subr.mxu0 0.0
    %623 = vmatpush1.msra.mxu0 0.0
    %624 = vmatprep.subr.mxu0 0.0
    %625 = vmatpush1.msra.mxu0 0.0
    %626 = vmatprep.subr.mxu0 0.0
    %627 = vmatpush1.msra.mxu0 0.0
    %628 = vmatprep.subr.mxu0 0.0
    %629 = vmatpush1.msra.mxu0 0.0
    %630 = vmatprep.subr.mxu0 0.0
    %631 = vmatpush1.msra.mxu0 0.0
    %632 = vmatprep.subr.mxu0 0.0
    %633 = vmatpush1.msra.mxu0 0.0
    %634 = vmatprep.subr.mxu0 0.0
    %635 = vmatpush1.msra.mxu0 0.0
    %636 = vmatprep.subr.mxu0 0.0
    %637 = vmatpush1.msra.mxu0 0.0
    %638 = vmatprep.subr.mxu0 0.0
    %639 = vmatpush1.msra.mxu0 0.0
    %640 = vmatprep.subr.mxu0 0.0
    %641 = vmatpush1.msra.mxu0 0.0
    %642 = vmatprep.subr.mxu0 0.0
    %643 = vmatpush1.msra.mxu0 0.0
    %644 = vmatprep.subr.mxu0 0.0
    %645 = vmatpush1.msra.mxu0 0.0
    %646 = vmatprep.subr.mxu0 0.0
    %647 = vmatpush1.msra.mxu0 %v256
    %648 = vmatprep.subr.mxu0 0.0
    %649 = vmatpush2.msra.mxu0 0.0
    %650 = vmatprep.subr.mxu0 0.0
    %651 = vmatpush2.msra.mxu0 0.0
    %652 = vmatprep.subr.mxu0 0.0
    %653 = vmatpush2.msra.mxu0 0.0
    %654 = vmatprep.subr.mxu0 0.0
    %655 = vmatpush2.msra.mxu0 0.0
    %656 = vmatprep.subr.mxu0 0.0
    %657 = vmatpush2.msra.mxu0 0.0
    %658 = vmatprep.subr.mxu0 0.0
    %659 = vmatpush2.msra.mxu0 0.0
    %660 = vmatprep.subr.mxu0 0.0
    %661 = vmatpush2.msra.mxu0 0.0
    %662 = vmatprep.subr.mxu0 0.0
    %663 = vmatpush2.msra.mxu0 0.0
    %664 = vmatprep.subr.mxu0 0.0
    %665 = vmatpush2.msra.mxu0 0.0
    %666 = vmatprep.subr.mxu0 0.0
    %667 = vmatpush2.msra.mxu0 0.0
    %668 = vmatprep.subr.mxu0 0.0
    %669 = vmatpush2.msra.mxu0 0.0
    %670 = vmatprep.subr.mxu0 0.0
    %671 = vmatpush2.msra.mxu0 0.0
    %672 = vmatprep.subr.mxu0 0.0
    %673 = vmatpush2.msra.mxu0 0.0
    %674 = vmatprep.subr.mxu0 0.0
    %675 = vmatpush2.msra.mxu0 0.0
    %676 = vmatprep.subr.mxu0 0.0
    %677 = vmatpush2.msra.mxu0 0.0
    %678 = vmatprep.subr.mxu0 0.0
    %679 = vmatpush2.msra.mxu0 0.0
    %680 = vmatprep.mubr.f32.mxu0 0.0
    %681 = vmatmul.mubr.f32.gmra.mxu0 %v614
    %v682 = vpop.f32.mrf.mxu0
    %v683 = vadd.f32 0.0, %v682
    %v684 = vpop.f32.mrf.mxu0
    %685 = vdwg.mxu0
    %v686 = vld [vmem:[%s10] sm:$0x1]
    %v688 = vlaneseq
    %v689 = vshrl.u32 %v688, 7
    %v690 = vsub.s32 0, %v689
    %v691 = vrot.slane %v686, %v690
    %v693 = vadd.f32 %v552, %v691
    %v694 = vadd.f32 %v683, %v691
    %vm695 = vcmp.gt.f32.partialorder %v693, 0.0
    %vm696 = vcmp.gt.f32.partialorder %v694, 0.0
    %v697 = vmul.f32 %v693, 0.01
    %v698 = vmul.f32 %v694, 0.01
    %v699 = vsel %vm695, %v693, %v697
    %v700 = vsel %vm696, %v694, %v698
    %s701 = scalar_lea.vmem %s7, 32
    %v702 = vld [vmem:[%s701] sm:$0xff]
    %v703 = vld [vmem:[%s701 + $0x8] sm:$0xff]
    %v704 = vld [vmem:[%s701 + $0x10] sm:$0xff]
    %v705 = vld [vmem:[%s701 + $0x18] sm:$0xff]
    %706 = vmatprep.subr.mxu0 0.0
    %707 = vmatpush1.msra.mxu0 0.0
    %708 = vmatprep.subr.mxu0 0.0
    %709 = vmatpush1.msra.mxu0 0.0
    %710 = vmatprep.subr.mxu0 0.0
    %711 = vmatpush1.msra.mxu0 0.0
    %712 = vmatprep.subr.mxu0 0.0
    %713 = vmatpush1.msra.mxu0 0.0
    %714 = vmatprep.subr.mxu0 0.0
    %715 = vmatpush1.msra.mxu0 0.0
    %716 = vmatprep.subr.mxu0 0.0
    %717 = vmatpush1.msra.mxu0 0.0
    %718 = vmatprep.subr.mxu0 0.0
    %719 = vmatpush1.msra.mxu0 0.0
    %720 = vmatprep.subr.mxu0 0.0
    %721 = vmatpush1.msra.mxu0 0.0
    %722 = vmatprep.subr.mxu0 0.0
    %723 = vmatpush1.msra.mxu0 0.0
    %724 = vmatprep.subr.mxu0 0.0
    %725 = vmatpush1.msra.mxu0 0.0
    %726 = vmatprep.subr.mxu0 0.0
    %727 = vmatpush1.msra.mxu0 0.0
    %728 = vmatprep.subr.mxu0 0.0
    %729 = vmatpush1.msra.mxu0 0.0
    %730 = vmatprep.subr.mxu0 0.0
    %731 = vmatpush1.msra.mxu0 %v705
    %732 = vmatprep.subr.mxu0 0.0
    %733 = vmatpush1.msra.mxu0 %v704
    %734 = vmatprep.subr.mxu0 0.0
    %735 = vmatpush1.msra.mxu0 %v703
    %736 = vmatprep.subr.mxu0 0.0
    %737 = vmatpush1.msra.mxu0 %v702
    %738 = vmatprep.subr.mxu0 0.0
    %739 = vmatpush2.msra.mxu0 0.0
    %740 = vmatprep.subr.mxu0 0.0
    %741 = vmatpush2.msra.mxu0 0.0
    %742 = vmatprep.subr.mxu0 0.0
    %743 = vmatpush2.msra.mxu0 0.0
    %744 = vmatprep.subr.mxu0 0.0
    %745 = vmatpush2.msra.mxu0 0.0
    %746 = vmatprep.subr.mxu0 0.0
    %747 = vmatpush2.msra.mxu0 0.0
    %748 = vmatprep.subr.mxu0 0.0
    %749 = vmatpush2.msra.mxu0 0.0
    %750 = vmatprep.subr.mxu0 0.0
    %751 = vmatpush2.msra.mxu0 0.0
    %752 = vmatprep.subr.mxu0 0.0
    %753 = vmatpush2.msra.mxu0 0.0
    %754 = vmatprep.subr.mxu0 0.0
    %755 = vmatpush2.msra.mxu0 0.0
    %756 = vmatprep.subr.mxu0 0.0
    %757 = vmatpush2.msra.mxu0 0.0
    %758 = vmatprep.subr.mxu0 0.0
    %759 = vmatpush2.msra.mxu0 0.0
    %760 = vmatprep.subr.mxu0 0.0
    %761 = vmatpush2.msra.mxu0 0.0
    %762 = vmatprep.subr.mxu0 0.0
    %763 = vmatpush2.msra.mxu0 0.0
    %764 = vmatprep.subr.mxu0 0.0
    %765 = vmatpush2.msra.mxu0 0.0
    %766 = vmatprep.subr.mxu0 0.0
    %767 = vmatpush2.msra.mxu0 0.0
    %768 = vmatprep.subr.mxu0 0.0
    %769 = vmatpush2.msra.mxu0 0.0
    %770 = vmatprep.mubr.f32.mxu0 0.0
    %771 = vmatmul.mubr.f32.gmra.mxu0 %v179
    %v772 = vpop.f32.mrf.mxu0
    %v773 = vadd.f32 0.0, %v772
    %v774 = vpop.f32.mrf.mxu0
    %775 = vmatprep.mubr.f32.mxu0 0.0
    %776 = vmatmul.mubr.f32.gmra.mxu0 %v182
    %v777 = vpop.f32.mrf.mxu0
    %v778 = vadd.f32 0.0, %v777
    %v779 = vpop.f32.mrf.mxu0
    %780 = vdwg.mxu0
    %s781 = scalar_lea.vmem %s8, 32
    %v782 = vld [vmem:[%s781] sm:$0xff]
    %v783 = vld [vmem:[%s781 + $0x8] sm:$0xff]
    %v784 = vld [vmem:[%s781 + $0x10] sm:$0xff]
    %v785 = vld [vmem:[%s781 + $0x18] sm:$0xff]
    %s786 = scalar_lea.vmem %s9, 32
    %v787 = vld [vmem:[%s786] sm:$0xff]
    %v788 = vld [vmem:[%s786 + $0x8] sm:$0xff]
    %v789 = vld [vmem:[%s786 + $0x10] sm:$0xff]
    %v790 = vld [vmem:[%s786 + $0x18] sm:$0xff]
    %v792 = vsel %vm92, %v773, 0
    %v795 = vsel %vm92, %v778, 0
    %797 = vmatprep.subr.mxu0 0.0
    %798 = vmatpush1.msra.mxu0 0.0
    %799 = vmatprep.subr.mxu0 0.0
    %800 = vmatpush1.msra.mxu0 0.0
    %801 = vmatprep.subr.mxu0 0.0
    %802 = vmatpush1.msra.mxu0 0.0
    %803 = vmatprep.subr.mxu0 0.0
    %804 = vmatpush1.msra.mxu0 0.0
    %805 = vmatprep.subr.mxu0 0.0
    %806 = vmatpush1.msra.mxu0 0.0
    %807 = vmatprep.subr.mxu0 0.0
    %808 = vmatpush1.msra.mxu0 0.0
    %809 = vmatprep.subr.mxu0 0.0
    %810 = vmatpush1.msra.mxu0 0.0
    %811 = vmatprep.subr.mxu0 0.0
    %812 = vmatpush1.msra.mxu0 0.0
    %813 = vmatprep.subr.mxu0 0.0
    %814 = vmatpush1.msra.mxu0 0.0
    %815 = vmatprep.subr.mxu0 0.0
    %816 = vmatpush1.msra.mxu0 0.0
    %817 = vmatprep.subr.mxu0 0.0
    %818 = vmatpush1.msra.mxu0 0.0
    %819 = vmatprep.subr.mxu0 0.0
    %820 = vmatpush1.msra.mxu0 0.0
    %821 = vmatprep.subr.mxu0 0.0
    %822 = vmatpush1.msra.mxu0 %v785
    %823 = vmatprep.subr.mxu0 0.0
    %824 = vmatpush1.msra.mxu0 %v784
    %825 = vmatprep.subr.mxu0 0.0
    %826 = vmatpush1.msra.mxu0 %v783
    %827 = vmatprep.subr.mxu0 0.0
    %828 = vmatpush1.msra.mxu0 %v782
    %829 = vmatprep.subr.mxu0 0.0
    %830 = vmatpush2.msra.mxu0 0.0
    %831 = vmatprep.subr.mxu0 0.0
    %832 = vmatpush2.msra.mxu0 0.0
    %833 = vmatprep.subr.mxu0 0.0
    %834 = vmatpush2.msra.mxu0 0.0
    %835 = vmatprep.subr.mxu0 0.0
    %836 = vmatpush2.msra.mxu0 0.0
    %837 = vmatprep.subr.mxu0 0.0
    %838 = vmatpush2.msra.mxu0 0.0
    %839 = vmatprep.subr.mxu0 0.0
    %840 = vmatpush2.msra.mxu0 0.0
    %841 = vmatprep.subr.mxu0 0.0
    %842 = vmatpush2.msra.mxu0 0.0
    %843 = vmatprep.subr.mxu0 0.0
    %844 = vmatpush2.msra.mxu0 0.0
    %845 = vmatprep.subr.mxu0 0.0
    %846 = vmatpush2.msra.mxu0 0.0
    %847 = vmatprep.subr.mxu0 0.0
    %848 = vmatpush2.msra.mxu0 0.0
    %849 = vmatprep.subr.mxu0 0.0
    %850 = vmatpush2.msra.mxu0 0.0
    %851 = vmatprep.subr.mxu0 0.0
    %852 = vmatpush2.msra.mxu0 0.0
    %853 = vmatprep.subr.mxu0 0.0
    %854 = vmatpush2.msra.mxu0 0.0
    %855 = vmatprep.subr.mxu0 0.0
    %856 = vmatpush2.msra.mxu0 0.0
    %857 = vmatprep.subr.mxu0 0.0
    %858 = vmatpush2.msra.mxu0 0.0
    %859 = vmatprep.subr.mxu0 0.0
    %860 = vmatpush2.msra.mxu0 0.0
    %861 = vmatprep.mubr.f32.mxu0 0.0
    %862 = vmatmul.mubr.f32.gmra.mxu0 %v792
    %v863 = vpop.f32.mrf.mxu0
    %v864 = vadd.f32 0.0, %v863
    %v865 = vpop.f32.mrf.mxu0
    %866 = vmatprep.mubr.f32.mxu0 0.0
    %867 = vmatmul.mubr.f32.gmra.mxu0 %v795
    %v868 = vpop.f32.mrf.mxu0
    %v869 = vadd.f32 0.0, %v868
    %v870 = vpop.f32.mrf.mxu0
    %871 = vdwg.mxu0
    %872 = vmatprep.subr.mxu0 0.0
    %873 = vmatpush1.msra.mxu0 0.0
    %874 = vmatprep.subr.mxu0 0.0
    %875 = vmatpush1.msra.mxu0 0.0
    %876 = vmatprep.subr.mxu0 0.0
    %877 = vmatpush1.msra.mxu0 0.0
    %878 = vmatprep.subr.mxu0 0.0
    %879 = vmatpush1.msra.mxu0 0.0
    %880 = vmatprep.subr.mxu0 0.0
    %881 = vmatpush1.msra.mxu0 0.0
    %882 = vmatprep.subr.mxu0 0.0
    %883 = vmatpush1.msra.mxu0 0.0
    %884 = vmatprep.subr.mxu0 0.0
    %885 = vmatpush1.msra.mxu0 0.0
    %886 = vmatprep.subr.mxu0 0.0
    %887 = vmatpush1.msra.mxu0 0.0
    %888 = vmatprep.subr.mxu0 0.0
    %889 = vmatpush1.msra.mxu0 0.0
    %890 = vmatprep.subr.mxu0 0.0
    %891 = vmatpush1.msra.mxu0 0.0
    %892 = vmatprep.subr.mxu0 0.0
    %893 = vmatpush1.msra.mxu0 0.0
    %894 = vmatprep.subr.mxu0 0.0
    %895 = vmatpush1.msra.mxu0 0.0
    %896 = vmatprep.subr.mxu0 0.0
    %897 = vmatpush1.msra.mxu0 %v790
    %898 = vmatprep.subr.mxu0 0.0
    %899 = vmatpush1.msra.mxu0 %v789
    %900 = vmatprep.subr.mxu0 0.0
    %901 = vmatpush1.msra.mxu0 %v788
    %902 = vmatprep.subr.mxu0 0.0
    %903 = vmatpush1.msra.mxu0 %v787
    %904 = vmatprep.subr.mxu0 0.0
    %905 = vmatpush2.msra.mxu0 0.0
    %906 = vmatprep.subr.mxu0 0.0
    %907 = vmatpush2.msra.mxu0 0.0
    %908 = vmatprep.subr.mxu0 0.0
    %909 = vmatpush2.msra.mxu0 0.0
    %910 = vmatprep.subr.mxu0 0.0
    %911 = vmatpush2.msra.mxu0 0.0
    %912 = vmatprep.subr.mxu0 0.0
    %913 = vmatpush2.msra.mxu0 0.0
    %914 = vmatprep.subr.mxu0 0.0
    %915 = vmatpush2.msra.mxu0 0.0
    %916 = vmatprep.subr.mxu0 0.0
    %917 = vmatpush2.msra.mxu0 0.0
    %918 = vmatprep.subr.mxu0 0.0
    %919 = vmatpush2.msra.mxu0 0.0
    %920 = vmatprep.subr.mxu0 0.0
    %921 = vmatpush2.msra.mxu0 0.0
    %922 = vmatprep.subr.mxu0 0.0
    %923 = vmatpush2.msra.mxu0 0.0
    %924 = vmatprep.subr.mxu0 0.0
    %925 = vmatpush2.msra.mxu0 0.0
    %926 = vmatprep.subr.mxu0 0.0
    %927 = vmatpush2.msra.mxu0 0.0
    %928 = vmatprep.subr.mxu0 0.0
    %929 = vmatpush2.msra.mxu0 0.0
    %930 = vmatprep.subr.mxu0 0.0
    %931 = vmatpush2.msra.mxu0 0.0
    %932 = vmatprep.subr.mxu0 0.0
    %933 = vmatpush2.msra.mxu0 0.0
    %934 = vmatprep.subr.mxu0 0.0
    %935 = vmatpush2.msra.mxu0 0.0
    %936 = vmatprep.mubr.f32.mxu0 0.0
    %937 = vmatmul.mubr.f32.gmra.mxu0 %v792
    %v938 = vpop.f32.mrf.mxu0
    %v939 = vadd.f32 0.0, %v938
    %v940 = vpop.f32.mrf.mxu0
    %941 = vmatprep.mubr.f32.mxu0 0.0
    %942 = vmatmul.mubr.f32.gmra.mxu0 %v795
    %v943 = vpop.f32.mrf.mxu0
    %v944 = vadd.f32 0.0, %v943
    %v945 = vpop.f32.mrf.mxu0
    %946 = vdwg.mxu0
    %947 = vxpose.xlu0.b32.start [1/16] %v864, 128
    %948 = vxpose.xlu0.b32.cont [2/16] 0.0, 128
    %949 = vxpose.xlu0.b32.cont [3/16] 0.0, 128
    %950 = vxpose.xlu0.b32.cont [4/16] 0.0, 128
    %951 = vxpose.xlu0.b32.cont [5/16] 0.0, 128
    %952 = vxpose.xlu0.b32.cont [6/16] 0.0, 128
    %953 = vxpose.xlu0.b32.cont [7/16] 0.0, 128
    %954 = vxpose.xlu0.b32.cont [8/16] 0.0, 128
    %955 = vxpose.xlu0.b32.cont [9/16] 0.0, 128
    %956 = vxpose.xlu0.b32.cont [10/16] 0.0, 128
    %957 = vxpose.xlu0.b32.cont [11/16] 0.0, 128
    %958 = vxpose.xlu0.b32.cont [12/16] 0.0, 128
    %959 = vxpose.xlu0.b32.cont [13/16] 0.0, 128
    %960 = vxpose.xlu0.b32.cont [14/16] 0.0, 128
    %961 = vxpose.xlu0.b32.cont [15/16] 0.0, 128
    %962 = vxpose.xlu0.b32.end [16/16] 0.0, 128
    %v963 = vpop.trf.xlu0
    %v964 = vpop.trf.xlu0
    %v965 = vpop.trf.xlu0
    %v966 = vpop.trf.xlu0
    %v967 = vpop.trf.xlu0
    %v968 = vpop.trf.xlu0
    %v969 = vpop.trf.xlu0
    %v970 = vpop.trf.xlu0
    %v971 = vpop.trf.xlu0
    %v972 = vpop.trf.xlu0
    %v973 = vpop.trf.xlu0
    %v974 = vpop.trf.xlu0
    %v975 = vpop.trf.xlu0
    %v976 = vpop.trf.xlu0
    %v977 = vpop.trf.xlu0
    %v978 = vpop.trf.xlu0
    %980 = vset.pattern.permute.xlu0 0
    %981 = vperm.xlu0 %980, %v939
    %v982 = vpop.permute.xlu0 %981
    %v984 = vlaneseq
    %v985 = vshrl.u32 %v984, 7
    %v986 = vsub.s32 0, %v985
    %v987 = vrot.slane %v963, %v986
    %v988 = vadd.f32 %v982, %v987
    %vm989 = vcmp.gt.f32.partialorder %v988, 0.0
    %v990 = vmul.f32 %v988, 0.2
    %v991 = vsel %vm989, %v988, %v990
    %v992 = vadd.f32 %v991, %v77
    %v993 = vsel %vm469, %v992, -inf
    %994 = vmax.xlane.f32.xlu0 %v993
    %v995 = vpop.xlane.xlu0 %994
    %v996 = vsub.f32 %v992, %v995
    %v997 = vmul.f32 %v996, 1.442695
    %v998 = vpow.pop %v997
    %v999 = vsel %vm74, %v998, 0.0
    %v1000 = vsel %vm469, %v999, 0.0
    %1001 = vadd.xlane.f32.xlu0 %v1000
    %v1002 = vpop.xlane.xlu0 %1001
    %v1003 = vrcp.pop %v1002
    %v1004 = vmul.f32 %v999, %v1003
    %v1006 = vsel %vm469, %v1004, 0
    %1008 = vmatprep.subr.mxu0 0.0
    %1009 = vmatpush1.msra.mxu0 0.0
    %1010 = vmatprep.subr.mxu0 0.0
    %1011 = vmatpush1.msra.mxu0 0.0
    %1012 = vmatprep.subr.mxu0 0.0
    %1013 = vmatpush1.msra.mxu0 0.0
    %1014 = vmatprep.subr.mxu0 0.0
    %1015 = vmatpush1.msra.mxu0 0.0
    %1016 = vmatprep.subr.mxu0 0.0
    %1017 = vmatpush1.msra.mxu0 0.0
    %1018 = vmatprep.subr.mxu0 0.0
    %1019 = vmatpush1.msra.mxu0 0.0
    %1020 = vmatprep.subr.mxu0 0.0
    %1021 = vmatpush1.msra.mxu0 0.0
    %1022 = vmatprep.subr.mxu0 0.0
    %1023 = vmatpush1.msra.mxu0 0.0
    %1024 = vmatprep.subr.mxu0 0.0
    %1025 = vmatpush1.msra.mxu0 0.0
    %1026 = vmatprep.subr.mxu0 0.0
    %1027 = vmatpush1.msra.mxu0 0.0
    %1028 = vmatprep.subr.mxu0 0.0
    %1029 = vmatpush1.msra.mxu0 0.0
    %1030 = vmatprep.subr.mxu0 0.0
    %1031 = vmatpush1.msra.mxu0 0.0
    %1032 = vmatprep.subr.mxu0 0.0
    %1033 = vmatpush1.msra.mxu0 0.0
    %1034 = vmatprep.subr.mxu0 0.0
    %1035 = vmatpush1.msra.mxu0 0.0
    %1036 = vmatprep.subr.mxu0 0.0
    %1037 = vmatpush1.msra.mxu0 0.0
    %1038 = vmatprep.subr.mxu0 0.0
    %1039 = vmatpush1.msra.mxu0 %v773
    %1040 = vmatprep.subr.mxu0 0.0
    %1041 = vmatpush2.msra.mxu0 0.0
    %1042 = vmatprep.subr.mxu0 0.0
    %1043 = vmatpush2.msra.mxu0 0.0
    %1044 = vmatprep.subr.mxu0 0.0
    %1045 = vmatpush2.msra.mxu0 0.0
    %1046 = vmatprep.subr.mxu0 0.0
    %1047 = vmatpush2.msra.mxu0 0.0
    %1048 = vmatprep.subr.mxu0 0.0
    %1049 = vmatpush2.msra.mxu0 0.0
    %1050 = vmatprep.subr.mxu0 0.0
    %1051 = vmatpush2.msra.mxu0 0.0
    %1052 = vmatprep.subr.mxu0 0.0
    %1053 = vmatpush2.msra.mxu0 0.0
    %1054 = vmatprep.subr.mxu0 0.0
    %1055 = vmatpush2.msra.mxu0 0.0
    %1056 = vmatprep.subr.mxu0 0.0
    %1057 = vmatpush2.msra.mxu0 0.0
    %1058 = vmatprep.subr.mxu0 0.0
    %1059 = vmatpush2.msra.mxu0 0.0
    %1060 = vmatprep.subr.mxu0 0.0
    %1061 = vmatpush2.msra.mxu0 0.0
    %1062 = vmatprep.subr.mxu0 0.0
    %1063 = vmatpush2.msra.mxu0 0.0
    %1064 = vmatprep.subr.mxu0 0.0
    %1065 = vmatpush2.msra.mxu0 0.0
    %1066 = vmatprep.subr.mxu0 0.0
    %1067 = vmatpush2.msra.mxu0 0.0
    %1068 = vmatprep.subr.mxu0 0.0
    %1069 = vmatpush2.msra.mxu0 0.0
    %1070 = vmatprep.subr.mxu0 0.0
    %1071 = vmatpush2.msra.mxu0 0.0
    %1072 = vmatprep.mubr.f32.mxu0 0.0
    %1073 = vmatmul.mubr.f32.gmra.mxu0 %v1006
    %v1074 = vpop.f32.mrf.mxu0
    %v1075 = vadd.f32 0.0, %v1074
    %v1076 = vpop.f32.mrf.mxu0
    %1077 = vdwg.mxu0
    %1078 = vxpose.xlu0.b32.start [1/16] %v869, 128
    %1079 = vxpose.xlu0.b32.cont [2/16] 0.0, 128
    %1080 = vxpose.xlu0.b32.cont [3/16] 0.0, 128
    %1081 = vxpose.xlu0.b32.cont [4/16] 0.0, 128
    %1082 = vxpose.xlu0.b32.cont [5/16] 0.0, 128
    %1083 = vxpose.xlu0.b32.cont [6/16] 0.0, 128
    %1084 = vxpose.xlu0.b32.cont [7/16] 0.0, 128
    %1085 = vxpose.xlu0.b32.cont [8/16] 0.0, 128
    %1086 = vxpose.xlu0.b32.cont [9/16] 0.0, 128
    %1087 = vxpose.xlu0.b32.cont [10/16] 0.0, 128
    %1088 = vxpose.xlu0.b32.cont [11/16] 0.0, 128
    %1089 = vxpose.xlu0.b32.cont [12/16] 0.0, 128
    %1090 = vxpose.xlu0.b32.cont [13/16] 0.0, 128
    %1091 = vxpose.xlu0.b32.cont [14/16] 0.0, 128
    %1092 = vxpose.xlu0.b32.cont [15/16] 0.0, 128
    %1093 = vxpose.xlu0.b32.end [16/16] 0.0, 128
    %v1094 = vpop.trf.xlu0
    %v1095 = vpop.trf.xlu0
    %v1096 = vpop.trf.xlu0
    %v1097 = vpop.trf.xlu0
    %v1098 = vpop.trf.xlu0
    %v1099 = vpop.trf.xlu0
    %v1100 = vpop.trf.xlu0
    %v1101 = vpop.trf.xlu0
    %v1102 = vpop.trf.xlu0
    %v1103 = vpop.trf.xlu0
    %v1104 = vpop.trf.xlu0
    %v1105 = vpop.trf.xlu0
    %v1106 = vpop.trf.xlu0
    %v1107 = vpop.trf.xlu0
    %v1108 = vpop.trf.xlu0
    %v1109 = vpop.trf.xlu0
    %1111 = vset.pattern.permute.xlu0 0
    %1112 = vperm.xlu0 %1111, %v944
    %v1113 = vpop.permute.xlu0 %1112
    %v1115 = vlaneseq
    %v1116 = vshrl.u32 %v1115, 7
    %v1117 = vsub.s32 0, %v1116
    %v1118 = vrot.slane %v1094, %v1117
    %v1119 = vadd.f32 %v1113, %v1118
    %vm1120 = vcmp.gt.f32.partialorder %v1119, 0.0
    %v1121 = vmul.f32 %v1119, 0.2
    %v1122 = vsel %vm1120, %v1119, %v1121
    %v1123 = vadd.f32 %v1122, %v78
    %v1124 = vsel %vm469, %v1123, -inf
    %1125 = vmax.xlane.f32.xlu0 %v1124
    %v1126 = vpop.xlane.xlu0 %1125
    %v1127 = vsub.f32 %v1123, %v1126
    %v1128 = vmul.f32 %v1127, 1.442695
    %v1129 = vpow.pop %v1128
    %v1130 = vsel %vm76, %v1129, 0.0
    %v1131 = vsel %vm469, %v1130, 0.0
    %1132 = vadd.xlane.f32.xlu0 %v1131
    %v1133 = vpop.xlane.xlu0 %1132
    %v1134 = vrcp.pop %v1133
    %v1135 = vmul.f32 %v1130, %v1134
    %v1137 = vsel %vm469, %v1135, 0
    %1139 = vmatprep.subr.mxu0 0.0
    %1140 = vmatpush1.msra.mxu0 0.0
    %1141 = vmatprep.subr.mxu0 0.0
    %1142 = vmatpush1.msra.mxu0 0.0
    %1143 = vmatprep.subr.mxu0 0.0
    %1144 = vmatpush1.msra.mxu0 0.0
    %1145 = vmatprep.subr.mxu0 0.0
    %1146 = vmatpush1.msra.mxu0 0.0
    %1147 = vmatprep.subr.mxu0 0.0
    %1148 = vmatpush1.msra.mxu0 0.0
    %1149 = vmatprep.subr.mxu0 0.0
    %1150 = vmatpush1.msra.mxu0 0.0
    %1151 = vmatprep.subr.mxu0 0.0
    %1152 = vmatpush1.msra.mxu0 0.0
    %1153 = vmatprep.subr.mxu0 0.0
    %1154 = vmatpush1.msra.mxu0 0.0
    %1155 = vmatprep.subr.mxu0 0.0
    %1156 = vmatpush1.msra.mxu0 0.0
    %1157 = vmatprep.subr.mxu0 0.0
    %1158 = vmatpush1.msra.mxu0 0.0
    %1159 = vmatprep.subr.mxu0 0.0
    %1160 = vmatpush1.msra.mxu0 0.0
    %1161 = vmatprep.subr.mxu0 0.0
    %1162 = vmatpush1.msra.mxu0 0.0
    %1163 = vmatprep.subr.mxu0 0.0
    %1164 = vmatpush1.msra.mxu0 0.0
    %1165 = vmatprep.subr.mxu0 0.0
    %1166 = vmatpush1.msra.mxu0 0.0
    %1167 = vmatprep.subr.mxu0 0.0
    %1168 = vmatpush1.msra.mxu0 0.0
    %1169 = vmatprep.subr.mxu0 0.0
    %1170 = vmatpush1.msra.mxu0 %v778
    %1171 = vmatprep.subr.mxu0 0.0
    %1172 = vmatpush2.msra.mxu0 0.0
    %1173 = vmatprep.subr.mxu0 0.0
    %1174 = vmatpush2.msra.mxu0 0.0
    %1175 = vmatprep.subr.mxu0 0.0
    %1176 = vmatpush2.msra.mxu0 0.0
    %1177 = vmatprep.subr.mxu0 0.0
    %1178 = vmatpush2.msra.mxu0 0.0
    %1179 = vmatprep.subr.mxu0 0.0
    %1180 = vmatpush2.msra.mxu0 0.0
    %1181 = vmatprep.subr.mxu0 0.0
    %1182 = vmatpush2.msra.mxu0 0.0
    %1183 = vmatprep.subr.mxu0 0.0
    %1184 = vmatpush2.msra.mxu0 0.0
    %1185 = vmatprep.subr.mxu0 0.0
    %1186 = vmatpush2.msra.mxu0 0.0
    %1187 = vmatprep.subr.mxu0 0.0
    %1188 = vmatpush2.msra.mxu0 0.0
    %1189 = vmatprep.subr.mxu0 0.0
    %1190 = vmatpush2.msra.mxu0 0.0
    %1191 = vmatprep.subr.mxu0 0.0
    %1192 = vmatpush2.msra.mxu0 0.0
    %1193 = vmatprep.subr.mxu0 0.0
    %1194 = vmatpush2.msra.mxu0 0.0
    %1195 = vmatprep.subr.mxu0 0.0
    %1196 = vmatpush2.msra.mxu0 0.0
    %1197 = vmatprep.subr.mxu0 0.0
    %1198 = vmatpush2.msra.mxu0 0.0
    %1199 = vmatprep.subr.mxu0 0.0
    %1200 = vmatpush2.msra.mxu0 0.0
    %1201 = vmatprep.subr.mxu0 0.0
    %1202 = vmatpush2.msra.mxu0 0.0
    %1203 = vmatprep.mubr.f32.mxu0 0.0
    %1204 = vmatmul.mubr.f32.gmra.mxu0 %v1137
    %v1205 = vpop.f32.mrf.mxu0
    %v1206 = vadd.f32 0.0, %v1205
    %v1207 = vpop.f32.mrf.mxu0
    %1208 = vdwg.mxu0
    %s1209 = scalar_lea.vmem %s10, 1
    %v1210 = vld [vmem:[%s1209] sm:$0x1]
    %v1212 = vlaneseq
    %v1213 = vshrl.u32 %v1212, 7
    %v1214 = vsub.s32 0, %v1213
    %v1215 = vrot.slane %v1210, %v1214
    %v1217 = vadd.f32 %v1075, %v1215
    %v1218 = vadd.f32 %v1206, %v1215
    %vm1219 = vcmp.gt.f32.partialorder %v1217, 0.0
    %vm1220 = vcmp.gt.f32.partialorder %v1218, 0.0
    %v1221 = vmul.f32 %v1217, 0.01
    %v1222 = vmul.f32 %v1218, 0.01
    %v1223 = vsel %vm1219, %v1217, %v1221
    %v1224 = vsel %vm1220, %v1218, %v1222
    %v1225 = vld [vmem:[%s11] sm:$0xff]
    %v1226 = vld [vmem:[%s11 + $0x8] sm:$0xff]
    %v1227 = vld [vmem:[%s11 + $0x10] sm:$0xff]
    %v1228 = vld [vmem:[%s11 + $0x18] sm:$0xff]
    %s1229 = scalar_lea.vmem %s11, 32
    %v1230 = vld [vmem:[%s1229] sm:$0xff]
    %v1231 = vld [vmem:[%s1229 + $0x8] sm:$0xff]
    %v1232 = vld [vmem:[%s1229 + $0x10] sm:$0xff]
    %v1233 = vld [vmem:[%s1229 + $0x18] sm:$0xff]
    %v1235 = vsel %vm92, %v1223, 0
    %v1238 = vsel %vm92, %v1224, 0
    %1240 = vmatprep.subr.mxu0 0.0
    %1241 = vmatpush1.msra.mxu0 0.0
    %1242 = vmatprep.subr.mxu0 0.0
    %1243 = vmatpush1.msra.mxu0 0.0
    %1244 = vmatprep.subr.mxu0 0.0
    %1245 = vmatpush1.msra.mxu0 0.0
    %1246 = vmatprep.subr.mxu0 0.0
    %1247 = vmatpush1.msra.mxu0 0.0
    %1248 = vmatprep.subr.mxu0 0.0
    %1249 = vmatpush1.msra.mxu0 0.0
    %1250 = vmatprep.subr.mxu0 0.0
    %1251 = vmatpush1.msra.mxu0 0.0
    %1252 = vmatprep.subr.mxu0 0.0
    %1253 = vmatpush1.msra.mxu0 0.0
    %1254 = vmatprep.subr.mxu0 0.0
    %1255 = vmatpush1.msra.mxu0 0.0
    %1256 = vmatprep.subr.mxu0 0.0
    %1257 = vmatpush1.msra.mxu0 0.0
    %1258 = vmatprep.subr.mxu0 0.0
    %1259 = vmatpush1.msra.mxu0 0.0
    %1260 = vmatprep.subr.mxu0 0.0
    %1261 = vmatpush1.msra.mxu0 0.0
    %1262 = vmatprep.subr.mxu0 0.0
    %1263 = vmatpush1.msra.mxu0 0.0
    %1264 = vmatprep.subr.mxu0 0.0
    %1265 = vmatpush1.msra.mxu0 %v1233
    %1266 = vmatprep.subr.mxu0 0.0
    %1267 = vmatpush1.msra.mxu0 %v1232
    %1268 = vmatprep.subr.mxu0 0.0
    %1269 = vmatpush1.msra.mxu0 %v1231
    %1270 = vmatprep.subr.mxu0 0.0
    %1271 = vmatpush1.msra.mxu0 %v1230
    %1272 = vmatprep.subr.mxu0 0.0
    %1273 = vmatpush2.msra.mxu0 0.0
    %1274 = vmatprep.subr.mxu0 0.0
    %1275 = vmatpush2.msra.mxu0 0.0
    %1276 = vmatprep.subr.mxu0 0.0
    %1277 = vmatpush2.msra.mxu0 0.0
    %1278 = vmatprep.subr.mxu0 0.0
    %1279 = vmatpush2.msra.mxu0 0.0
    %1280 = vmatprep.subr.mxu0 0.0
    %1281 = vmatpush2.msra.mxu0 0.0
    %1282 = vmatprep.subr.mxu0 0.0
    %1283 = vmatpush2.msra.mxu0 0.0
    %1284 = vmatprep.subr.mxu0 0.0
    %1285 = vmatpush2.msra.mxu0 0.0
    %1286 = vmatprep.subr.mxu0 0.0
    %1287 = vmatpush2.msra.mxu0 0.0
    %1288 = vmatprep.subr.mxu0 0.0
    %1289 = vmatpush2.msra.mxu0 0.0
    %1290 = vmatprep.subr.mxu0 0.0
    %1291 = vmatpush2.msra.mxu0 0.0
    %1292 = vmatprep.subr.mxu0 0.0
    %1293 = vmatpush2.msra.mxu0 0.0
    %1294 = vmatprep.subr.mxu0 0.0
    %1295 = vmatpush2.msra.mxu0 0.0
    %1296 = vmatprep.subr.mxu0 0.0
    %1297 = vmatpush2.msra.mxu0 0.0
    %1298 = vmatprep.subr.mxu0 0.0
    %1299 = vmatpush2.msra.mxu0 0.0
    %1300 = vmatprep.subr.mxu0 0.0
    %1301 = vmatpush2.msra.mxu0 0.0
    %1302 = vmatprep.subr.mxu0 0.0
    %1303 = vmatpush2.msra.mxu0 0.0
    %1304 = vmatprep.mubr.f32.mxu0 0.0
    %1305 = vmatmul.mubr.f32.gmra.mxu0 %v1235
    %v1306 = vpop.f32.mrf.mxu0
    %v1307 = vadd.f32 0.0, %v1306
    %v1308 = vpop.f32.mrf.mxu0
    %1309 = vmatprep.mubr.f32.mxu0 0.0
    %1310 = vmatmul.mubr.f32.gmra.mxu0 %v1238
    %v1311 = vpop.f32.mrf.mxu0
    %v1312 = vadd.f32 0.0, %v1311
    %v1313 = vpop.f32.mrf.mxu0
    %1314 = vdwg.mxu0
    %v1316 = vsel %vm92, %v699, 0
    %v1319 = vsel %vm92, %v700, 0
    %1321 = vmatprep.subr.mxu0 0.0
    %1322 = vmatpush1.msra.mxu0 0.0
    %1323 = vmatprep.subr.mxu0 0.0
    %1324 = vmatpush1.msra.mxu0 0.0
    %1325 = vmatprep.subr.mxu0 0.0
    %1326 = vmatpush1.msra.mxu0 0.0
    %1327 = vmatprep.subr.mxu0 0.0
    %1328 = vmatpush1.msra.mxu0 0.0
    %1329 = vmatprep.subr.mxu0 0.0
    %1330 = vmatpush1.msra.mxu0 0.0
    %1331 = vmatprep.subr.mxu0 0.0
    %1332 = vmatpush1.msra.mxu0 0.0
    %1333 = vmatprep.subr.mxu0 0.0
    %1334 = vmatpush1.msra.mxu0 0.0
    %1335 = vmatprep.subr.mxu0 0.0
    %1336 = vmatpush1.msra.mxu0 0.0
    %1337 = vmatprep.subr.mxu0 0.0
    %1338 = vmatpush1.msra.mxu0 0.0
    %1339 = vmatprep.subr.mxu0 0.0
    %1340 = vmatpush1.msra.mxu0 0.0
    %1341 = vmatprep.subr.mxu0 0.0
    %1342 = vmatpush1.msra.mxu0 0.0
    %1343 = vmatprep.subr.mxu0 0.0
    %1344 = vmatpush1.msra.mxu0 0.0
    %1345 = vmatprep.subr.mxu0 0.0
    %1346 = vmatpush1.msra.mxu0 %v1228
    %1347 = vmatprep.subr.mxu0 0.0
    %1348 = vmatpush1.msra.mxu0 %v1227
    %1349 = vmatprep.subr.mxu0 0.0
    %1350 = vmatpush1.msra.mxu0 %v1226
    %1351 = vmatprep.subr.mxu0 0.0
    %1352 = vmatpush1.msra.mxu0 %v1225
    %1353 = vmatprep.subr.mxu0 0.0
    %1354 = vmatpush2.msra.mxu0 0.0
    %1355 = vmatprep.subr.mxu0 0.0
    %1356 = vmatpush2.msra.mxu0 0.0
    %1357 = vmatprep.subr.mxu0 0.0
    %1358 = vmatpush2.msra.mxu0 0.0
    %1359 = vmatprep.subr.mxu0 0.0
    %1360 = vmatpush2.msra.mxu0 0.0
    %1361 = vmatprep.subr.mxu0 0.0
    %1362 = vmatpush2.msra.mxu0 0.0
    %1363 = vmatprep.subr.mxu0 0.0
    %1364 = vmatpush2.msra.mxu0 0.0
    %1365 = vmatprep.subr.mxu0 0.0
    %1366 = vmatpush2.msra.mxu0 0.0
    %1367 = vmatprep.subr.mxu0 0.0
    %1368 = vmatpush2.msra.mxu0 0.0
    %1369 = vmatprep.subr.mxu0 0.0
    %1370 = vmatpush2.msra.mxu0 0.0
    %1371 = vmatprep.subr.mxu0 0.0
    %1372 = vmatpush2.msra.mxu0 0.0
    %1373 = vmatprep.subr.mxu0 0.0
    %1374 = vmatpush2.msra.mxu0 0.0
    %1375 = vmatprep.subr.mxu0 0.0
    %1376 = vmatpush2.msra.mxu0 0.0
    %1377 = vmatprep.subr.mxu0 0.0
    %1378 = vmatpush2.msra.mxu0 0.0
    %1379 = vmatprep.subr.mxu0 0.0
    %1380 = vmatpush2.msra.mxu0 0.0
    %1381 = vmatprep.subr.mxu0 0.0
    %1382 = vmatpush2.msra.mxu0 0.0
    %1383 = vmatprep.subr.mxu0 0.0
    %1384 = vmatpush2.msra.mxu0 0.0
    %1385 = vmatprep.mubr.f32.mxu0 0.0
    %1386 = vmatmul.mubr.f32.gmra.mxu0 %v1316
    %v1387 = vpop.f32.mrf.mxu0
    %v1388 = vadd.f32 %v1307, %v1387
    %v1389 = vpop.f32.mrf.mxu0
    %1390 = vmatprep.mubr.f32.mxu0 0.0
    %1391 = vmatmul.mubr.f32.gmra.mxu0 %v1319
    %v1392 = vpop.f32.mrf.mxu0
    %v1393 = vadd.f32 %v1312, %v1392
    %v1394 = vpop.f32.mrf.mxu0
    %1395 = vdwg.mxu0
    %v1396 = vld [vmem:[%s12] sm:$0xff]
    %v1397 = vld [vmem:[%s12 + $0x8] sm:$0xff]
    %v1398 = vld [vmem:[%s12 + $0x10] sm:$0xff]
    %v1399 = vld [vmem:[%s12 + $0x18] sm:$0xff]
    %v1400 = vld [vmem:[%s13] sm:$0xff]
    %v1401 = vld [vmem:[%s13 + $0x8] sm:$0xff]
    %v1402 = vld [vmem:[%s13 + $0x10] sm:$0xff]
    %v1403 = vld [vmem:[%s13 + $0x18] sm:$0xff]
    %v1405 = vsel %vm92, %v1388, 0
    %v1408 = vsel %vm92, %v1393, 0
    %1410 = vmatprep.subr.mxu0 0.0
    %1411 = vmatpush1.msra.mxu0 0.0
    %1412 = vmatprep.subr.mxu0 0.0
    %1413 = vmatpush1.msra.mxu0 0.0
    %1414 = vmatprep.subr.mxu0 0.0
    %1415 = vmatpush1.msra.mxu0 0.0
    %1416 = vmatprep.subr.mxu0 0.0
    %1417 = vmatpush1.msra.mxu0 0.0
    %1418 = vmatprep.subr.mxu0 0.0
    %1419 = vmatpush1.msra.mxu0 0.0
    %1420 = vmatprep.subr.mxu0 0.0
    %1421 = vmatpush1.msra.mxu0 0.0
    %1422 = vmatprep.subr.mxu0 0.0
    %1423 = vmatpush1.msra.mxu0 0.0
    %1424 = vmatprep.subr.mxu0 0.0
    %1425 = vmatpush1.msra.mxu0 0.0
    %1426 = vmatprep.subr.mxu0 0.0
    %1427 = vmatpush1.msra.mxu0 0.0
    %1428 = vmatprep.subr.mxu0 0.0
    %1429 = vmatpush1.msra.mxu0 0.0
    %1430 = vmatprep.subr.mxu0 0.0
    %1431 = vmatpush1.msra.mxu0 0.0
    %1432 = vmatprep.subr.mxu0 0.0
    %1433 = vmatpush1.msra.mxu0 0.0
    %1434 = vmatprep.subr.mxu0 0.0
    %1435 = vmatpush1.msra.mxu0 %v1399
    %1436 = vmatprep.subr.mxu0 0.0
    %1437 = vmatpush1.msra.mxu0 %v1398
    %1438 = vmatprep.subr.mxu0 0.0
    %1439 = vmatpush1.msra.mxu0 %v1397
    %1440 = vmatprep.subr.mxu0 0.0
    %1441 = vmatpush1.msra.mxu0 %v1396
    %1442 = vmatprep.subr.mxu0 0.0
    %1443 = vmatpush2.msra.mxu0 0.0
    %1444 = vmatprep.subr.mxu0 0.0
    %1445 = vmatpush2.msra.mxu0 0.0
    %1446 = vmatprep.subr.mxu0 0.0
    %1447 = vmatpush2.msra.mxu0 0.0
    %1448 = vmatprep.subr.mxu0 0.0
    %1449 = vmatpush2.msra.mxu0 0.0
    %1450 = vmatprep.subr.mxu0 0.0
    %1451 = vmatpush2.msra.mxu0 0.0
    %1452 = vmatprep.subr.mxu0 0.0
    %1453 = vmatpush2.msra.mxu0 0.0
    %1454 = vmatprep.subr.mxu0 0.0
    %1455 = vmatpush2.msra.mxu0 0.0
    %1456 = vmatprep.subr.mxu0 0.0
    %1457 = vmatpush2.msra.mxu0 0.0
    %1458 = vmatprep.subr.mxu0 0.0
    %1459 = vmatpush2.msra.mxu0 0.0
    %1460 = vmatprep.subr.mxu0 0.0
    %1461 = vmatpush2.msra.mxu0 0.0
    %1462 = vmatprep.subr.mxu0 0.0
    %1463 = vmatpush2.msra.mxu0 0.0
    %1464 = vmatprep.subr.mxu0 0.0
    %1465 = vmatpush2.msra.mxu0 0.0
    %1466 = vmatprep.subr.mxu0 0.0
    %1467 = vmatpush2.msra.mxu0 0.0
    %1468 = vmatprep.subr.mxu0 0.0
    %1469 = vmatpush2.msra.mxu0 0.0
    %1470 = vmatprep.subr.mxu0 0.0
    %1471 = vmatpush2.msra.mxu0 0.0
    %1472 = vmatprep.subr.mxu0 0.0
    %1473 = vmatpush2.msra.mxu0 0.0
    %1474 = vmatprep.mubr.f32.mxu0 0.0
    %1475 = vmatmul.mubr.f32.gmra.mxu0 %v1405
    %v1476 = vpop.f32.mrf.mxu0
    %v1477 = vadd.f32 0.0, %v1476
    %v1478 = vpop.f32.mrf.mxu0
    %1479 = vmatprep.mubr.f32.mxu0 0.0
    %1480 = vmatmul.mubr.f32.gmra.mxu0 %v1408
    %v1481 = vpop.f32.mrf.mxu0
    %v1482 = vadd.f32 0.0, %v1481
    %v1483 = vpop.f32.mrf.mxu0
    %1484 = vdwg.mxu0
    %1485 = vmatprep.subr.mxu0 0.0
    %1486 = vmatpush1.msra.mxu0 0.0
    %1487 = vmatprep.subr.mxu0 0.0
    %1488 = vmatpush1.msra.mxu0 0.0
    %1489 = vmatprep.subr.mxu0 0.0
    %1490 = vmatpush1.msra.mxu0 0.0
    %1491 = vmatprep.subr.mxu0 0.0
    %1492 = vmatpush1.msra.mxu0 0.0
    %1493 = vmatprep.subr.mxu0 0.0
    %1494 = vmatpush1.msra.mxu0 0.0
    %1495 = vmatprep.subr.mxu0 0.0
    %1496 = vmatpush1.msra.mxu0 0.0
    %1497 = vmatprep.subr.mxu0 0.0
    %1498 = vmatpush1.msra.mxu0 0.0
    %1499 = vmatprep.subr.mxu0 0.0
    %1500 = vmatpush1.msra.mxu0 0.0
    %1501 = vmatprep.subr.mxu0 0.0
    %1502 = vmatpush1.msra.mxu0 0.0
    %1503 = vmatprep.subr.mxu0 0.0
    %1504 = vmatpush1.msra.mxu0 0.0
    %1505 = vmatprep.subr.mxu0 0.0
    %1506 = vmatpush1.msra.mxu0 0.0
    %1507 = vmatprep.subr.mxu0 0.0
    %1508 = vmatpush1.msra.mxu0 0.0
    %1509 = vmatprep.subr.mxu0 0.0
    %1510 = vmatpush1.msra.mxu0 %v1403
    %1511 = vmatprep.subr.mxu0 0.0
    %1512 = vmatpush1.msra.mxu0 %v1402
    %1513 = vmatprep.subr.mxu0 0.0
    %1514 = vmatpush1.msra.mxu0 %v1401
    %1515 = vmatprep.subr.mxu0 0.0
    %1516 = vmatpush1.msra.mxu0 %v1400
    %1517 = vmatprep.subr.mxu0 0.0
    %1518 = vmatpush2.msra.mxu0 0.0
    %1519 = vmatprep.subr.mxu0 0.0
    %1520 = vmatpush2.msra.mxu0 0.0
    %1521 = vmatprep.subr.mxu0 0.0
    %1522 = vmatpush2.msra.mxu0 0.0
    %1523 = vmatprep.subr.mxu0 0.0
    %1524 = vmatpush2.msra.mxu0 0.0
    %1525 = vmatprep.subr.mxu0 0.0
    %1526 = vmatpush2.msra.mxu0 0.0
    %1527 = vmatprep.subr.mxu0 0.0
    %1528 = vmatpush2.msra.mxu0 0.0
    %1529 = vmatprep.subr.mxu0 0.0
    %1530 = vmatpush2.msra.mxu0 0.0
    %1531 = vmatprep.subr.mxu0 0.0
    %1532 = vmatpush2.msra.mxu0 0.0
    %1533 = vmatprep.subr.mxu0 0.0
    %1534 = vmatpush2.msra.mxu0 0.0
    %1535 = vmatprep.subr.mxu0 0.0
    %1536 = vmatpush2.msra.mxu0 0.0
    %1537 = vmatprep.subr.mxu0 0.0
    %1538 = vmatpush2.msra.mxu0 0.0
    %1539 = vmatprep.subr.mxu0 0.0
    %1540 = vmatpush2.msra.mxu0 0.0
    %1541 = vmatprep.subr.mxu0 0.0
    %1542 = vmatpush2.msra.mxu0 0.0
    %1543 = vmatprep.subr.mxu0 0.0
    %1544 = vmatpush2.msra.mxu0 0.0
    %1545 = vmatprep.subr.mxu0 0.0
    %1546 = vmatpush2.msra.mxu0 0.0
    %1547 = vmatprep.subr.mxu0 0.0
    %1548 = vmatpush2.msra.mxu0 0.0
    %1549 = vmatprep.mubr.f32.mxu0 0.0
    %1550 = vmatmul.mubr.f32.gmra.mxu0 %v1405
    %v1551 = vpop.f32.mrf.mxu0
    %v1552 = vadd.f32 0.0, %v1551
    %v1553 = vpop.f32.mrf.mxu0
    %1554 = vmatprep.mubr.f32.mxu0 0.0
    %1555 = vmatmul.mubr.f32.gmra.mxu0 %v1408
    %v1556 = vpop.f32.mrf.mxu0
    %v1557 = vadd.f32 0.0, %v1556
    %v1558 = vpop.f32.mrf.mxu0
    %1559 = vdwg.mxu0
    %1560 = vxpose.xlu0.b32.start [1/16] %v1477, 128
    %1561 = vxpose.xlu0.b32.cont [2/16] 0.0, 128
    %1562 = vxpose.xlu0.b32.cont [3/16] 0.0, 128
    %1563 = vxpose.xlu0.b32.cont [4/16] 0.0, 128
    %1564 = vxpose.xlu0.b32.cont [5/16] 0.0, 128
    %1565 = vxpose.xlu0.b32.cont [6/16] 0.0, 128
    %1566 = vxpose.xlu0.b32.cont [7/16] 0.0, 128
    %1567 = vxpose.xlu0.b32.cont [8/16] 0.0, 128
    %1568 = vxpose.xlu0.b32.cont [9/16] 0.0, 128
    %1569 = vxpose.xlu0.b32.cont [10/16] 0.0, 128
    %1570 = vxpose.xlu0.b32.cont [11/16] 0.0, 128
    %1571 = vxpose.xlu0.b32.cont [12/16] 0.0, 128
    %1572 = vxpose.xlu0.b32.cont [13/16] 0.0, 128
    %1573 = vxpose.xlu0.b32.cont [14/16] 0.0, 128
    %1574 = vxpose.xlu0.b32.cont [15/16] 0.0, 128
    %1575 = vxpose.xlu0.b32.end [16/16] 0.0, 128
    %v1576 = vpop.trf.xlu0
    %v1577 = vpop.trf.xlu0
    %v1578 = vpop.trf.xlu0
    %v1579 = vpop.trf.xlu0
    %v1580 = vpop.trf.xlu0
    %v1581 = vpop.trf.xlu0
    %v1582 = vpop.trf.xlu0
    %v1583 = vpop.trf.xlu0
    %v1584 = vpop.trf.xlu0
    %v1585 = vpop.trf.xlu0
    %v1586 = vpop.trf.xlu0
    %v1587 = vpop.trf.xlu0
    %v1588 = vpop.trf.xlu0
    %v1589 = vpop.trf.xlu0
    %v1590 = vpop.trf.xlu0
    %v1591 = vpop.trf.xlu0
    %1593 = vset.pattern.permute.xlu0 0
    %1594 = vperm.xlu0 %1593, %v1552
    %v1595 = vpop.permute.xlu0 %1594
    %v1597 = vlaneseq
    %v1598 = vshrl.u32 %v1597, 7
    %v1599 = vsub.s32 0, %v1598
    %v1600 = vrot.slane %v1576, %v1599
    %v1601 = vadd.f32 %v1595, %v1600
    %vm1602 = vcmp.gt.f32.partialorder %v1601, 0.0
    %v1603 = vmul.f32 %v1601, 0.2
    %v1604 = vsel %vm1602, %v1601, %v1603
    %v1605 = vadd.f32 %v1604, %v77
    %v1606 = vsel %vm469, %v1605, -inf
    %1607 = vmax.xlane.f32.xlu0 %v1606
    %v1608 = vpop.xlane.xlu0 %1607
    %v1609 = vsub.f32 %v1605, %v1608
    %v1610 = vmul.f32 %v1609, 1.442695
    %v1611 = vpow.pop %v1610
    %v1612 = vsel %vm74, %v1611, 0.0
    %v1613 = vsel %vm469, %v1612, 0.0
    %1614 = vadd.xlane.f32.xlu0 %v1613
    %v1615 = vpop.xlane.xlu0 %1614
    %v1616 = vrcp.pop %v1615
    %v1617 = vmul.f32 %v1612, %v1616
    %v1619 = vsel %vm469, %v1617, 0
    %1621 = vmatprep.subr.mxu0 0.0
    %1622 = vmatpush1.msra.mxu0 0.0
    %1623 = vmatprep.subr.mxu0 0.0
    %1624 = vmatpush1.msra.mxu0 0.0
    %1625 = vmatprep.subr.mxu0 0.0
    %1626 = vmatpush1.msra.mxu0 0.0
    %1627 = vmatprep.subr.mxu0 0.0
    %1628 = vmatpush1.msra.mxu0 0.0
    %1629 = vmatprep.subr.mxu0 0.0
    %1630 = vmatpush1.msra.mxu0 0.0
    %1631 = vmatprep.subr.mxu0 0.0
    %1632 = vmatpush1.msra.mxu0 0.0
    %1633 = vmatprep.subr.mxu0 0.0
    %1634 = vmatpush1.msra.mxu0 0.0
    %1635 = vmatprep.subr.mxu0 0.0
    %1636 = vmatpush1.msra.mxu0 0.0
    %1637 = vmatprep.subr.mxu0 0.0
    %1638 = vmatpush1.msra.mxu0 0.0
    %1639 = vmatprep.subr.mxu0 0.0
    %1640 = vmatpush1.msra.mxu0 0.0
    %1641 = vmatprep.subr.mxu0 0.0
    %1642 = vmatpush1.msra.mxu0 0.0
    %1643 = vmatprep.subr.mxu0 0.0
    %1644 = vmatpush1.msra.mxu0 0.0
    %1645 = vmatprep.subr.mxu0 0.0
    %1646 = vmatpush1.msra.mxu0 0.0
    %1647 = vmatprep.subr.mxu0 0.0
    %1648 = vmatpush1.msra.mxu0 0.0
    %1649 = vmatprep.subr.mxu0 0.0
    %1650 = vmatpush1.msra.mxu0 0.0
    %1651 = vmatprep.subr.mxu0 0.0
    %1652 = vmatpush1.msra.mxu0 %v1388
    %1653 = vmatprep.subr.mxu0 0.0
    %1654 = vmatpush2.msra.mxu0 0.0
    %1655 = vmatprep.subr.mxu0 0.0
    %1656 = vmatpush2.msra.mxu0 0.0
    %1657 = vmatprep.subr.mxu0 0.0
    %1658 = vmatpush2.msra.mxu0 0.0
    %1659 = vmatprep.subr.mxu0 0.0
    %1660 = vmatpush2.msra.mxu0 0.0
    %1661 = vmatprep.subr.mxu0 0.0
    %1662 = vmatpush2.msra.mxu0 0.0
    %1663 = vmatprep.subr.mxu0 0.0
    %1664 = vmatpush2.msra.mxu0 0.0
    %1665 = vmatprep.subr.mxu0 0.0
    %1666 = vmatpush2.msra.mxu0 0.0
    %1667 = vmatprep.subr.mxu0 0.0
    %1668 = vmatpush2.msra.mxu0 0.0
    %1669 = vmatprep.subr.mxu0 0.0
    %1670 = vmatpush2.msra.mxu0 0.0
    %1671 = vmatprep.subr.mxu0 0.0
    %1672 = vmatpush2.msra.mxu0 0.0
    %1673 = vmatprep.subr.mxu0 0.0
    %1674 = vmatpush2.msra.mxu0 0.0
    %1675 = vmatprep.subr.mxu0 0.0
    %1676 = vmatpush2.msra.mxu0 0.0
    %1677 = vmatprep.subr.mxu0 0.0
    %1678 = vmatpush2.msra.mxu0 0.0
    %1679 = vmatprep.subr.mxu0 0.0
    %1680 = vmatpush2.msra.mxu0 0.0
    %1681 = vmatprep.subr.mxu0 0.0
    %1682 = vmatpush2.msra.mxu0 0.0
    %1683 = vmatprep.subr.mxu0 0.0
    %1684 = vmatpush2.msra.mxu0 0.0
    %1685 = vmatprep.mubr.f32.mxu0 0.0
    %1686 = vmatmul.mubr.f32.gmra.mxu0 %v1619
    %v1687 = vpop.f32.mrf.mxu0
    %v1688 = vadd.f32 0.0, %v1687
    %v1689 = vpop.f32.mrf.mxu0
    %1690 = vdwg.mxu0
    %1691 = vxpose.xlu0.b32.start [1/16] %v1482, 128
    %1692 = vxpose.xlu0.b32.cont [2/16] 0.0, 128
    %1693 = vxpose.xlu0.b32.cont [3/16] 0.0, 128
    %1694 = vxpose.xlu0.b32.cont [4/16] 0.0, 128
    %1695 = vxpose.xlu0.b32.cont [5/16] 0.0, 128
    %1696 = vxpose.xlu0.b32.cont [6/16] 0.0, 128
    %1697 = vxpose.xlu0.b32.cont [7/16] 0.0, 128
    %1698 = vxpose.xlu0.b32.cont [8/16] 0.0, 128
    %1699 = vxpose.xlu0.b32.cont [9/16] 0.0, 128
    %1700 = vxpose.xlu0.b32.cont [10/16] 0.0, 128
    %1701 = vxpose.xlu0.b32.cont [11/16] 0.0, 128
    %1702 = vxpose.xlu0.b32.cont [12/16] 0.0, 128
    %1703 = vxpose.xlu0.b32.cont [13/16] 0.0, 128
    %1704 = vxpose.xlu0.b32.cont [14/16] 0.0, 128
    %1705 = vxpose.xlu0.b32.cont [15/16] 0.0, 128
    %1706 = vxpose.xlu0.b32.end [16/16] 0.0, 128
    %v1707 = vpop.trf.xlu0
    %v1708 = vpop.trf.xlu0
    %v1709 = vpop.trf.xlu0
    %v1710 = vpop.trf.xlu0
    %v1711 = vpop.trf.xlu0
    %v1712 = vpop.trf.xlu0
    %v1713 = vpop.trf.xlu0
    %v1714 = vpop.trf.xlu0
    %v1715 = vpop.trf.xlu0
    %v1716 = vpop.trf.xlu0
    %v1717 = vpop.trf.xlu0
    %v1718 = vpop.trf.xlu0
    %v1719 = vpop.trf.xlu0
    %v1720 = vpop.trf.xlu0
    %v1721 = vpop.trf.xlu0
    %v1722 = vpop.trf.xlu0
    %1724 = vset.pattern.permute.xlu0 0
    %1725 = vperm.xlu0 %1724, %v1557
    %v1726 = vpop.permute.xlu0 %1725
    %v1728 = vlaneseq
    %v1729 = vshrl.u32 %v1728, 7
    %v1730 = vsub.s32 0, %v1729
    %v1731 = vrot.slane %v1707, %v1730
    %v1732 = vadd.f32 %v1726, %v1731
    %vm1733 = vcmp.gt.f32.partialorder %v1732, 0.0
    %v1734 = vmul.f32 %v1732, 0.2
    %v1735 = vsel %vm1733, %v1732, %v1734
    %v1736 = vadd.f32 %v1735, %v78
    %v1737 = vsel %vm469, %v1736, -inf
    %1738 = vmax.xlane.f32.xlu0 %v1737
    %v1739 = vpop.xlane.xlu0 %1738
    %v1740 = vsub.f32 %v1736, %v1739
    %v1741 = vmul.f32 %v1740, 1.442695
    %v1742 = vpow.pop %v1741
    %v1743 = vsel %vm76, %v1742, 0.0
    %v1744 = vsel %vm469, %v1743, 0.0
    %1745 = vadd.xlane.f32.xlu0 %v1744
    %v1746 = vpop.xlane.xlu0 %1745
    %v1747 = vrcp.pop %v1746
    %v1748 = vmul.f32 %v1743, %v1747
    %v1750 = vsel %vm469, %v1748, 0
    %1752 = vmatprep.subr.mxu0 0.0
    %1753 = vmatpush1.msra.mxu0 0.0
    %1754 = vmatprep.subr.mxu0 0.0
    %1755 = vmatpush1.msra.mxu0 0.0
    %1756 = vmatprep.subr.mxu0 0.0
    %1757 = vmatpush1.msra.mxu0 0.0
    %1758 = vmatprep.subr.mxu0 0.0
    %1759 = vmatpush1.msra.mxu0 0.0
    %1760 = vmatprep.subr.mxu0 0.0
    %1761 = vmatpush1.msra.mxu0 0.0
    %1762 = vmatprep.subr.mxu0 0.0
    %1763 = vmatpush1.msra.mxu0 0.0
    %1764 = vmatprep.subr.mxu0 0.0
    %1765 = vmatpush1.msra.mxu0 0.0
    %1766 = vmatprep.subr.mxu0 0.0
    %1767 = vmatpush1.msra.mxu0 0.0
    %1768 = vmatprep.subr.mxu0 0.0
    %1769 = vmatpush1.msra.mxu0 0.0
    %1770 = vmatprep.subr.mxu0 0.0
    %1771 = vmatpush1.msra.mxu0 0.0
    %1772 = vmatprep.subr.mxu0 0.0
    %1773 = vmatpush1.msra.mxu0 0.0
    %1774 = vmatprep.subr.mxu0 0.0
    %1775 = vmatpush1.msra.mxu0 0.0
    %1776 = vmatprep.subr.mxu0 0.0
    %1777 = vmatpush1.msra.mxu0 0.0
    %1778 = vmatprep.subr.mxu0 0.0
    %1779 = vmatpush1.msra.mxu0 0.0
    %1780 = vmatprep.subr.mxu0 0.0
    %1781 = vmatpush1.msra.mxu0 0.0
    %1782 = vmatprep.subr.mxu0 0.0
    %1783 = vmatpush1.msra.mxu0 %v1393
    %1784 = vmatprep.subr.mxu0 0.0
    %1785 = vmatpush2.msra.mxu0 0.0
    %1786 = vmatprep.subr.mxu0 0.0
    %1787 = vmatpush2.msra.mxu0 0.0
    %1788 = vmatprep.subr.mxu0 0.0
    %1789 = vmatpush2.msra.mxu0 0.0
    %1790 = vmatprep.subr.mxu0 0.0
    %1791 = vmatpush2.msra.mxu0 0.0
    %1792 = vmatprep.subr.mxu0 0.0
    %1793 = vmatpush2.msra.mxu0 0.0
    %1794 = vmatprep.subr.mxu0 0.0
    %1795 = vmatpush2.msra.mxu0 0.0
    %1796 = vmatprep.subr.mxu0 0.0
    %1797 = vmatpush2.msra.mxu0 0.0
    %1798 = vmatprep.subr.mxu0 0.0
    %1799 = vmatpush2.msra.mxu0 0.0
    %1800 = vmatprep.subr.mxu0 0.0
    %1801 = vmatpush2.msra.mxu0 0.0
    %1802 = vmatprep.subr.mxu0 0.0
    %1803 = vmatpush2.msra.mxu0 0.0
    %1804 = vmatprep.subr.mxu0 0.0
    %1805 = vmatpush2.msra.mxu0 0.0
    %1806 = vmatprep.subr.mxu0 0.0
    %1807 = vmatpush2.msra.mxu0 0.0
    %1808 = vmatprep.subr.mxu0 0.0
    %1809 = vmatpush2.msra.mxu0 0.0
    %1810 = vmatprep.subr.mxu0 0.0
    %1811 = vmatpush2.msra.mxu0 0.0
    %1812 = vmatprep.subr.mxu0 0.0
    %1813 = vmatpush2.msra.mxu0 0.0
    %1814 = vmatprep.subr.mxu0 0.0
    %1815 = vmatpush2.msra.mxu0 0.0
    %1816 = vmatprep.mubr.f32.mxu0 0.0
    %1817 = vmatmul.mubr.f32.gmra.mxu0 %v1750
    %v1818 = vpop.f32.mrf.mxu0
    %v1819 = vadd.f32 0.0, %v1818
    %v1820 = vpop.f32.mrf.mxu0
    %1821 = vdwg.mxu0
    %v1822 = vld [vmem:[%s14] sm:$0x1]
    %v1824 = vlaneseq
    %v1825 = vshrl.u32 %v1824, 7
    %v1826 = vsub.s32 0, %v1825
    %v1827 = vrot.slane %v1822, %v1826
    %v1829 = vadd.f32 %v1688, %v1827
    %v1830 = vadd.f32 %v1819, %v1827
    %vm1831 = vcmp.gt.f32.partialorder %v1829, 0.0
    %vm1832 = vcmp.gt.f32.partialorder %v1830, 0.0
    %v1833 = vmul.f32 %v1829, 0.01
    %v1834 = vmul.f32 %v1830, 0.01
    %v1835 = vsel %vm1831, %v1829, %v1833
    %v1836 = vsel %vm1832, %v1830, %v1834
    %s1837 = scalar_lea.vmem %s11, 64
    %v1838 = vld [vmem:[%s1837] sm:$0xff]
    %v1839 = vld [vmem:[%s1837 + $0x8] sm:$0xff]
    %v1840 = vld [vmem:[%s1837 + $0x10] sm:$0xff]
    %v1841 = vld [vmem:[%s1837 + $0x18] sm:$0xff]
    %s1842 = scalar_lea.vmem %s11, 96
    %v1843 = vld [vmem:[%s1842] sm:$0xff]
    %v1844 = vld [vmem:[%s1842 + $0x8] sm:$0xff]
    %v1845 = vld [vmem:[%s1842 + $0x10] sm:$0xff]
    %v1846 = vld [vmem:[%s1842 + $0x18] sm:$0xff]
    %1847 = vmatprep.subr.mxu0 0.0
    %1848 = vmatpush1.msra.mxu0 0.0
    %1849 = vmatprep.subr.mxu0 0.0
    %1850 = vmatpush1.msra.mxu0 0.0
    %1851 = vmatprep.subr.mxu0 0.0
    %1852 = vmatpush1.msra.mxu0 0.0
    %1853 = vmatprep.subr.mxu0 0.0
    %1854 = vmatpush1.msra.mxu0 0.0
    %1855 = vmatprep.subr.mxu0 0.0
    %1856 = vmatpush1.msra.mxu0 0.0
    %1857 = vmatprep.subr.mxu0 0.0
    %1858 = vmatpush1.msra.mxu0 0.0
    %1859 = vmatprep.subr.mxu0 0.0
    %1860 = vmatpush1.msra.mxu0 0.0
    %1861 = vmatprep.subr.mxu0 0.0
    %1862 = vmatpush1.msra.mxu0 0.0
    %1863 = vmatprep.subr.mxu0 0.0
    %1864 = vmatpush1.msra.mxu0 0.0
    %1865 = vmatprep.subr.mxu0 0.0
    %1866 = vmatpush1.msra.mxu0 0.0
    %1867 = vmatprep.subr.mxu0 0.0
    %1868 = vmatpush1.msra.mxu0 0.0
    %1869 = vmatprep.subr.mxu0 0.0
    %1870 = vmatpush1.msra.mxu0 0.0
    %1871 = vmatprep.subr.mxu0 0.0
    %1872 = vmatpush1.msra.mxu0 %v1846
    %1873 = vmatprep.subr.mxu0 0.0
    %1874 = vmatpush1.msra.mxu0 %v1845
    %1875 = vmatprep.subr.mxu0 0.0
    %1876 = vmatpush1.msra.mxu0 %v1844
    %1877 = vmatprep.subr.mxu0 0.0
    %1878 = vmatpush1.msra.mxu0 %v1843
    %1879 = vmatprep.subr.mxu0 0.0
    %1880 = vmatpush2.msra.mxu0 0.0
    %1881 = vmatprep.subr.mxu0 0.0
    %1882 = vmatpush2.msra.mxu0 0.0
    %1883 = vmatprep.subr.mxu0 0.0
    %1884 = vmatpush2.msra.mxu0 0.0
    %1885 = vmatprep.subr.mxu0 0.0
    %1886 = vmatpush2.msra.mxu0 0.0
    %1887 = vmatprep.subr.mxu0 0.0
    %1888 = vmatpush2.msra.mxu0 0.0
    %1889 = vmatprep.subr.mxu0 0.0
    %1890 = vmatpush2.msra.mxu0 0.0
    %1891 = vmatprep.subr.mxu0 0.0
    %1892 = vmatpush2.msra.mxu0 0.0
    %1893 = vmatprep.subr.mxu0 0.0
    %1894 = vmatpush2.msra.mxu0 0.0
    %1895 = vmatprep.subr.mxu0 0.0
    %1896 = vmatpush2.msra.mxu0 0.0
    %1897 = vmatprep.subr.mxu0 0.0
    %1898 = vmatpush2.msra.mxu0 0.0
    %1899 = vmatprep.subr.mxu0 0.0
    %1900 = vmatpush2.msra.mxu0 0.0
    %1901 = vmatprep.subr.mxu0 0.0
    %1902 = vmatpush2.msra.mxu0 0.0
    %1903 = vmatprep.subr.mxu0 0.0
    %1904 = vmatpush2.msra.mxu0 0.0
    %1905 = vmatprep.subr.mxu0 0.0
    %1906 = vmatpush2.msra.mxu0 0.0
    %1907 = vmatprep.subr.mxu0 0.0
    %1908 = vmatpush2.msra.mxu0 0.0
    %1909 = vmatprep.subr.mxu0 0.0
    %1910 = vmatpush2.msra.mxu0 0.0
    %1911 = vmatprep.mubr.f32.mxu0 0.0
    %1912 = vmatmul.mubr.f32.gmra.mxu0 %v1235
    %v1913 = vpop.f32.mrf.mxu0
    %v1914 = vadd.f32 0.0, %v1913
    %v1915 = vpop.f32.mrf.mxu0
    %1916 = vmatprep.mubr.f32.mxu0 0.0
    %1917 = vmatmul.mubr.f32.gmra.mxu0 %v1238
    %v1918 = vpop.f32.mrf.mxu0
    %v1919 = vadd.f32 0.0, %v1918
    %v1920 = vpop.f32.mrf.mxu0
    %1921 = vdwg.mxu0
    %1922 = vmatprep.subr.mxu0 0.0
    %1923 = vmatpush1.msra.mxu0 0.0
    %1924 = vmatprep.subr.mxu0 0.0
    %1925 = vmatpush1.msra.mxu0 0.0
    %1926 = vmatprep.subr.mxu0 0.0
    %1927 = vmatpush1.msra.mxu0 0.0
    %1928 = vmatprep.subr.mxu0 0.0
    %1929 = vmatpush1.msra.mxu0 0.0
    %1930 = vmatprep.subr.mxu0 0.0
    %1931 = vmatpush1.msra.mxu0 0.0
    %1932 = vmatprep.subr.mxu0 0.0
    %1933 = vmatpush1.msra.mxu0 0.0
    %1934 = vmatprep.subr.mxu0 0.0
    %1935 = vmatpush1.msra.mxu0 0.0
    %1936 = vmatprep.subr.mxu0 0.0
    %1937 = vmatpush1.msra.mxu0 0.0
    %1938 = vmatprep.subr.mxu0 0.0
    %1939 = vmatpush1.msra.mxu0 0.0
    %1940 = vmatprep.subr.mxu0 0.0
    %1941 = vmatpush1.msra.mxu0 0.0
    %1942 = vmatprep.subr.mxu0 0.0
    %1943 = vmatpush1.msra.mxu0 0.0
    %1944 = vmatprep.subr.mxu0 0.0
    %1945 = vmatpush1.msra.mxu0 0.0
    %1946 = vmatprep.subr.mxu0 0.0
    %1947 = vmatpush1.msra.mxu0 %v1841
    %1948 = vmatprep.subr.mxu0 0.0
    %1949 = vmatpush1.msra.mxu0 %v1840
    %1950 = vmatprep.subr.mxu0 0.0
    %1951 = vmatpush1.msra.mxu0 %v1839
    %1952 = vmatprep.subr.mxu0 0.0
    %1953 = vmatpush1.msra.mxu0 %v1838
    %1954 = vmatprep.subr.mxu0 0.0
    %1955 = vmatpush2.msra.mxu0 0.0
    %1956 = vmatprep.subr.mxu0 0.0
    %1957 = vmatpush2.msra.mxu0 0.0
    %1958 = vmatprep.subr.mxu0 0.0
    %1959 = vmatpush2.msra.mxu0 0.0
    %1960 = vmatprep.subr.mxu0 0.0
    %1961 = vmatpush2.msra.mxu0 0.0
    %1962 = vmatprep.subr.mxu0 0.0
    %1963 = vmatpush2.msra.mxu0 0.0
    %1964 = vmatprep.subr.mxu0 0.0
    %1965 = vmatpush2.msra.mxu0 0.0
    %1966 = vmatprep.subr.mxu0 0.0
    %1967 = vmatpush2.msra.mxu0 0.0
    %1968 = vmatprep.subr.mxu0 0.0
    %1969 = vmatpush2.msra.mxu0 0.0
    %1970 = vmatprep.subr.mxu0 0.0
    %1971 = vmatpush2.msra.mxu0 0.0
    %1972 = vmatprep.subr.mxu0 0.0
    %1973 = vmatpush2.msra.mxu0 0.0
    %1974 = vmatprep.subr.mxu0 0.0
    %1975 = vmatpush2.msra.mxu0 0.0
    %1976 = vmatprep.subr.mxu0 0.0
    %1977 = vmatpush2.msra.mxu0 0.0
    %1978 = vmatprep.subr.mxu0 0.0
    %1979 = vmatpush2.msra.mxu0 0.0
    %1980 = vmatprep.subr.mxu0 0.0
    %1981 = vmatpush2.msra.mxu0 0.0
    %1982 = vmatprep.subr.mxu0 0.0
    %1983 = vmatpush2.msra.mxu0 0.0
    %1984 = vmatprep.subr.mxu0 0.0
    %1985 = vmatpush2.msra.mxu0 0.0
    %1986 = vmatprep.mubr.f32.mxu0 0.0
    %1987 = vmatmul.mubr.f32.gmra.mxu0 %v1316
    %v1988 = vpop.f32.mrf.mxu0
    %v1989 = vadd.f32 %v1914, %v1988
    %v1990 = vpop.f32.mrf.mxu0
    %1991 = vmatprep.mubr.f32.mxu0 0.0
    %1992 = vmatmul.mubr.f32.gmra.mxu0 %v1319
    %v1993 = vpop.f32.mrf.mxu0
    %v1994 = vadd.f32 %v1919, %v1993
    %v1995 = vpop.f32.mrf.mxu0
    %1996 = vdwg.mxu0
    %s1997 = scalar_lea.vmem %s12, 32
    %v1998 = vld [vmem:[%s1997] sm:$0xff]
    %v1999 = vld [vmem:[%s1997 + $0x8] sm:$0xff]
    %v2000 = vld [vmem:[%s1997 + $0x10] sm:$0xff]
    %v2001 = vld [vmem:[%s1997 + $0x18] sm:$0xff]
    %s2002 = scalar_lea.vmem %s13, 32
    %v2003 = vld [vmem:[%s2002] sm:$0xff]
    %v2004 = vld [vmem:[%s2002 + $0x8] sm:$0xff]
    %v2005 = vld [vmem:[%s2002 + $0x10] sm:$0xff]
    %v2006 = vld [vmem:[%s2002 + $0x18] sm:$0xff]
    %v2008 = vsel %vm92, %v1989, 0
    %v2011 = vsel %vm92, %v1994, 0
    %2013 = vmatprep.subr.mxu0 0.0
    %2014 = vmatpush1.msra.mxu0 0.0
    %2015 = vmatprep.subr.mxu0 0.0
    %2016 = vmatpush1.msra.mxu0 0.0
    %2017 = vmatprep.subr.mxu0 0.0
    %2018 = vmatpush1.msra.mxu0 0.0
    %2019 = vmatprep.subr.mxu0 0.0
    %2020 = vmatpush1.msra.mxu0 0.0
    %2021 = vmatprep.subr.mxu0 0.0
    %2022 = vmatpush1.msra.mxu0 0.0
    %2023 = vmatprep.subr.mxu0 0.0
    %2024 = vmatpush1.msra.mxu0 0.0
    %2025 = vmatprep.subr.mxu0 0.0
    %2026 = vmatpush1.msra.mxu0 0.0
    %2027 = vmatprep.subr.mxu0 0.0
    %2028 = vmatpush1.msra.mxu0 0.0
    %2029 = vmatprep.subr.mxu0 0.0
    %2030 = vmatpush1.msra.mxu0 0.0
    %2031 = vmatprep.subr.mxu0 0.0
    %2032 = vmatpush1.msra.mxu0 0.0
    %2033 = vmatprep.subr.mxu0 0.0
    %2034 = vmatpush1.msra.mxu0 0.0
    %2035 = vmatprep.subr.mxu0 0.0
    %2036 = vmatpush1.msra.mxu0 0.0
    %2037 = vmatprep.subr.mxu0 0.0
    %2038 = vmatpush1.msra.mxu0 %v2001
    %2039 = vmatprep.subr.mxu0 0.0
    %2040 = vmatpush1.msra.mxu0 %v2000
    %2041 = vmatprep.subr.mxu0 0.0
    %2042 = vmatpush1.msra.mxu0 %v1999
    %2043 = vmatprep.subr.mxu0 0.0
    %2044 = vmatpush1.msra.mxu0 %v1998
    %2045 = vmatprep.subr.mxu0 0.0
    %2046 = vmatpush2.msra.mxu0 0.0
    %2047 = vmatprep.subr.mxu0 0.0
    %2048 = vmatpush2.msra.mxu0 0.0
    %2049 = vmatprep.subr.mxu0 0.0
    %2050 = vmatpush2.msra.mxu0 0.0
    %2051 = vmatprep.subr.mxu0 0.0
    %2052 = vmatpush2.msra.mxu0 0.0
    %2053 = vmatprep.subr.mxu0 0.0
    %2054 = vmatpush2.msra.mxu0 0.0
    %2055 = vmatprep.subr.mxu0 0.0
    %2056 = vmatpush2.msra.mxu0 0.0
    %2057 = vmatprep.subr.mxu0 0.0
    %2058 = vmatpush2.msra.mxu0 0.0
    %2059 = vmatprep.subr.mxu0 0.0
    %2060 = vmatpush2.msra.mxu0 0.0
    %2061 = vmatprep.subr.mxu0 0.0
    %2062 = vmatpush2.msra.mxu0 0.0
    %2063 = vmatprep.subr.mxu0 0.0
    %2064 = vmatpush2.msra.mxu0 0.0
    %2065 = vmatprep.subr.mxu0 0.0
    %2066 = vmatpush2.msra.mxu0 0.0
    %2067 = vmatprep.subr.mxu0 0.0
    %2068 = vmatpush2.msra.mxu0 0.0
    %2069 = vmatprep.subr.mxu0 0.0
    %2070 = vmatpush2.msra.mxu0 0.0
    %2071 = vmatprep.subr.mxu0 0.0
    %2072 = vmatpush2.msra.mxu0 0.0
    %2073 = vmatprep.subr.mxu0 0.0
    %2074 = vmatpush2.msra.mxu0 0.0
    %2075 = vmatprep.subr.mxu0 0.0
    %2076 = vmatpush2.msra.mxu0 0.0
    %2077 = vmatprep.mubr.f32.mxu0 0.0
    %2078 = vmatmul.mubr.f32.gmra.mxu0 %v2008
    %v2079 = vpop.f32.mrf.mxu0
    %v2080 = vadd.f32 0.0, %v2079
    %v2081 = vpop.f32.mrf.mxu0
    %2082 = vmatprep.mubr.f32.mxu0 0.0
    %2083 = vmatmul.mubr.f32.gmra.mxu0 %v2011
    %v2084 = vpop.f32.mrf.mxu0
    %v2085 = vadd.f32 0.0, %v2084
    %v2086 = vpop.f32.mrf.mxu0
    %2087 = vdwg.mxu0
    %2088 = vmatprep.subr.mxu0 0.0
    %2089 = vmatpush1.msra.mxu0 0.0
    %2090 = vmatprep.subr.mxu0 0.0
    %2091 = vmatpush1.msra.mxu0 0.0
    %2092 = vmatprep.subr.mxu0 0.0
    %2093 = vmatpush1.msra.mxu0 0.0
    %2094 = vmatprep.subr.mxu0 0.0
    %2095 = vmatpush1.msra.mxu0 0.0
    %2096 = vmatprep.subr.mxu0 0.0
    %2097 = vmatpush1.msra.mxu0 0.0
    %2098 = vmatprep.subr.mxu0 0.0
    %2099 = vmatpush1.msra.mxu0 0.0
    %2100 = vmatprep.subr.mxu0 0.0
    %2101 = vmatpush1.msra.mxu0 0.0
    %2102 = vmatprep.subr.mxu0 0.0
    %2103 = vmatpush1.msra.mxu0 0.0
    %2104 = vmatprep.subr.mxu0 0.0
    %2105 = vmatpush1.msra.mxu0 0.0
    %2106 = vmatprep.subr.mxu0 0.0
    %2107 = vmatpush1.msra.mxu0 0.0
    %2108 = vmatprep.subr.mxu0 0.0
    %2109 = vmatpush1.msra.mxu0 0.0
    %2110 = vmatprep.subr.mxu0 0.0
    %2111 = vmatpush1.msra.mxu0 0.0
    %2112 = vmatprep.subr.mxu0 0.0
    %2113 = vmatpush1.msra.mxu0 %v2006
    %2114 = vmatprep.subr.mxu0 0.0
    %2115 = vmatpush1.msra.mxu0 %v2005
    %2116 = vmatprep.subr.mxu0 0.0
    %2117 = vmatpush1.msra.mxu0 %v2004
    %2118 = vmatprep.subr.mxu0 0.0
    %2119 = vmatpush1.msra.mxu0 %v2003
    %2120 = vmatprep.subr.mxu0 0.0
    %2121 = vmatpush2.msra.mxu0 0.0
    %2122 = vmatprep.subr.mxu0 0.0
    %2123 = vmatpush2.msra.mxu0 0.0
    %2124 = vmatprep.subr.mxu0 0.0
    %2125 = vmatpush2.msra.mxu0 0.0
    %2126 = vmatprep.subr.mxu0 0.0
    %2127 = vmatpush2.msra.mxu0 0.0
    %2128 = vmatprep.subr.mxu0 0.0
    %2129 = vmatpush2.msra.mxu0 0.0
    %2130 = vmatprep.subr.mxu0 0.0
    %2131 = vmatpush2.msra.mxu0 0.0
    %2132 = vmatprep.subr.mxu0 0.0
    %2133 = vmatpush2.msra.mxu0 0.0
    %2134 = vmatprep.subr.mxu0 0.0
    %2135 = vmatpush2.msra.mxu0 0.0
    %2136 = vmatprep.subr.mxu0 0.0
    %2137 = vmatpush2.msra.mxu0 0.0
    %2138 = vmatprep.subr.mxu0 0.0
    %2139 = vmatpush2.msra.mxu0 0.0
    %2140 = vmatprep.subr.mxu0 0.0
    %2141 = vmatpush2.msra.mxu0 0.0
    %2142 = vmatprep.subr.mxu0 0.0
    %2143 = vmatpush2.msra.mxu0 0.0
    %2144 = vmatprep.subr.mxu0 0.0
    %2145 = vmatpush2.msra.mxu0 0.0
    %2146 = vmatprep.subr.mxu0 0.0
    %2147 = vmatpush2.msra.mxu0 0.0
    %2148 = vmatprep.subr.mxu0 0.0
    %2149 = vmatpush2.msra.mxu0 0.0
    %2150 = vmatprep.subr.mxu0 0.0
    %2151 = vmatpush2.msra.mxu0 0.0
    %2152 = vmatprep.mubr.f32.mxu0 0.0
    %2153 = vmatmul.mubr.f32.gmra.mxu0 %v2008
    %v2154 = vpop.f32.mrf.mxu0
    %v2155 = vadd.f32 0.0, %v2154
    %v2156 = vpop.f32.mrf.mxu0
    %2157 = vmatprep.mubr.f32.mxu0 0.0
    %2158 = vmatmul.mubr.f32.gmra.mxu0 %v2011
    %v2159 = vpop.f32.mrf.mxu0
    %v2160 = vadd.f32 0.0, %v2159
    %v2161 = vpop.f32.mrf.mxu0
    %2162 = vdwg.mxu0
    %2163 = vxpose.xlu0.b32.start [1/16] %v2080, 128
    %2164 = vxpose.xlu0.b32.cont [2/16] 0.0, 128
    %2165 = vxpose.xlu0.b32.cont [3/16] 0.0, 128
    %2166 = vxpose.xlu0.b32.cont [4/16] 0.0, 128
    %2167 = vxpose.xlu0.b32.cont [5/16] 0.0, 128
    %2168 = vxpose.xlu0.b32.cont [6/16] 0.0, 128
    %2169 = vxpose.xlu0.b32.cont [7/16] 0.0, 128
    %2170 = vxpose.xlu0.b32.cont [8/16] 0.0, 128
    %2171 = vxpose.xlu0.b32.cont [9/16] 0.0, 128
    %2172 = vxpose.xlu0.b32.cont [10/16] 0.0, 128
    %2173 = vxpose.xlu0.b32.cont [11/16] 0.0, 128
    %2174 = vxpose.xlu0.b32.cont [12/16] 0.0, 128
    %2175 = vxpose.xlu0.b32.cont [13/16] 0.0, 128
    %2176 = vxpose.xlu0.b32.cont [14/16] 0.0, 128
    %2177 = vxpose.xlu0.b32.cont [15/16] 0.0, 128
    %2178 = vxpose.xlu0.b32.end [16/16] 0.0, 128
    %v2179 = vpop.trf.xlu0
    %v2180 = vpop.trf.xlu0
    %v2181 = vpop.trf.xlu0
    %v2182 = vpop.trf.xlu0
    %v2183 = vpop.trf.xlu0
    %v2184 = vpop.trf.xlu0
    %v2185 = vpop.trf.xlu0
    %v2186 = vpop.trf.xlu0
    %v2187 = vpop.trf.xlu0
    %v2188 = vpop.trf.xlu0
    %v2189 = vpop.trf.xlu0
    %v2190 = vpop.trf.xlu0
    %v2191 = vpop.trf.xlu0
    %v2192 = vpop.trf.xlu0
    %v2193 = vpop.trf.xlu0
    %v2194 = vpop.trf.xlu0
    %2196 = vset.pattern.permute.xlu0 0
    %2197 = vperm.xlu0 %2196, %v2155
    %v2198 = vpop.permute.xlu0 %2197
    %v2200 = vlaneseq
    %v2201 = vshrl.u32 %v2200, 7
    %v2202 = vsub.s32 0, %v2201
    %v2203 = vrot.slane %v2179, %v2202
    %v2204 = vadd.f32 %v2198, %v2203
    %vm2205 = vcmp.gt.f32.partialorder %v2204, 0.0
    %v2206 = vmul.f32 %v2204, 0.2
    %v2207 = vsel %vm2205, %v2204, %v2206
    %v2208 = vadd.f32 %v2207, %v77
    %v2209 = vsel %vm469, %v2208, -inf
    %2210 = vmax.xlane.f32.xlu0 %v2209
    %v2211 = vpop.xlane.xlu0 %2210
    %v2212 = vsub.f32 %v2208, %v2211
    %v2213 = vmul.f32 %v2212, 1.442695
    %v2214 = vpow.pop %v2213
    %v2215 = vsel %vm74, %v2214, 0.0
    %v2216 = vsel %vm469, %v2215, 0.0
    %2217 = vadd.xlane.f32.xlu0 %v2216
    %v2218 = vpop.xlane.xlu0 %2217
    %v2219 = vrcp.pop %v2218
    %v2220 = vmul.f32 %v2215, %v2219
    %v2222 = vsel %vm469, %v2220, 0
    %2224 = vmatprep.subr.mxu0 0.0
    %2225 = vmatpush1.msra.mxu0 0.0
    %2226 = vmatprep.subr.mxu0 0.0
    %2227 = vmatpush1.msra.mxu0 0.0
    %2228 = vmatprep.subr.mxu0 0.0
    %2229 = vmatpush1.msra.mxu0 0.0
    %2230 = vmatprep.subr.mxu0 0.0
    %2231 = vmatpush1.msra.mxu0 0.0
    %2232 = vmatprep.subr.mxu0 0.0
    %2233 = vmatpush1.msra.mxu0 0.0
    %2234 = vmatprep.subr.mxu0 0.0
    %2235 = vmatpush1.msra.mxu0 0.0
    %2236 = vmatprep.subr.mxu0 0.0
    %2237 = vmatpush1.msra.mxu0 0.0
    %2238 = vmatprep.subr.mxu0 0.0
    %2239 = vmatpush1.msra.mxu0 0.0
    %2240 = vmatprep.subr.mxu0 0.0
    %2241 = vmatpush1.msra.mxu0 0.0
    %2242 = vmatprep.subr.mxu0 0.0
    %2243 = vmatpush1.msra.mxu0 0.0
    %2244 = vmatprep.subr.mxu0 0.0
    %2245 = vmatpush1.msra.mxu0 0.0
    %2246 = vmatprep.subr.mxu0 0.0
    %2247 = vmatpush1.msra.mxu0 0.0
    %2248 = vmatprep.subr.mxu0 0.0
    %2249 = vmatpush1.msra.mxu0 0.0
    %2250 = vmatprep.subr.mxu0 0.0
    %2251 = vmatpush1.msra.mxu0 0.0
    %2252 = vmatprep.subr.mxu0 0.0
    %2253 = vmatpush1.msra.mxu0 0.0
    %2254 = vmatprep.subr.mxu0 0.0
    %2255 = vmatpush1.msra.mxu0 %v1989
    %2256 = vmatprep.subr.mxu0 0.0
    %2257 = vmatpush2.msra.mxu0 0.0
    %2258 = vmatprep.subr.mxu0 0.0
    %2259 = vmatpush2.msra.mxu0 0.0
    %2260 = vmatprep.subr.mxu0 0.0
    %2261 = vmatpush2.msra.mxu0 0.0
    %2262 = vmatprep.subr.mxu0 0.0
    %2263 = vmatpush2.msra.mxu0 0.0
    %2264 = vmatprep.subr.mxu0 0.0
    %2265 = vmatpush2.msra.mxu0 0.0
    %2266 = vmatprep.subr.mxu0 0.0
    %2267 = vmatpush2.msra.mxu0 0.0
    %2268 = vmatprep.subr.mxu0 0.0
    %2269 = vmatpush2.msra.mxu0 0.0
    %2270 = vmatprep.subr.mxu0 0.0
    %2271 = vmatpush2.msra.mxu0 0.0
    %2272 = vmatprep.subr.mxu0 0.0
    %2273 = vmatpush2.msra.mxu0 0.0
    %2274 = vmatprep.subr.mxu0 0.0
    %2275 = vmatpush2.msra.mxu0 0.0
    %2276 = vmatprep.subr.mxu0 0.0
    %2277 = vmatpush2.msra.mxu0 0.0
    %2278 = vmatprep.subr.mxu0 0.0
    %2279 = vmatpush2.msra.mxu0 0.0
    %2280 = vmatprep.subr.mxu0 0.0
    %2281 = vmatpush2.msra.mxu0 0.0
    %2282 = vmatprep.subr.mxu0 0.0
    %2283 = vmatpush2.msra.mxu0 0.0
    %2284 = vmatprep.subr.mxu0 0.0
    %2285 = vmatpush2.msra.mxu0 0.0
    %2286 = vmatprep.subr.mxu0 0.0
    %2287 = vmatpush2.msra.mxu0 0.0
    %2288 = vmatprep.mubr.f32.mxu0 0.0
    %2289 = vmatmul.mubr.f32.gmra.mxu0 %v2222
    %v2290 = vpop.f32.mrf.mxu0
    %v2291 = vadd.f32 0.0, %v2290
    %v2292 = vpop.f32.mrf.mxu0
    %2293 = vdwg.mxu0
    %2294 = vxpose.xlu0.b32.start [1/16] %v2085, 128
    %2295 = vxpose.xlu0.b32.cont [2/16] 0.0, 128
    %2296 = vxpose.xlu0.b32.cont [3/16] 0.0, 128
    %2297 = vxpose.xlu0.b32.cont [4/16] 0.0, 128
    %2298 = vxpose.xlu0.b32.cont [5/16] 0.0, 128
    %2299 = vxpose.xlu0.b32.cont [6/16] 0.0, 128
    %2300 = vxpose.xlu0.b32.cont [7/16] 0.0, 128
    %2301 = vxpose.xlu0.b32.cont [8/16] 0.0, 128
    %2302 = vxpose.xlu0.b32.cont [9/16] 0.0, 128
    %2303 = vxpose.xlu0.b32.cont [10/16] 0.0, 128
    %2304 = vxpose.xlu0.b32.cont [11/16] 0.0, 128
    %2305 = vxpose.xlu0.b32.cont [12/16] 0.0, 128
    %2306 = vxpose.xlu0.b32.cont [13/16] 0.0, 128
    %2307 = vxpose.xlu0.b32.cont [14/16] 0.0, 128
    %2308 = vxpose.xlu0.b32.cont [15/16] 0.0, 128
    %2309 = vxpose.xlu0.b32.end [16/16] 0.0, 128
    %v2310 = vpop.trf.xlu0
    %v2311 = vpop.trf.xlu0
    %v2312 = vpop.trf.xlu0
    %v2313 = vpop.trf.xlu0
    %v2314 = vpop.trf.xlu0
    %v2315 = vpop.trf.xlu0
    %v2316 = vpop.trf.xlu0
    %v2317 = vpop.trf.xlu0
    %v2318 = vpop.trf.xlu0
    %v2319 = vpop.trf.xlu0
    %v2320 = vpop.trf.xlu0
    %v2321 = vpop.trf.xlu0
    %v2322 = vpop.trf.xlu0
    %v2323 = vpop.trf.xlu0
    %v2324 = vpop.trf.xlu0
    %v2325 = vpop.trf.xlu0
    %2327 = vset.pattern.permute.xlu0 0
    %2328 = vperm.xlu0 %2327, %v2160
    %v2329 = vpop.permute.xlu0 %2328
    %v2331 = vlaneseq
    %v2332 = vshrl.u32 %v2331, 7
    %v2333 = vsub.s32 0, %v2332
    %v2334 = vrot.slane %v2310, %v2333
    %v2335 = vadd.f32 %v2329, %v2334
    %vm2336 = vcmp.gt.f32.partialorder %v2335, 0.0
    %v2337 = vmul.f32 %v2335, 0.2
    %v2338 = vsel %vm2336, %v2335, %v2337
    %v2339 = vadd.f32 %v2338, %v78
    %v2340 = vsel %vm469, %v2339, -inf
    %2341 = vmax.xlane.f32.xlu0 %v2340
    %v2342 = vpop.xlane.xlu0 %2341
    %v2343 = vsub.f32 %v2339, %v2342
    %v2344 = vmul.f32 %v2343, 1.442695
    %v2345 = vpow.pop %v2344
    %v2346 = vsel %vm76, %v2345, 0.0
    %v2347 = vsel %vm469, %v2346, 0.0
    %2348 = vadd.xlane.f32.xlu0 %v2347
    %v2349 = vpop.xlane.xlu0 %2348
    %v2350 = vrcp.pop %v2349
    %v2351 = vmul.f32 %v2346, %v2350
    %v2353 = vsel %vm469, %v2351, 0
    %2355 = vmatprep.subr.mxu0 0.0
    %2356 = vmatpush1.msra.mxu0 0.0
    %2357 = vmatprep.subr.mxu0 0.0
    %2358 = vmatpush1.msra.mxu0 0.0
    %2359 = vmatprep.subr.mxu0 0.0
    %2360 = vmatpush1.msra.mxu0 0.0
    %2361 = vmatprep.subr.mxu0 0.0
    %2362 = vmatpush1.msra.mxu0 0.0
    %2363 = vmatprep.subr.mxu0 0.0
    %2364 = vmatpush1.msra.mxu0 0.0
    %2365 = vmatprep.subr.mxu0 0.0
    %2366 = vmatpush1.msra.mxu0 0.0
    %2367 = vmatprep.subr.mxu0 0.0
    %2368 = vmatpush1.msra.mxu0 0.0
    %2369 = vmatprep.subr.mxu0 0.0
    %2370 = vmatpush1.msra.mxu0 0.0
    %2371 = vmatprep.subr.mxu0 0.0
    %2372 = vmatpush1.msra.mxu0 0.0
    %2373 = vmatprep.subr.mxu0 0.0
    %2374 = vmatpush1.msra.mxu0 0.0
    %2375 = vmatprep.subr.mxu0 0.0
    %2376 = vmatpush1.msra.mxu0 0.0
    %2377 = vmatprep.subr.mxu0 0.0
    %2378 = vmatpush1.msra.mxu0 0.0
    %2379 = vmatprep.subr.mxu0 0.0
    %2380 = vmatpush1.msra.mxu0 0.0
    %2381 = vmatprep.subr.mxu0 0.0
    %2382 = vmatpush1.msra.mxu0 0.0
    %2383 = vmatprep.subr.mxu0 0.0
    %2384 = vmatpush1.msra.mxu0 0.0
    %2385 = vmatprep.subr.mxu0 0.0
    %2386 = vmatpush1.msra.mxu0 %v1994
    %2387 = vmatprep.subr.mxu0 0.0
    %2388 = vmatpush2.msra.mxu0 0.0
    %2389 = vmatprep.subr.mxu0 0.0
    %2390 = vmatpush2.msra.mxu0 0.0
    %2391 = vmatprep.subr.mxu0 0.0
    %2392 = vmatpush2.msra.mxu0 0.0
    %2393 = vmatprep.subr.mxu0 0.0
    %2394 = vmatpush2.msra.mxu0 0.0
    %2395 = vmatprep.subr.mxu0 0.0
    %2396 = vmatpush2.msra.mxu0 0.0
    %2397 = vmatprep.subr.mxu0 0.0
    %2398 = vmatpush2.msra.mxu0 0.0
    %2399 = vmatprep.subr.mxu0 0.0
    %2400 = vmatpush2.msra.mxu0 0.0
    %2401 = vmatprep.subr.mxu0 0.0
    %2402 = vmatpush2.msra.mxu0 0.0
    %2403 = vmatprep.subr.mxu0 0.0
    %2404 = vmatpush2.msra.mxu0 0.0
    %2405 = vmatprep.subr.mxu0 0.0
    %2406 = vmatpush2.msra.mxu0 0.0
    %2407 = vmatprep.subr.mxu0 0.0
    %2408 = vmatpush2.msra.mxu0 0.0
    %2409 = vmatprep.subr.mxu0 0.0
    %2410 = vmatpush2.msra.mxu0 0.0
    %2411 = vmatprep.subr.mxu0 0.0
    %2412 = vmatpush2.msra.mxu0 0.0
    %2413 = vmatprep.subr.mxu0 0.0
    %2414 = vmatpush2.msra.mxu0 0.0
    %2415 = vmatprep.subr.mxu0 0.0
    %2416 = vmatpush2.msra.mxu0 0.0
    %2417 = vmatprep.subr.mxu0 0.0
    %2418 = vmatpush2.msra.mxu0 0.0
    %2419 = vmatprep.mubr.f32.mxu0 0.0
    %2420 = vmatmul.mubr.f32.gmra.mxu0 %v2353
    %v2421 = vpop.f32.mrf.mxu0
    %v2422 = vadd.f32 0.0, %v2421
    %v2423 = vpop.f32.mrf.mxu0
    %2424 = vdwg.mxu0
    %s2425 = scalar_lea.vmem %s14, 1
    %v2426 = vld [vmem:[%s2425] sm:$0x1]
    %v2428 = vlaneseq
    %v2429 = vshrl.u32 %v2428, 7
    %v2430 = vsub.s32 0, %v2429
    %v2431 = vrot.slane %v2426, %v2430
    %v2433 = vadd.f32 %v2291, %v2431
    %v2434 = vadd.f32 %v2422, %v2431
    %vm2435 = vcmp.gt.f32.partialorder %v2433, 0.0
    %vm2436 = vcmp.gt.f32.partialorder %v2434, 0.0
    %v2437 = vmul.f32 %v2433, 0.01
    %v2438 = vmul.f32 %v2434, 0.01
    %v2439 = vsel %vm2435, %v2433, %v2437
    %v2440 = vsel %vm2436, %v2434, %v2438
    %v2441 = vld [vmem:[%s15] sm:$0xff]
    %v2442 = vld [vmem:[%s15 + $0x8] sm:$0xff]
    %v2443 = vld [vmem:[%s15 + $0x10] sm:$0xff]
    %v2444 = vld [vmem:[%s15 + $0x18] sm:$0xff]
    %s2445 = scalar_lea.vmem %s15, 32
    %v2446 = vld [vmem:[%s2445] sm:$0xff]
    %v2447 = vld [vmem:[%s2445 + $0x8] sm:$0xff]
    %v2448 = vld [vmem:[%s2445 + $0x10] sm:$0xff]
    %v2449 = vld [vmem:[%s2445 + $0x18] sm:$0xff]
    %v2451 = vsel %vm92, %v2439, 0
    %v2454 = vsel %vm92, %v2440, 0
    %2456 = vmatprep.subr.mxu0 0.0
    %2457 = vmatpush1.msra.mxu0 0.0
    %2458 = vmatprep.subr.mxu0 0.0
    %2459 = vmatpush1.msra.mxu0 0.0
    %2460 = vmatprep.subr.mxu0 0.0
    %2461 = vmatpush1.msra.mxu0 0.0
    %2462 = vmatprep.subr.mxu0 0.0
    %2463 = vmatpush1.msra.mxu0 0.0
    %2464 = vmatprep.subr.mxu0 0.0
    %2465 = vmatpush1.msra.mxu0 0.0
    %2466 = vmatprep.subr.mxu0 0.0
    %2467 = vmatpush1.msra.mxu0 0.0
    %2468 = vmatprep.subr.mxu0 0.0
    %2469 = vmatpush1.msra.mxu0 0.0
    %2470 = vmatprep.subr.mxu0 0.0
    %2471 = vmatpush1.msra.mxu0 0.0
    %2472 = vmatprep.subr.mxu0 0.0
    %2473 = vmatpush1.msra.mxu0 0.0
    %2474 = vmatprep.subr.mxu0 0.0
    %2475 = vmatpush1.msra.mxu0 0.0
    %2476 = vmatprep.subr.mxu0 0.0
    %2477 = vmatpush1.msra.mxu0 0.0
    %2478 = vmatprep.subr.mxu0 0.0
    %2479 = vmatpush1.msra.mxu0 0.0
    %2480 = vmatprep.subr.mxu0 0.0
    %2481 = vmatpush1.msra.mxu0 %v2449
    %2482 = vmatprep.subr.mxu0 0.0
    %2483 = vmatpush1.msra.mxu0 %v2448
    %2484 = vmatprep.subr.mxu0 0.0
    %2485 = vmatpush1.msra.mxu0 %v2447
    %2486 = vmatprep.subr.mxu0 0.0
    %2487 = vmatpush1.msra.mxu0 %v2446
    %2488 = vmatprep.subr.mxu0 0.0
    %2489 = vmatpush2.msra.mxu0 0.0
    %2490 = vmatprep.subr.mxu0 0.0
    %2491 = vmatpush2.msra.mxu0 0.0
    %2492 = vmatprep.subr.mxu0 0.0
    %2493 = vmatpush2.msra.mxu0 0.0
    %2494 = vmatprep.subr.mxu0 0.0
    %2495 = vmatpush2.msra.mxu0 0.0
    %2496 = vmatprep.subr.mxu0 0.0
    %2497 = vmatpush2.msra.mxu0 0.0
    %2498 = vmatprep.subr.mxu0 0.0
    %2499 = vmatpush2.msra.mxu0 0.0
    %2500 = vmatprep.subr.mxu0 0.0
    %2501 = vmatpush2.msra.mxu0 0.0
    %2502 = vmatprep.subr.mxu0 0.0
    %2503 = vmatpush2.msra.mxu0 0.0
    %2504 = vmatprep.subr.mxu0 0.0
    %2505 = vmatpush2.msra.mxu0 0.0
    %2506 = vmatprep.subr.mxu0 0.0
    %2507 = vmatpush2.msra.mxu0 0.0
    %2508 = vmatprep.subr.mxu0 0.0
    %2509 = vmatpush2.msra.mxu0 0.0
    %2510 = vmatprep.subr.mxu0 0.0
    %2511 = vmatpush2.msra.mxu0 0.0
    %2512 = vmatprep.subr.mxu0 0.0
    %2513 = vmatpush2.msra.mxu0 0.0
    %2514 = vmatprep.subr.mxu0 0.0
    %2515 = vmatpush2.msra.mxu0 0.0
    %2516 = vmatprep.subr.mxu0 0.0
    %2517 = vmatpush2.msra.mxu0 0.0
    %2518 = vmatprep.subr.mxu0 0.0
    %2519 = vmatpush2.msra.mxu0 0.0
    %2520 = vmatprep.mubr.f32.mxu0 0.0
    %2521 = vmatmul.mubr.f32.gmra.mxu0 %v2451
    %v2522 = vpop.f32.mrf.mxu0
    %v2523 = vadd.f32 0.0, %v2522
    %v2524 = vpop.f32.mrf.mxu0
    %2525 = vmatprep.mubr.f32.mxu0 0.0
    %2526 = vmatmul.mubr.f32.gmra.mxu0 %v2454
    %v2527 = vpop.f32.mrf.mxu0
    %v2528 = vadd.f32 0.0, %v2527
    %v2529 = vpop.f32.mrf.mxu0
    %2530 = vdwg.mxu0
    %v2532 = vsel %vm92, %v1835, 0
    %v2535 = vsel %vm92, %v1836, 0
    %2537 = vmatprep.subr.mxu0 0.0
    %2538 = vmatpush1.msra.mxu0 0.0
    %2539 = vmatprep.subr.mxu0 0.0
    %2540 = vmatpush1.msra.mxu0 0.0
    %2541 = vmatprep.subr.mxu0 0.0
    %2542 = vmatpush1.msra.mxu0 0.0
    %2543 = vmatprep.subr.mxu0 0.0
    %2544 = vmatpush1.msra.mxu0 0.0
    %2545 = vmatprep.subr.mxu0 0.0
    %2546 = vmatpush1.msra.mxu0 0.0
    %2547 = vmatprep.subr.mxu0 0.0
    %2548 = vmatpush1.msra.mxu0 0.0
    %2549 = vmatprep.subr.mxu0 0.0
    %2550 = vmatpush1.msra.mxu0 0.0
    %2551 = vmatprep.subr.mxu0 0.0
    %2552 = vmatpush1.msra.mxu0 0.0
    %2553 = vmatprep.subr.mxu0 0.0
    %2554 = vmatpush1.msra.mxu0 0.0
    %2555 = vmatprep.subr.mxu0 0.0
    %2556 = vmatpush1.msra.mxu0 0.0
    %2557 = vmatprep.subr.mxu0 0.0
    %2558 = vmatpush1.msra.mxu0 0.0
    %2559 = vmatprep.subr.mxu0 0.0
    %2560 = vmatpush1.msra.mxu0 0.0
    %2561 = vmatprep.subr.mxu0 0.0
    %2562 = vmatpush1.msra.mxu0 %v2444
    %2563 = vmatprep.subr.mxu0 0.0
    %2564 = vmatpush1.msra.mxu0 %v2443
    %2565 = vmatprep.subr.mxu0 0.0
    %2566 = vmatpush1.msra.mxu0 %v2442
    %2567 = vmatprep.subr.mxu0 0.0
    %2568 = vmatpush1.msra.mxu0 %v2441
    %2569 = vmatprep.subr.mxu0 0.0
    %2570 = vmatpush2.msra.mxu0 0.0
    %2571 = vmatprep.subr.mxu0 0.0
    %2572 = vmatpush2.msra.mxu0 0.0
    %2573 = vmatprep.subr.mxu0 0.0
    %2574 = vmatpush2.msra.mxu0 0.0
    %2575 = vmatprep.subr.mxu0 0.0
    %2576 = vmatpush2.msra.mxu0 0.0
    %2577 = vmatprep.subr.mxu0 0.0
    %2578 = vmatpush2.msra.mxu0 0.0
    %2579 = vmatprep.subr.mxu0 0.0
    %2580 = vmatpush2.msra.mxu0 0.0
    %2581 = vmatprep.subr.mxu0 0.0
    %2582 = vmatpush2.msra.mxu0 0.0
    %2583 = vmatprep.subr.mxu0 0.0
    %2584 = vmatpush2.msra.mxu0 0.0
    %2585 = vmatprep.subr.mxu0 0.0
    %2586 = vmatpush2.msra.mxu0 0.0
    %2587 = vmatprep.subr.mxu0 0.0
    %2588 = vmatpush2.msra.mxu0 0.0
    %2589 = vmatprep.subr.mxu0 0.0
    %2590 = vmatpush2.msra.mxu0 0.0
    %2591 = vmatprep.subr.mxu0 0.0
    %2592 = vmatpush2.msra.mxu0 0.0
    %2593 = vmatprep.subr.mxu0 0.0
    %2594 = vmatpush2.msra.mxu0 0.0
    %2595 = vmatprep.subr.mxu0 0.0
    %2596 = vmatpush2.msra.mxu0 0.0
    %2597 = vmatprep.subr.mxu0 0.0
    %2598 = vmatpush2.msra.mxu0 0.0
    %2599 = vmatprep.subr.mxu0 0.0
    %2600 = vmatpush2.msra.mxu0 0.0
    %2601 = vmatprep.mubr.f32.mxu0 0.0
    %2602 = vmatmul.mubr.f32.gmra.mxu0 %v2532
    %v2603 = vpop.f32.mrf.mxu0
    %v2604 = vadd.f32 %v2523, %v2603
    %v2605 = vpop.f32.mrf.mxu0
    %2606 = vmatprep.mubr.f32.mxu0 0.0
    %2607 = vmatmul.mubr.f32.gmra.mxu0 %v2535
    %v2608 = vpop.f32.mrf.mxu0
    %v2609 = vadd.f32 %v2528, %v2608
    %v2610 = vpop.f32.mrf.mxu0
    %2611 = vdwg.mxu0
    %v2612 = vld [vmem:[%s16] sm:$0xff]
    %v2613 = vld [vmem:[%s16 + $0x8] sm:$0xff]
    %v2614 = vld [vmem:[%s16 + $0x10] sm:$0xff]
    %v2615 = vld [vmem:[%s16 + $0x18] sm:$0xff]
    %v2616 = vld [vmem:[%s17] sm:$0xff]
    %v2617 = vld [vmem:[%s17 + $0x8] sm:$0xff]
    %v2618 = vld [vmem:[%s17 + $0x10] sm:$0xff]
    %v2619 = vld [vmem:[%s17 + $0x18] sm:$0xff]
    %v2621 = vsel %vm92, %v2604, 0
    %v2624 = vsel %vm92, %v2609, 0
    %2626 = vmatprep.subr.mxu0 0.0
    %2627 = vmatpush1.msra.mxu0 0.0
    %2628 = vmatprep.subr.mxu0 0.0
    %2629 = vmatpush1.msra.mxu0 0.0
    %2630 = vmatprep.subr.mxu0 0.0
    %2631 = vmatpush1.msra.mxu0 0.0
    %2632 = vmatprep.subr.mxu0 0.0
    %2633 = vmatpush1.msra.mxu0 0.0
    %2634 = vmatprep.subr.mxu0 0.0
    %2635 = vmatpush1.msra.mxu0 0.0
    %2636 = vmatprep.subr.mxu0 0.0
    %2637 = vmatpush1.msra.mxu0 0.0
    %2638 = vmatprep.subr.mxu0 0.0
    %2639 = vmatpush1.msra.mxu0 0.0
    %2640 = vmatprep.subr.mxu0 0.0
    %2641 = vmatpush1.msra.mxu0 0.0
    %2642 = vmatprep.subr.mxu0 0.0
    %2643 = vmatpush1.msra.mxu0 0.0
    %2644 = vmatprep.subr.mxu0 0.0
    %2645 = vmatpush1.msra.mxu0 0.0
    %2646 = vmatprep.subr.mxu0 0.0
    %2647 = vmatpush1.msra.mxu0 0.0
    %2648 = vmatprep.subr.mxu0 0.0
    %2649 = vmatpush1.msra.mxu0 0.0
    %2650 = vmatprep.subr.mxu0 0.0
    %2651 = vmatpush1.msra.mxu0 %v2615
    %2652 = vmatprep.subr.mxu0 0.0
    %2653 = vmatpush1.msra.mxu0 %v2614
    %2654 = vmatprep.subr.mxu0 0.0
    %2655 = vmatpush1.msra.mxu0 %v2613
    %2656 = vmatprep.subr.mxu0 0.0
    %2657 = vmatpush1.msra.mxu0 %v2612
    %2658 = vmatprep.subr.mxu0 0.0
    %2659 = vmatpush2.msra.mxu0 0.0
    %2660 = vmatprep.subr.mxu0 0.0
    %2661 = vmatpush2.msra.mxu0 0.0
    %2662 = vmatprep.subr.mxu0 0.0
    %2663 = vmatpush2.msra.mxu0 0.0
    %2664 = vmatprep.subr.mxu0 0.0
    %2665 = vmatpush2.msra.mxu0 0.0
    %2666 = vmatprep.subr.mxu0 0.0
    %2667 = vmatpush2.msra.mxu0 0.0
    %2668 = vmatprep.subr.mxu0 0.0
    %2669 = vmatpush2.msra.mxu0 0.0
    %2670 = vmatprep.subr.mxu0 0.0
    %2671 = vmatpush2.msra.mxu0 0.0
    %2672 = vmatprep.subr.mxu0 0.0
    %2673 = vmatpush2.msra.mxu0 0.0
    %2674 = vmatprep.subr.mxu0 0.0
    %2675 = vmatpush2.msra.mxu0 0.0
    %2676 = vmatprep.subr.mxu0 0.0
    %2677 = vmatpush2.msra.mxu0 0.0
    %2678 = vmatprep.subr.mxu0 0.0
    %2679 = vmatpush2.msra.mxu0 0.0
    %2680 = vmatprep.subr.mxu0 0.0
    %2681 = vmatpush2.msra.mxu0 0.0
    %2682 = vmatprep.subr.mxu0 0.0
    %2683 = vmatpush2.msra.mxu0 0.0
    %2684 = vmatprep.subr.mxu0 0.0
    %2685 = vmatpush2.msra.mxu0 0.0
    %2686 = vmatprep.subr.mxu0 0.0
    %2687 = vmatpush2.msra.mxu0 0.0
    %2688 = vmatprep.subr.mxu0 0.0
    %2689 = vmatpush2.msra.mxu0 0.0
    %2690 = vmatprep.mubr.f32.mxu0 0.0
    %2691 = vmatmul.mubr.f32.gmra.mxu0 %v2621
    %v2692 = vpop.f32.mrf.mxu0
    %v2693 = vadd.f32 0.0, %v2692
    %v2694 = vpop.f32.mrf.mxu0
    %2695 = vmatprep.mubr.f32.mxu0 0.0
    %2696 = vmatmul.mubr.f32.gmra.mxu0 %v2624
    %v2697 = vpop.f32.mrf.mxu0
    %v2698 = vadd.f32 0.0, %v2697
    %v2699 = vpop.f32.mrf.mxu0
    %2700 = vdwg.mxu0
    %2701 = vmatprep.subr.mxu0 0.0
    %2702 = vmatpush1.msra.mxu0 0.0
    %2703 = vmatprep.subr.mxu0 0.0
    %2704 = vmatpush1.msra.mxu0 0.0
    %2705 = vmatprep.subr.mxu0 0.0
    %2706 = vmatpush1.msra.mxu0 0.0
    %2707 = vmatprep.subr.mxu0 0.0
    %2708 = vmatpush1.msra.mxu0 0.0
    %2709 = vmatprep.subr.mxu0 0.0
    %2710 = vmatpush1.msra.mxu0 0.0
    %2711 = vmatprep.subr.mxu0 0.0
    %2712 = vmatpush1.msra.mxu0 0.0
    %2713 = vmatprep.subr.mxu0 0.0
    %2714 = vmatpush1.msra.mxu0 0.0
    %2715 = vmatprep.subr.mxu0 0.0
    %2716 = vmatpush1.msra.mxu0 0.0
    %2717 = vmatprep.subr.mxu0 0.0
    %2718 = vmatpush1.msra.mxu0 0.0
    %2719 = vmatprep.subr.mxu0 0.0
    %2720 = vmatpush1.msra.mxu0 0.0
    %2721 = vmatprep.subr.mxu0 0.0
    %2722 = vmatpush1.msra.mxu0 0.0
    %2723 = vmatprep.subr.mxu0 0.0
    %2724 = vmatpush1.msra.mxu0 0.0
    %2725 = vmatprep.subr.mxu0 0.0
    %2726 = vmatpush1.msra.mxu0 %v2619
    %2727 = vmatprep.subr.mxu0 0.0
    %2728 = vmatpush1.msra.mxu0 %v2618
    %2729 = vmatprep.subr.mxu0 0.0
    %2730 = vmatpush1.msra.mxu0 %v2617
    %2731 = vmatprep.subr.mxu0 0.0
    %2732 = vmatpush1.msra.mxu0 %v2616
    %2733 = vmatprep.subr.mxu0 0.0
    %2734 = vmatpush2.msra.mxu0 0.0
    %2735 = vmatprep.subr.mxu0 0.0
    %2736 = vmatpush2.msra.mxu0 0.0
    %2737 = vmatprep.subr.mxu0 0.0
    %2738 = vmatpush2.msra.mxu0 0.0
    %2739 = vmatprep.subr.mxu0 0.0
    %2740 = vmatpush2.msra.mxu0 0.0
    %2741 = vmatprep.subr.mxu0 0.0
    %2742 = vmatpush2.msra.mxu0 0.0
    %2743 = vmatprep.subr.mxu0 0.0
    %2744 = vmatpush2.msra.mxu0 0.0
    %2745 = vmatprep.subr.mxu0 0.0
    %2746 = vmatpush2.msra.mxu0 0.0
    %2747 = vmatprep.subr.mxu0 0.0
    %2748 = vmatpush2.msra.mxu0 0.0
    %2749 = vmatprep.subr.mxu0 0.0
    %2750 = vmatpush2.msra.mxu0 0.0
    %2751 = vmatprep.subr.mxu0 0.0
    %2752 = vmatpush2.msra.mxu0 0.0
    %2753 = vmatprep.subr.mxu0 0.0
    %2754 = vmatpush2.msra.mxu0 0.0
    %2755 = vmatprep.subr.mxu0 0.0
    %2756 = vmatpush2.msra.mxu0 0.0
    %2757 = vmatprep.subr.mxu0 0.0
    %2758 = vmatpush2.msra.mxu0 0.0
    %2759 = vmatprep.subr.mxu0 0.0
    %2760 = vmatpush2.msra.mxu0 0.0
    %2761 = vmatprep.subr.mxu0 0.0
    %2762 = vmatpush2.msra.mxu0 0.0
    %2763 = vmatprep.subr.mxu0 0.0
    %2764 = vmatpush2.msra.mxu0 0.0
    %2765 = vmatprep.mubr.f32.mxu0 0.0
    %2766 = vmatmul.mubr.f32.gmra.mxu0 %v2621
    %v2767 = vpop.f32.mrf.mxu0
    %v2768 = vadd.f32 0.0, %v2767
    %v2769 = vpop.f32.mrf.mxu0
    %2770 = vmatprep.mubr.f32.mxu0 0.0
    %2771 = vmatmul.mubr.f32.gmra.mxu0 %v2624
    %v2772 = vpop.f32.mrf.mxu0
    %v2773 = vadd.f32 0.0, %v2772
    %v2774 = vpop.f32.mrf.mxu0
    %2775 = vdwg.mxu0
    %2776 = vxpose.xlu0.b32.start [1/16] %v2693, 128
    %2777 = vxpose.xlu0.b32.cont [2/16] 0.0, 128
    %2778 = vxpose.xlu0.b32.cont [3/16] 0.0, 128
    %2779 = vxpose.xlu0.b32.cont [4/16] 0.0, 128
    %2780 = vxpose.xlu0.b32.cont [5/16] 0.0, 128
    %2781 = vxpose.xlu0.b32.cont [6/16] 0.0, 128
    %2782 = vxpose.xlu0.b32.cont [7/16] 0.0, 128
    %2783 = vxpose.xlu0.b32.cont [8/16] 0.0, 128
    %2784 = vxpose.xlu0.b32.cont [9/16] 0.0, 128
    %2785 = vxpose.xlu0.b32.cont [10/16] 0.0, 128
    %2786 = vxpose.xlu0.b32.cont [11/16] 0.0, 128
    %2787 = vxpose.xlu0.b32.cont [12/16] 0.0, 128
    %2788 = vxpose.xlu0.b32.cont [13/16] 0.0, 128
    %2789 = vxpose.xlu0.b32.cont [14/16] 0.0, 128
    %2790 = vxpose.xlu0.b32.cont [15/16] 0.0, 128
    %2791 = vxpose.xlu0.b32.end [16/16] 0.0, 128
    %v2792 = vpop.trf.xlu0
    %v2793 = vpop.trf.xlu0
    %v2794 = vpop.trf.xlu0
    %v2795 = vpop.trf.xlu0
    %v2796 = vpop.trf.xlu0
    %v2797 = vpop.trf.xlu0
    %v2798 = vpop.trf.xlu0
    %v2799 = vpop.trf.xlu0
    %v2800 = vpop.trf.xlu0
    %v2801 = vpop.trf.xlu0
    %v2802 = vpop.trf.xlu0
    %v2803 = vpop.trf.xlu0
    %v2804 = vpop.trf.xlu0
    %v2805 = vpop.trf.xlu0
    %v2806 = vpop.trf.xlu0
    %v2807 = vpop.trf.xlu0
    %2809 = vset.pattern.permute.xlu0 0
    %2810 = vperm.xlu0 %2809, %v2768
    %v2811 = vpop.permute.xlu0 %2810
    %v2813 = vlaneseq
    %v2814 = vshrl.u32 %v2813, 7
    %v2815 = vsub.s32 0, %v2814
    %v2816 = vrot.slane %v2792, %v2815
    %v2817 = vadd.f32 %v2811, %v2816
    %vm2818 = vcmp.gt.f32.partialorder %v2817, 0.0
    %v2819 = vmul.f32 %v2817, 0.2
    %v2820 = vsel %vm2818, %v2817, %v2819
    %v2821 = vadd.f32 %v2820, %v77
    %v2822 = vsel %vm469, %v2821, -inf
    %2823 = vmax.xlane.f32.xlu0 %v2822
    %v2824 = vpop.xlane.xlu0 %2823
    %v2825 = vsub.f32 %v2821, %v2824
    %v2826 = vmul.f32 %v2825, 1.442695
    %v2827 = vpow.pop %v2826
    %v2828 = vsel %vm74, %v2827, 0.0
    %v2829 = vsel %vm469, %v2828, 0.0
    %2830 = vadd.xlane.f32.xlu0 %v2829
    %v2831 = vpop.xlane.xlu0 %2830
    %v2832 = vrcp.pop %v2831
    %v2833 = vmul.f32 %v2828, %v2832
    %v2835 = vsel %vm469, %v2833, 0
    %2837 = vmatprep.subr.mxu0 0.0
    %2838 = vmatpush1.msra.mxu0 0.0
    %2839 = vmatprep.subr.mxu0 0.0
    %2840 = vmatpush1.msra.mxu0 0.0
    %2841 = vmatprep.subr.mxu0 0.0
    %2842 = vmatpush1.msra.mxu0 0.0
    %2843 = vmatprep.subr.mxu0 0.0
    %2844 = vmatpush1.msra.mxu0 0.0
    %2845 = vmatprep.subr.mxu0 0.0
    %2846 = vmatpush1.msra.mxu0 0.0
    %2847 = vmatprep.subr.mxu0 0.0
    %2848 = vmatpush1.msra.mxu0 0.0
    %2849 = vmatprep.subr.mxu0 0.0
    %2850 = vmatpush1.msra.mxu0 0.0
    %2851 = vmatprep.subr.mxu0 0.0
    %2852 = vmatpush1.msra.mxu0 0.0
    %2853 = vmatprep.subr.mxu0 0.0
    %2854 = vmatpush1.msra.mxu0 0.0
    %2855 = vmatprep.subr.mxu0 0.0
    %2856 = vmatpush1.msra.mxu0 0.0
    %2857 = vmatprep.subr.mxu0 0.0
    %2858 = vmatpush1.msra.mxu0 0.0
    %2859 = vmatprep.subr.mxu0 0.0
    %2860 = vmatpush1.msra.mxu0 0.0
    %2861 = vmatprep.subr.mxu0 0.0
    %2862 = vmatpush1.msra.mxu0 0.0
    %2863 = vmatprep.subr.mxu0 0.0
    %2864 = vmatpush1.msra.mxu0 0.0
    %2865 = vmatprep.subr.mxu0 0.0
    %2866 = vmatpush1.msra.mxu0 0.0
    %2867 = vmatprep.subr.mxu0 0.0
    %2868 = vmatpush1.msra.mxu0 %v2604
    %2869 = vmatprep.subr.mxu0 0.0
    %2870 = vmatpush2.msra.mxu0 0.0
    %2871 = vmatprep.subr.mxu0 0.0
    %2872 = vmatpush2.msra.mxu0 0.0
    %2873 = vmatprep.subr.mxu0 0.0
    %2874 = vmatpush2.msra.mxu0 0.0
    %2875 = vmatprep.subr.mxu0 0.0
    %2876 = vmatpush2.msra.mxu0 0.0
    %2877 = vmatprep.subr.mxu0 0.0
    %2878 = vmatpush2.msra.mxu0 0.0
    %2879 = vmatprep.subr.mxu0 0.0
    %2880 = vmatpush2.msra.mxu0 0.0
    %2881 = vmatprep.subr.mxu0 0.0
    %2882 = vmatpush2.msra.mxu0 0.0
    %2883 = vmatprep.subr.mxu0 0.0
    %2884 = vmatpush2.msra.mxu0 0.0
    %2885 = vmatprep.subr.mxu0 0.0
    %2886 = vmatpush2.msra.mxu0 0.0
    %2887 = vmatprep.subr.mxu0 0.0
    %2888 = vmatpush2.msra.mxu0 0.0
    %2889 = vmatprep.subr.mxu0 0.0
    %2890 = vmatpush2.msra.mxu0 0.0
    %2891 = vmatprep.subr.mxu0 0.0
    %2892 = vmatpush2.msra.mxu0 0.0
    %2893 = vmatprep.subr.mxu0 0.0
    %2894 = vmatpush2.msra.mxu0 0.0
    %2895 = vmatprep.subr.mxu0 0.0
    %2896 = vmatpush2.msra.mxu0 0.0
    %2897 = vmatprep.subr.mxu0 0.0
    %2898 = vmatpush2.msra.mxu0 0.0
    %2899 = vmatprep.subr.mxu0 0.0
    %2900 = vmatpush2.msra.mxu0 0.0
    %2901 = vmatprep.mubr.f32.mxu0 0.0
    %2902 = vmatmul.mubr.f32.gmra.mxu0 %v2835
    %v2903 = vpop.f32.mrf.mxu0
    %v2904 = vadd.f32 0.0, %v2903
    %v2905 = vpop.f32.mrf.mxu0
    %2906 = vdwg.mxu0
    %2907 = vxpose.xlu0.b32.start [1/16] %v2698, 128
    %2908 = vxpose.xlu0.b32.cont [2/16] 0.0, 128
    %2909 = vxpose.xlu0.b32.cont [3/16] 0.0, 128
    %2910 = vxpose.xlu0.b32.cont [4/16] 0.0, 128
    %2911 = vxpose.xlu0.b32.cont [5/16] 0.0, 128
    %2912 = vxpose.xlu0.b32.cont [6/16] 0.0, 128
    %2913 = vxpose.xlu0.b32.cont [7/16] 0.0, 128
    %2914 = vxpose.xlu0.b32.cont [8/16] 0.0, 128
    %2915 = vxpose.xlu0.b32.cont [9/16] 0.0, 128
    %2916 = vxpose.xlu0.b32.cont [10/16] 0.0, 128
    %2917 = vxpose.xlu0.b32.cont [11/16] 0.0, 128
    %2918 = vxpose.xlu0.b32.cont [12/16] 0.0, 128
    %2919 = vxpose.xlu0.b32.cont [13/16] 0.0, 128
    %2920 = vxpose.xlu0.b32.cont [14/16] 0.0, 128
    %2921 = vxpose.xlu0.b32.cont [15/16] 0.0, 128
    %2922 = vxpose.xlu0.b32.end [16/16] 0.0, 128
    %v2923 = vpop.trf.xlu0
    %v2924 = vpop.trf.xlu0
    %v2925 = vpop.trf.xlu0
    %v2926 = vpop.trf.xlu0
    %v2927 = vpop.trf.xlu0
    %v2928 = vpop.trf.xlu0
    %v2929 = vpop.trf.xlu0
    %v2930 = vpop.trf.xlu0
    %v2931 = vpop.trf.xlu0
    %v2932 = vpop.trf.xlu0
    %v2933 = vpop.trf.xlu0
    %v2934 = vpop.trf.xlu0
    %v2935 = vpop.trf.xlu0
    %v2936 = vpop.trf.xlu0
    %v2937 = vpop.trf.xlu0
    %v2938 = vpop.trf.xlu0
    %2940 = vset.pattern.permute.xlu0 0
    %2941 = vperm.xlu0 %2940, %v2773
    %v2942 = vpop.permute.xlu0 %2941
    %v2944 = vlaneseq
    %v2945 = vshrl.u32 %v2944, 7
    %v2946 = vsub.s32 0, %v2945
    %v2947 = vrot.slane %v2923, %v2946
    %v2948 = vadd.f32 %v2942, %v2947
    %vm2949 = vcmp.gt.f32.partialorder %v2948, 0.0
    %v2950 = vmul.f32 %v2948, 0.2
    %v2951 = vsel %vm2949, %v2948, %v2950
    %v2952 = vadd.f32 %v2951, %v78
    %v2953 = vsel %vm469, %v2952, -inf
    %2954 = vmax.xlane.f32.xlu0 %v2953
    %v2955 = vpop.xlane.xlu0 %2954
    %v2956 = vsub.f32 %v2952, %v2955
    %v2957 = vmul.f32 %v2956, 1.442695
    %v2958 = vpow.pop %v2957
    %v2959 = vsel %vm76, %v2958, 0.0
    %v2960 = vsel %vm469, %v2959, 0.0
    %2961 = vadd.xlane.f32.xlu0 %v2960
    %v2962 = vpop.xlane.xlu0 %2961
    %v2963 = vrcp.pop %v2962
    %v2964 = vmul.f32 %v2959, %v2963
    %v2966 = vsel %vm469, %v2964, 0
    %2968 = vmatprep.subr.mxu0 0.0
    %2969 = vmatpush1.msra.mxu0 0.0
    %2970 = vmatprep.subr.mxu0 0.0
    %2971 = vmatpush1.msra.mxu0 0.0
    %2972 = vmatprep.subr.mxu0 0.0
    %2973 = vmatpush1.msra.mxu0 0.0
    %2974 = vmatprep.subr.mxu0 0.0
    %2975 = vmatpush1.msra.mxu0 0.0
    %2976 = vmatprep.subr.mxu0 0.0
    %2977 = vmatpush1.msra.mxu0 0.0
    %2978 = vmatprep.subr.mxu0 0.0
    %2979 = vmatpush1.msra.mxu0 0.0
    %2980 = vmatprep.subr.mxu0 0.0
    %2981 = vmatpush1.msra.mxu0 0.0
    %2982 = vmatprep.subr.mxu0 0.0
    %2983 = vmatpush1.msra.mxu0 0.0
    %2984 = vmatprep.subr.mxu0 0.0
    %2985 = vmatpush1.msra.mxu0 0.0
    %2986 = vmatprep.subr.mxu0 0.0
    %2987 = vmatpush1.msra.mxu0 0.0
    %2988 = vmatprep.subr.mxu0 0.0
    %2989 = vmatpush1.msra.mxu0 0.0
    %2990 = vmatprep.subr.mxu0 0.0
    %2991 = vmatpush1.msra.mxu0 0.0
    %2992 = vmatprep.subr.mxu0 0.0
    %2993 = vmatpush1.msra.mxu0 0.0
    %2994 = vmatprep.subr.mxu0 0.0
    %2995 = vmatpush1.msra.mxu0 0.0
    %2996 = vmatprep.subr.mxu0 0.0
    %2997 = vmatpush1.msra.mxu0 0.0
    %2998 = vmatprep.subr.mxu0 0.0
    %2999 = vmatpush1.msra.mxu0 %v2609
    %3000 = vmatprep.subr.mxu0 0.0
    %3001 = vmatpush2.msra.mxu0 0.0
    %3002 = vmatprep.subr.mxu0 0.0
    %3003 = vmatpush2.msra.mxu0 0.0
    %3004 = vmatprep.subr.mxu0 0.0
    %3005 = vmatpush2.msra.mxu0 0.0
    %3006 = vmatprep.subr.mxu0 0.0
    %3007 = vmatpush2.msra.mxu0 0.0
    %3008 = vmatprep.subr.mxu0 0.0
    %3009 = vmatpush2.msra.mxu0 0.0
    %3010 = vmatprep.subr.mxu0 0.0
    %3011 = vmatpush2.msra.mxu0 0.0
    %3012 = vmatprep.subr.mxu0 0.0
    %3013 = vmatpush2.msra.mxu0 0.0
    %3014 = vmatprep.subr.mxu0 0.0
    %3015 = vmatpush2.msra.mxu0 0.0
    %3016 = vmatprep.subr.mxu0 0.0
    %3017 = vmatpush2.msra.mxu0 0.0
    %3018 = vmatprep.subr.mxu0 0.0
    %3019 = vmatpush2.msra.mxu0 0.0
    %3020 = vmatprep.subr.mxu0 0.0
    %3021 = vmatpush2.msra.mxu0 0.0
    %3022 = vmatprep.subr.mxu0 0.0
    %3023 = vmatpush2.msra.mxu0 0.0
    %3024 = vmatprep.subr.mxu0 0.0
    %3025 = vmatpush2.msra.mxu0 0.0
    %3026 = vmatprep.subr.mxu0 0.0
    %3027 = vmatpush2.msra.mxu0 0.0
    %3028 = vmatprep.subr.mxu0 0.0
    %3029 = vmatpush2.msra.mxu0 0.0
    %3030 = vmatprep.subr.mxu0 0.0
    %3031 = vmatpush2.msra.mxu0 0.0
    %3032 = vmatprep.mubr.f32.mxu0 0.0
    %3033 = vmatmul.mubr.f32.gmra.mxu0 %v2966
    %v3034 = vpop.f32.mrf.mxu0
    %v3035 = vadd.f32 0.0, %v3034
    %v3036 = vpop.f32.mrf.mxu0
    %3037 = vdwg.mxu0
    %v3038 = vld [vmem:[%s18] sm:$0x1]
    %v3040 = vlaneseq
    %v3041 = vshrl.u32 %v3040, 7
    %v3042 = vsub.s32 0, %v3041
    %v3043 = vrot.slane %v3038, %v3042
    %v3045 = vadd.f32 %v2904, %v3043
    %v3046 = vadd.f32 %v3035, %v3043
    %v3047 = vsel %vm92, %v3045, 0.0
    %v3048 = vrot.slane %v3047, 4
    %v3049 = vadd.f32 %v3047, %v3048
    %v3050 = vrot.slane %v3049, 2
    %v3051 = vadd.f32 %v3049, %v3050
    %v3052 = vrot.slane %v3051, 1
    %v3053 = vadd.f32 %v3051, %v3052
    %v3054 = vrcp.pop 8.0
    %v3055 = vmul.f32 %v3053, %v3054
    %v3056 = vsel %vm92, %v3046, 0.0
    %v3057 = vrot.slane %v3056, 4
    %v3058 = vadd.f32 %v3056, %v3057
    %v3059 = vrot.slane %v3058, 2
    %v3060 = vadd.f32 %v3058, %v3059
    %v3061 = vrot.slane %v3060, 1
    %v3062 = vadd.f32 %v3060, %v3061
    %v3063 = vmul.f32 %v3062, %v3054
    %v3064 = vsub.f32 %v3055, %v3063
    %v3065 = vand.u32 2147483647, %v3064
    %v3066 = vld [vmem:[%s19] sm:$0xff]
    %v3067 = vld [vmem:[%s19 + $0x8] sm:$0xff]
    %v3068 = vld [vmem:[%s19 + $0x10] sm:$0xff]
    %v3069 = vld [vmem:[%s19 + $0x18] sm:$0xff]
    %v3070 = vld [vmem:[%s20] sm:$0x1]
    %v3072 = vsel %vm92, %v3065, 0
    %3074 = vmatprep.subr.mxu0 0.0
    %3075 = vmatpush1.msra.mxu0 0.0
    %3076 = vmatprep.subr.mxu0 0.0
    %3077 = vmatpush1.msra.mxu0 0.0
    %3078 = vmatprep.subr.mxu0 0.0
    %3079 = vmatpush1.msra.mxu0 0.0
    %3080 = vmatprep.subr.mxu0 0.0
    %3081 = vmatpush1.msra.mxu0 0.0
    %3082 = vmatprep.subr.mxu0 0.0
    %3083 = vmatpush1.msra.mxu0 0.0
    %3084 = vmatprep.subr.mxu0 0.0
    %3085 = vmatpush1.msra.mxu0 0.0
    %3086 = vmatprep.subr.mxu0 0.0
    %3087 = vmatpush1.msra.mxu0 0.0
    %3088 = vmatprep.subr.mxu0 0.0
    %3089 = vmatpush1.msra.mxu0 0.0
    %3090 = vmatprep.subr.mxu0 0.0
    %3091 = vmatpush1.msra.mxu0 0.0
    %3092 = vmatprep.subr.mxu0 0.0
    %3093 = vmatpush1.msra.mxu0 0.0
    %3094 = vmatprep.subr.mxu0 0.0
    %3095 = vmatpush1.msra.mxu0 0.0
    %3096 = vmatprep.subr.mxu0 0.0
    %3097 = vmatpush1.msra.mxu0 0.0
    %3098 = vmatprep.subr.mxu0 0.0
    %3099 = vmatpush1.msra.mxu0 %v3069
    %3100 = vmatprep.subr.mxu0 0.0
    %3101 = vmatpush1.msra.mxu0 %v3068
    %3102 = vmatprep.subr.mxu0 0.0
    %3103 = vmatpush1.msra.mxu0 %v3067
    %3104 = vmatprep.subr.mxu0 0.0
    %3105 = vmatpush1.msra.mxu0 %v3066
    %3106 = vmatprep.subr.mxu0 0.0
    %3107 = vmatpush2.msra.mxu0 0.0
    %3108 = vmatprep.subr.mxu0 0.0
    %3109 = vmatpush2.msra.mxu0 0.0
    %3110 = vmatprep.subr.mxu0 0.0
    %3111 = vmatpush2.msra.mxu0 0.0
    %3112 = vmatprep.subr.mxu0 0.0
    %3113 = vmatpush2.msra.mxu0 0.0
    %3114 = vmatprep.subr.mxu0 0.0
    %3115 = vmatpush2.msra.mxu0 0.0
    %3116 = vmatprep.subr.mxu0 0.0
    %3117 = vmatpush2.msra.mxu0 0.0
    %3118 = vmatprep.subr.mxu0 0.0
    %3119 = vmatpush2.msra.mxu0 0.0
    %3120 = vmatprep.subr.mxu0 0.0
    %3121 = vmatpush2.msra.mxu0 0.0
    %3122 = vmatprep.subr.mxu0 0.0
    %3123 = vmatpush2.msra.mxu0 0.0
    %3124 = vmatprep.subr.mxu0 0.0
    %3125 = vmatpush2.msra.mxu0 0.0
    %3126 = vmatprep.subr.mxu0 0.0
    %3127 = vmatpush2.msra.mxu0 0.0
    %3128 = vmatprep.subr.mxu0 0.0
    %3129 = vmatpush2.msra.mxu0 0.0
    %3130 = vmatprep.subr.mxu0 0.0
    %3131 = vmatpush2.msra.mxu0 0.0
    %3132 = vmatprep.subr.mxu0 0.0
    %3133 = vmatpush2.msra.mxu0 0.0
    %3134 = vmatprep.subr.mxu0 0.0
    %3135 = vmatpush2.msra.mxu0 0.0
    %3136 = vmatprep.subr.mxu0 0.0
    %3137 = vmatpush2.msra.mxu0 0.0
    %3138 = vmatprep.mubr.f32.mxu0 0.0
    %3139 = vmatmul.mubr.f32.gmra.mxu0 %v3072
    %v3140 = vpop.f32.mrf.mxu0
    %v3141 = vadd.f32 %v3070, %v3140
    %v3142 = vpop.f32.mrf.mxu0
    %3143 = vdwg.mxu0
    %vm3144 = vcmask 8192
    %v3145 = vsel %vm3144, %v3141, -inf
    %3146 = vmax.xlane.f32.xlu0 %v3145
    %v3147 = vpop.xlane.xlu0 %3146
    %v3148 = vsub.f32 %v3141, %v3147
    %v3149 = vmul.f32 %v3148, 1.442695
    %v3150 = vpow.pop %v3149
    %v3151 = vsel %vm3144, %v3150, 0.0
    %3152 = vadd.xlane.f32.xlu0 %v3151
    %v3153 = vpop.xlane.xlu0 %3152
    %v3154 = vrcp.pop %v3153
    %v3155 = vmul.f32 %v3150, %v3154
    %3156 = vst.msk [vmem:[#allocation3] sm:$0x1] %vm3144, %v3155
    %v3157 = vsel %vm3144, %v3155, -inf
    %3158 = vmax.xlane.f32.xlu0 %v3157
    %v3159 = vpop.xlane.xlu0 %3158
    %v3160 = vsub.f32 %v3155, %v3159
    %v3161 = vmul.f32 %v3160, 1.442695
    %v3162 = vpow.pop %v3161
    %v3163 = vsel %vm3144, %v3162, 0.0
    %3164 = vadd.xlane.f32.xlu0 %v3163
    %v3165 = vpop.xlane.xlu0 %3164
    %v3166 = vlog2.pop %v3165
    %v3167 = vmul.f32 %v3166, 0.6931472
    %v3168 = vsub.f32 %v3160, %v3167
    %v3169 = vlaneseq
    %v3170 = vand.u32 %v3169, 127
    %s3171 = sld [smem:[#allocation2]]
    %v3172 = vstv %s3171
    %vm3173 = vcmp.eq.s32.totalorder %v3170, %v3172
    %v3174 = vsel %vm3173, %v3168, 0.0
    %v3175 = vsel %vm3144, %v3174, 0.0
    %3176 = vadd.xlane.f32.xlu0 %v3175
    %v3177 = vpop.xlane.xlu0 %3176
    %v3178 = vsub.f32 0.0, %v3177
    %vm3179 = vcmask 0
    %3180 = vst.msk [vmem:[#allocation5] sm:$0x1] %vm3179, %v3178
    // Predicated region
    $region86: #{forward.1} parent=1 // pred_check
      _
    $region87: #{forward.1} parent=1 // pred_check_branch
      %3182 = sbr.rel (0) target = $region89
    $region88: #{forward.1} parent=1 // pred_region
      %s3184 = ssub.s32 16, 16
      %3185 = vsyncadd [#allocation4], %s3184
      %s3187 = sshll.u32 [#allocation3], 4
      %s3188 = int_to_ptr.vmem [resolvable:$true] %s3187
      %3190 = dma.vmem_to_hbm [thread:$0]  %s3188, 16, %s21, [#allocation4]
    $region89: #{forward.1} parent=1 // pred_fallthru
      _
    // Predicated region
    $region90: #{forward.1} parent=1 // pred_check
      _
    $region91: #{forward.1} parent=1 // pred_check_branch
      %3192 = sbr.rel (0) target = $region93
    $region92: #{forward.1} parent=1 // pred_region
      %s3194 = ssub.s32 16, 16
      %3195 = vsyncadd [#allocation6], %s3194
      %s3197 = sshll.u32 [#allocation5], 4
      %s3198 = int_to_ptr.vmem [resolvable:$true] %s3197
      %3200 = dma.vmem_to_hbm [thread:$0]  %s3198, 16, %s22, [#allocation6]
    $region93: #{forward.1} parent=1 // pred_fallthru
      _
    // Predicated region
    $region94: #{forward.1} parent=1 // pred_check
      _
    $region95: #{forward.1} parent=1 // pred_check_branch
      %3202 = sbr.rel (0) target = $region97
    $region96: #{forward.1} parent=1 // pred_region
      %3203 = dma.done [#allocation4], 16
    $region97: #{forward.1} parent=1 // pred_fallthru
      _
    // Predicated region
    $region98: #{forward.1} parent=1 // pred_check
      _
    $region99: #{forward.1} parent=1 // pred_check_branch
      %3205 = sbr.rel (0) target = $region101
    $region100: #{forward.1} parent=1 // pred_region
      %3206 = dma.done [#allocation6], 16
    $region101: #{forward.1} parent=1 // pred_fallthru
      _
    %3207 = vsyncpa [#allocation4], 1
    %3208 = vsyncpa [#allocation6], 1

</llo_original>
